<compile_context>
chip_gen: v7x
topology: tpu7x:2x2x1
jax: 0.10.0
libtpu: 0.0.40
codegen_flags: <defaults>
</compile_context>

<pallas_src>
import functools

import jax
import jax.numpy as jnp
from jax.experimental import pallas as pl
from jax.experimental.pallas import tpu as pltpu

_HALO = 3      # 7x7 depthwise conv -> 3 rows/cols of zero padding per side
_PADL = 8      # W-axis padding inside the scratch (8 => sublane-aligned stores)


def gsau_kernel(x_ref, mask_ref, lnw_ref, lnb_ref, w1a_ref, b1a_ref,
                w1g_ref, b1g_ref, wdw_ref, bdw_ref, w2_ref, b2_ref, scale_ref,
                o_ref, apad_ref, *, c_true, tile_rows):
    t = pl.program_id(1)
    n_t = pl.num_programs(1)

    xh = x_ref[0]                              # (TH + 6, W, Cp) f32, row halo included
    thp, W, Cp = xh.shape
    TH = tile_rows

    # ---- LayerNorm over the true channel axis (channels_first in torch) ------
    inv_c = 1.0 / c_true
    u = jnp.sum(xh, axis=-1, keepdims=True) * inv_c
    d = xh - u
    var = jnp.sum(d * d * mask_ref[0], axis=-1, keepdims=True) * inv_c
    xn = d * jax.lax.rsqrt(var + 1e-6)
    xn = xn * lnw_ref[0] + lnb_ref[0]          # padded channels -> exactly 0
    xnb = xn.astype(jnp.bfloat16)

    # ---- Conv1 (1x1, C -> 2C) as two bf16 MXU matmuls with f32 accumulation --
    # 'a' (the depthwise-conv input) is also needed on the halo rows; 'g' is not.
    a = (jnp.dot(xnb.reshape(thp * W, Cp), w1a_ref[...],
                 preferred_element_type=jnp.float32)
         + b1a_ref[0]).reshape(thp, W, Cp)
    g = (jnp.dot(xnb[_HALO:_HALO + TH].reshape(TH * W, Cp), w1g_ref[...],
                 preferred_element_type=jnp.float32)
         + b1g_ref[0]).reshape(TH, W, Cp)

    # ---- stage 'a' into the zero-padded scratch (W halo lives in the scratch) -
    apad_ref[:, :_PADL, :] = jnp.zeros((thp, _PADL, Cp), jnp.float32)
    apad_ref[:, _PADL + W:, :] = jnp.zeros((thp, _PADL, Cp), jnp.float32)
    apad_ref[:, _PADL:_PADL + W, :] = a

    # Halo rows outside the image must be zero (conv zero-padding acts on 'a').
    @pl.when(t == 0)
    def _():
        apad_ref[:_HALO, _PADL:_PADL + W, :] = jnp.zeros((_HALO, W, Cp), jnp.float32)

    @pl.when(t == n_t - 1)
    def _():
        apad_ref[thp - _HALO:, _PADL:_PADL + W, :] = (
            jnp.zeros((_HALO, W, Cp), jnp.float32))

    # ---- DWConv1: 7x7 depthwise. 7 sublane (W-axis) shifted reads; the 7 row
    # (H-axis) taps per shift are outer-dim slices. Independent partial sums. ---
    wdw = wdw_ref[...]                         # (49, Cp) = (dy*7 + dx, channel)
    partials = []
    for dx in range(7):
        base = _PADL - _HALO + dx
        col = apad_ref[:, base:base + W, :]    # (TH + 6, W, Cp)
        p = col[0:TH] * wdw[dx]
        for dy in range(1, 7):
            p = p + col[dy:dy + TH] * wdw[dy * 7 + dx]
        partials.append(p)
    dw = (((partials[0] + partials[1]) + (partials[2] + partials[3]))
          + ((partials[4] + partials[5]) + (partials[6] + bdw_ref[0])))

    # ---- gate, Conv2 (1x1), scale + residual ---------------------------------
    gx = (g * dw).astype(jnp.bfloat16).reshape(TH * W, Cp)
    z = (jnp.dot(gx, w2_ref[...], preferred_element_type=jnp.float32)
         + b2_ref[0]).reshape(TH, W, Cp)
    o_ref[0] = z * scale_ref[0] + xh[_HALO:_HALO + TH]


def _round_up(n, m):
    return ((n + m - 1) // m) * m


def _pick_tile_rows(H, W, Cp, budget_bytes=28 << 20, live_mult=14):
    """Largest row tile (divisor of H) whose live working set fits the budget."""
    bytes_per_row = 4 * W * Cp
    max_rows = budget_bytes // (live_mult * bytes_per_row) - 2 * _HALO
    divs = [d for d in range(1, H + 1) if H % d == 0]
    fitting = [d for d in divs if _HALO <= d <= max_rows]
    if fitting:
        return max(fitting)
    return min([d for d in divs if d >= _HALO], default=H)


def _pad_vec(v, cp):
    v = jnp.asarray(v, jnp.float32).reshape(1, -1)
    return jnp.pad(v, ((0, 0), (0, cp - v.shape[1])))


def _pad_mat(m, cp):
    ci, co = m.shape
    return jnp.pad(jnp.asarray(m, jnp.float32), ((0, cp - ci), (0, cp - co)))


def gsau_forward(x_nchw, params, tile_rows=None):
    """x_nchw: (B, C, H, W) float32. Returns (B, C, H, W). Matches GSAU.forward."""
    lnw, lnb, w1, b1, wdw, bdw, w2, b2, scale = params
    B, C, H, W = x_nchw.shape
    Cp = _round_up(C, 128)                         # lane-dense channel axis

    TH = _pick_tile_rows(H, W, Cp) if tile_rows is None else tile_rows
    if H % TH != 0 or TH < _HALO:
        raise ValueError(f"tile_rows={TH} must divide H={H} and be >= {_HALO}")
    n_t = H // TH
    thp = TH + 2 * _HALO

    # NCHW -> NHWC and channel zero-padding.
    # TODO(synk): in a full model keep activations NHWC end-to-end so these
    # boundary transposes (full HBM round trips) disappear.
    x = jnp.transpose(x_nchw, (0, 2, 3, 1))
    if Cp != C:
        x = jnp.pad(x, ((0, 0), (0, 0), (0, 0), (0, Cp - C)))

    # Overlapping row windows with a 3-row halo (zero at the image border).
    x_halo = jnp.pad(x, ((0, 0), (_HALO, _HALO), (0, 0), (0, 0)))
    x_tiles = jnp.stack([x_halo[:, i * TH:i * TH + thp] for i in range(n_t)], axis=1)
    x_tiles = x_tiles.reshape(B * n_t, thp, W, Cp)

    # Parameter packing: channel axis -> lanes, zero-padded to Cp; 1x1-conv
    # weights pre-cast to bf16 (f32 accumulation happens on the MXU).
    w1 = jnp.asarray(w1, jnp.float32)
    b1 = jnp.asarray(b1, jnp.float32).reshape(-1)
    w1a = _pad_mat(w1[:, :C], Cp).astype(jnp.bfloat16)
    w1g = _pad_mat(w1[:, C:], Cp).astype(jnp.bfloat16)
    b1a, b1g = _pad_vec(b1[:C], Cp), _pad_vec(b1[C:], Cp)
    wdw_p = jnp.pad(jnp.asarray(wdw, jnp.float32).reshape(49, C),
                    ((0, 0), (0, Cp - C)))
    w2_p = _pad_mat(w2, Cp).astype(jnp.bfloat16)
    lnw_p, lnb_p = _pad_vec(lnw, Cp), _pad_vec(lnb, Cp)
    bdw_p, b2_p, scale_p = _pad_vec(bdw, Cp), _pad_vec(b2, Cp), _pad_vec(scale, Cp)
    mask = _pad_vec(jnp.ones((C,), jnp.float32), Cp)

    kernel = functools.partial(gsau_kernel, c_true=C, tile_rows=TH)
    const = lambda b, t: (0, 0)

    out = pl.pallas_call(
        kernel,
        out_shape=jax.ShapeDtypeStruct((B, H, W, Cp), jnp.float32),
        grid=(B, n_t),
        in_specs=[
            pl.BlockSpec((1, thp, W, Cp), lambda b, t: (b * n_t + t, 0, 0, 0)),  # x stripe
            pl.BlockSpec((1, Cp), const),            # channel validity mask
            pl.BlockSpec((1, Cp), const),            # LayerNorm weight
            pl.BlockSpec((1, Cp), const),            # LayerNorm bias
            pl.BlockSpec((Cp, Cp), const),           # Conv1 weight, 'a' half (bf16)
            pl.BlockSpec((1, Cp), const),            # Conv1 bias,   'a' half
            pl.BlockSpec((Cp, Cp), const),           # Conv1 weight, 'g' half (bf16)
            pl.BlockSpec((1, Cp), const),            # Conv1 bias,   'g' half
            pl.BlockSpec((49, Cp), const),           # DWConv1 7x7 weight
            pl.BlockSpec((1, Cp), const),            # DWConv1 bias
            pl.BlockSpec((Cp, Cp), const),           # Conv2 weight (bf16)
            pl.BlockSpec((1, Cp), const),            # Conv2 bias
            pl.BlockSpec((1, Cp), const),            # scale
        ],
        out_specs=pl.BlockSpec((1, TH, W, Cp), lambda b, t: (b, t, 0, 0)),
        scratch_shapes=[pltpu.VMEM((thp, W + 2 * _PADL, Cp), jnp.float32)],
        compiler_params=pltpu.CompilerParams(
            dimension_semantics=("parallel", "parallel"),
            vmem_limit_bytes=48 * 1024 * 1024),
    )(x_tiles, mask, lnw_p, lnb_p, w1a, b1a, w1g, b1g,
      wdw_p, bdw_p, w2_p, b2_p, scale_p)

    out = out[..., :C]
    return jnp.transpose(out, (0, 3, 1, 2))          # -> NCHW


def gsau_reference(x, params):
    """Pure-JAX f32 reference matching the PyTorch forward (NCHW)."""
    lnw, lnb, w1, b1, wdw, bdw, w2, b2, scale = params
    C = x.shape[1]
    u = x.mean(1, keepdims=True)
    s = ((x - u) ** 2).mean(1, keepdims=True)
    xn = (x - u) / jnp.sqrt(s + 1e-6)
    xn = lnw.reshape(1, C, 1, 1) * xn + lnb.reshape(1, C, 1, 1)

    y = jnp.einsum('bchw,co->bohw', xn, w1) + b1.reshape(1, 2 * C, 1, 1)
    a, g = y[:, :C], y[:, C:]

    dw_k = wdw.reshape(7, 7, 1, C)                   # HWIO, depthwise
    dw = jax.lax.conv_general_dilated(
        a, dw_k, window_strides=(1, 1), padding='SAME',
        dimension_numbers=('NCHW', 'HWIO', 'NCHW'),
        feature_group_count=C) + bdw.reshape(1, C, 1, 1)

    gx = g * dw
    z = jnp.einsum('bchw,co->bohw', gx, w2) + b2.reshape(1, C, 1, 1)
    return z * scale.reshape(1, C, 1, 1) + x


def make_params(key, n_feats):
    """Deterministic synthetic parameters (shapes follow GSAU.__init__)."""
    C = n_feats
    ks = jax.random.split(key, 8)
    std = 0.1
    lnw = jnp.ones((C,), jnp.float32)                                  # LayerNorm weight
    lnb = jnp.zeros((C,), jnp.float32)                                 # LayerNorm bias
    w1 = std * jax.random.normal(ks[0], (C, 2 * C), jnp.float32)       # Conv1 1x1: C -> 2C
    b1 = std * jax.random.normal(ks[1], (2 * C,), jnp.float32)
    wdw = std * jax.random.normal(ks[2], (7, 7, C), jnp.float32)       # DWConv1 7x7 depthwise
    bdw = std * jax.random.normal(ks[3], (C,), jnp.float32)
    w2 = std * jax.random.normal(ks[4], (C, C), jnp.float32)           # Conv2 1x1: C -> C
    b2 = std * jax.random.normal(ks[5], (C,), jnp.float32)
    # nn.Parameter(torch.zeros((1, C, 1, 1))) inits to zero; use nonzero values
    # here so the full compute path is actually exercised / verified.
    scale = std * jax.random.normal(ks[6], (C,), jnp.float32)
    return (lnw, lnb, w1, b1, wdw, bdw, w2, b2, scale)


if __name__ == "__main__":
    key = jax.random.PRNGKey(0)
    k_x, k_p = jax.random.split(key)

    B, C, H, W = 2, 4, 16, 16
    x = jax.random.normal(k_x, (B, C, H, W), jnp.float32)
    params = make_params(k_p, C)

    ref = gsau_reference(x, params)

    # Multi-stripe path: two 8-row tiles with a 3-row halo (exercises halo logic).
    fwd_tiled = jax.jit(functools.partial(gsau_forward, tile_rows=8))
    out = jax.block_until_ready(fwd_tiled(x, params))
    assert out.shape == ref.shape == (B, C, H, W)
    err = float(jnp.max(jnp.abs(out - ref)))
    assert jnp.allclose(out, ref, atol=1e-2, rtol=1e-2), f"max abs err = {err}"

    # Auto-selected tile size (single stripe at this small shape).
    out2 = jax.block_until_ready(jax.jit(gsau_forward)(x, params))
    assert jnp.allclose(out2, ref, atol=1e-2, rtol=1e-2)

    print("KERNEL_OK")
</pallas_src>

<mosaic_0001>
module attributes {stable_mosaic.version = 11 : i64} {
  func.func @gsau_kernel(%arg0: i32, %arg1: i32, %arg2: memref<1x14x16x128xf32, #tpu.memory_space<vmem>>, %arg3: memref<1x128xf32, #tpu.memory_space<vmem>>, %arg4: memref<1x128xf32, #tpu.memory_space<vmem>>, %arg5: memref<1x128xf32, #tpu.memory_space<vmem>>, %arg6: memref<128x128xbf16, #tpu.memory_space<vmem>>, %arg7: memref<1x128xf32, #tpu.memory_space<vmem>>, %arg8: memref<128x128xbf16, #tpu.memory_space<vmem>>, %arg9: memref<1x128xf32, #tpu.memory_space<vmem>>, %arg10: memref<49x128xf32, #tpu.memory_space<vmem>>, %arg11: memref<1x128xf32, #tpu.memory_space<vmem>>, %arg12: memref<128x128xbf16, #tpu.memory_space<vmem>>, %arg13: memref<1x128xf32, #tpu.memory_space<vmem>>, %arg14: memref<1x128xf32, #tpu.memory_space<vmem>>, %arg15: memref<1x8x16x128xf32, #tpu.memory_space<vmem>>, %arg16: memref<14x32x128xf32, #tpu.memory_space<vmem>>) attributes {dimension_semantics = [#tpu.dimension_semantics<parallel>, #tpu.dimension_semantics<parallel>], iteration_bounds = array<i64: 2, 2>, scalar_prefetch = 0 : i64, scratch_operands = 1 : i64, tpu.core_type = #tpu.core_type<tc>, window_params = [{transform_indices = @transform_0, window_bounds = array<i64: 1, 14, 16, 128>}, {pipeline_mode = #tpu.pipeline_mode<synchronous>, transform_indices = @transform_1, window_bounds = array<i64: 1, 128>}, {pipeline_mode = #tpu.pipeline_mode<synchronous>, transform_indices = @transform_2, window_bounds = array<i64: 1, 128>}, {pipeline_mode = #tpu.pipeline_mode<synchronous>, transform_indices = @transform_3, window_bounds = array<i64: 1, 128>}, {pipeline_mode = #tpu.pipeline_mode<synchronous>, transform_indices = @transform_4, window_bounds = array<i64: 128, 128>}, {pipeline_mode = #tpu.pipeline_mode<synchronous>, transform_indices = @transform_5, window_bounds = array<i64: 1, 128>}, {pipeline_mode = #tpu.pipeline_mode<synchronous>, transform_indices = @transform_6, window_bounds = array<i64: 128, 128>}, {pipeline_mode = #tpu.pipeline_mode<synchronous>, transform_indices = @transform_7, window_bounds = array<i64: 1, 128>}, {pipeline_mode = #tpu.pipeline_mode<synchronous>, transform_indices = @transform_8, window_bounds = array<i64: 49, 128>}, {pipeline_mode = #tpu.pipeline_mode<synchronous>, transform_indices = @transform_9, window_bounds = array<i64: 1, 128>}, {pipeline_mode = #tpu.pipeline_mode<synchronous>, transform_indices = @transform_10, window_bounds = array<i64: 128, 128>}, {pipeline_mode = #tpu.pipeline_mode<synchronous>, transform_indices = @transform_11, window_bounds = array<i64: 1, 128>}, {pipeline_mode = #tpu.pipeline_mode<synchronous>, transform_indices = @transform_12, window_bounds = array<i64: 1, 128>}, {transform_indices = @transform_13, window_bounds = array<i64: 1, 8, 16, 128>}]} {
    %c0 = arith.constant 0 : index
    %c0_0 = arith.constant 0 : index
    %c0_1 = arith.constant 0 : index
    %c0_2 = arith.constant 0 : index
    %0 = vector.load %arg2[%c0, %c0_0, %c0_1, %c0_2] : memref<1x14x16x128xf32, #tpu.memory_space<vmem>>, vector<1x14x16x128xf32>
    %1 = vector.shape_cast %0 : vector<1x14x16x128xf32> to vector<14x16x128xf32>
    %cst = arith.constant dense<0.000000e+00> : vector<14x16xf32>
    %2 = vector.multi_reduction <add>, %1, %cst [2] : vector<14x16x128xf32> to vector<14x16xf32>
    %3 = vector.shape_cast %2 : vector<14x16xf32> to vector<14x16x1xf32>
    %cst_3 = arith.constant 2.500000e-01 : f32
    %4 = vector.broadcast %cst_3 : f32 to vector<14x16x1xf32>
    %5 = arith.mulf %3, %4 : vector<14x16x1xf32>
    %6 = vector.broadcast %5 : vector<14x16x1xf32> to vector<14x16x128xf32>
    %7 = arith.subf %1, %6 : vector<14x16x128xf32>
    %8 = arith.mulf %7, %7 : vector<14x16x128xf32>
    %c0_4 = arith.constant 0 : index
    %c0_5 = arith.constant 0 : index
    %9 = vector.load %arg3[%c0_4, %c0_5] : memref<1x128xf32, #tpu.memory_space<vmem>>, vector<1x128xf32>
    %10 = vector.shape_cast %9 : vector<1x128xf32> to vector<128xf32>
    %11 = vector.shape_cast %10 : vector<128xf32> to vector<1x1x128xf32>
    %12 = vector.broadcast %11 : vector<1x1x128xf32> to vector<14x16x128xf32>
    %13 = arith.mulf %8, %12 : vector<14x16x128xf32>
    %cst_6 = arith.constant dense<0.000000e+00> : vector<14x16xf32>
    %14 = vector.multi_reduction <add>, %13, %cst_6 [2] : vector<14x16x128xf32> to vector<14x16xf32>
    %15 = vector.shape_cast %14 : vector<14x16xf32> to vector<14x16x1xf32>
    %cst_7 = arith.constant 2.500000e-01 : f32
    %16 = vector.broadcast %cst_7 : f32 to vector<14x16x1xf32>
    %17 = arith.mulf %15, %16 : vector<14x16x1xf32>
    %cst_8 = arith.constant 9.99999997E-7 : f32
    %18 = vector.broadcast %cst_8 : f32 to vector<14x16x1xf32>
    %19 = arith.addf %17, %18 : vector<14x16x1xf32>
    %20 = math.rsqrt %19 : vector<14x16x1xf32>
    %21 = vector.broadcast %20 : vector<14x16x1xf32> to vector<14x16x128xf32>
    %22 = arith.mulf %7, %21 : vector<14x16x128xf32>
    %c0_9 = arith.constant 0 : index
    %c0_10 = arith.constant 0 : index
    %23 = vector.load %arg4[%c0_9, %c0_10] : memref<1x128xf32, #tpu.memory_space<vmem>>, vector<1x128xf32>
    %24 = vector.shape_cast %23 : vector<1x128xf32> to vector<128xf32>
    %25 = vector.shape_cast %24 : vector<128xf32> to vector<1x1x128xf32>
    %26 = vector.broadcast %25 : vector<1x1x128xf32> to vector<14x16x128xf32>
    %27 = arith.mulf %22, %26 : vector<14x16x128xf32>
    %c0_11 = arith.constant 0 : index
    %c0_12 = arith.constant 0 : index
    %28 = vector.load %arg5[%c0_11, %c0_12] : memref<1x128xf32, #tpu.memory_space<vmem>>, vector<1x128xf32>
    %29 = vector.shape_cast %28 : vector<1x128xf32> to vector<128xf32>
    %30 = vector.shape_cast %29 : vector<128xf32> to vector<1x1x128xf32>
    %31 = vector.broadcast %30 : vector<1x1x128xf32> to vector<14x16x128xf32>
    %32 = arith.addf %27, %31 : vector<14x16x128xf32>
    %33 = arith.truncf %32 : vector<14x16x128xf32> to vector<14x16x128xbf16>
    %34 = vector.shape_cast %33 : vector<14x16x128xbf16> to vector<224x128xbf16>
    %c0_13 = arith.constant 0 : index
    %c0_14 = arith.constant 0 : index
    %35 = vector.load %arg6[%c0_13, %c0_14] : memref<128x128xbf16, #tpu.memory_space<vmem>>, vector<128x128xbf16>
    %cst_15 = arith.constant dense<0.000000e+00> : vector<224x128xf32>
    %36 = tpu.matmul %34, %35, %cst_15 {dimension_numbers = #tpu.dot_dimension_numbers<[1], [0], [0], [1], [0, 0, 1, 1], [], []>} : vector<224x128xbf16>, vector<128x128xbf16>, vector<224x128xf32> -> vector<224x128xf32>
    %c0_16 = arith.constant 0 : index
    %c0_17 = arith.constant 0 : index
    %37 = vector.load %arg7[%c0_16, %c0_17] : memref<1x128xf32, #tpu.memory_space<vmem>>, vector<1x128xf32>
    %38 = vector.shape_cast %37 : vector<1x128xf32> to vector<128xf32>
    %39 = vector.shape_cast %38 : vector<128xf32> to vector<1x128xf32>
    %40 = vector.broadcast %39 : vector<1x128xf32> to vector<224x128xf32>
    %41 = arith.addf %36, %40 : vector<224x128xf32>
    %42 = vector.shape_cast %41 : vector<224x128xf32> to vector<14x16x128xf32>
    %43 = vector.extract_strided_slice %33 {offsets = [3, 0, 0], sizes = [8, 16, 128], strides = [1, 1, 1]} : vector<14x16x128xbf16> to vector<8x16x128xbf16>
    %44 = vector.shape_cast %43 : vector<8x16x128xbf16> to vector<128x128xbf16>
    %c0_18 = arith.constant 0 : index
    %c0_19 = arith.constant 0 : index
    %45 = vector.load %arg8[%c0_18, %c0_19] : memref<128x128xbf16, #tpu.memory_space<vmem>>, vector<128x128xbf16>
    %cst_20 = arith.constant dense<0.000000e+00> : vector<128x128xf32>
    %46 = tpu.matmul %44, %45, %cst_20 {dimension_numbers = #tpu.dot_dimension_numbers<[1], [0], [0], [1], [0, 0, 1, 1], [], []>} : vector<128x128xbf16>, vector<128x128xbf16>, vector<128x128xf32> -> vector<128x128xf32>
    %c0_21 = arith.constant 0 : index
    %c0_22 = arith.constant 0 : index
    %47 = vector.load %arg9[%c0_21, %c0_22] : memref<1x128xf32, #tpu.memory_space<vmem>>, vector<1x128xf32>
    %48 = vector.shape_cast %47 : vector<1x128xf32> to vector<128xf32>
    %49 = vector.shape_cast %48 : vector<128xf32> to vector<1x128xf32>
    %50 = vector.broadcast %49 : vector<1x128xf32> to vector<128x128xf32>
    %51 = arith.addf %46, %50 : vector<128x128xf32>
    %52 = vector.shape_cast %51 : vector<128x128xf32> to vector<8x16x128xf32>
    %cst_23 = arith.constant 0.000000e+00 : f32
    %53 = vector.broadcast %cst_23 : f32 to vector<14x8x128xf32>
    %c0_24 = arith.constant 0 : index
    %c0_25 = arith.constant 0 : index
    %c0_26 = arith.constant 0 : index
    %54 = vector.load %arg16[%c0_24, %c0_25, %c0_26] : memref<14x32x128xf32, #tpu.memory_space<vmem>>, vector<14x8x128xf32>
    tpu.vector_store %arg16[%c0_24, %c0_25, %c0_26], %53 {strides = array<i32>} : memref<14x32x128xf32, #tpu.memory_space<vmem>>, vector<14x8x128xf32>,
    %cst_27 = arith.constant 0.000000e+00 : f32
    %55 = vector.broadcast %cst_27 : f32 to vector<14x8x128xf32>
    %c0_28 = arith.constant 0 : index
    %c24 = arith.constant 24 : index
    %c0_29 = arith.constant 0 : index
    %56 = vector.load %arg16[%c0_28, %c24, %c0_29] : memref<14x32x128xf32, #tpu.memory_space<vmem>>, vector<14x8x128xf32>
    tpu.vector_store %arg16[%c0_28, %c24, %c0_29], %55 {strides = array<i32>} : memref<14x32x128xf32, #tpu.memory_space<vmem>>, vector<14x8x128xf32>,
    %c0_30 = arith.constant 0 : index
    %c8 = arith.constant 8 : index
    %c0_31 = arith.constant 0 : index
    %57 = vector.load %arg16[%c0_30, %c8, %c0_31] : memref<14x32x128xf32, #tpu.memory_space<vmem>>, vector<14x16x128xf32>
    tpu.vector_store %arg16[%c0_30, %c8, %c0_31], %42 {strides = array<i32>} : memref<14x32x128xf32, #tpu.memory_space<vmem>>, vector<14x16x128xf32>,
    %c0_i32 = arith.constant 0 : i32
    %58 = arith.cmpi eq, %arg1, %c0_i32 : i32
    %59 = arith.extui %58 : i1 to i32
    %c0_i32_32 = arith.constant 0 : i32
    %60 = arith.cmpi ne, %59, %c0_i32_32 : i32
    scf.if %60 {
      %cst_64 = arith.constant 0.000000e+00 : f32
      %440 = vector.broadcast %cst_64 : f32 to vector<3x16x128xf32>
      %c0_65 = arith.constant 0 : index
      %c8_66 = arith.constant 8 : index
      %c0_67 = arith.constant 0 : index
      %441 = vector.load %arg16[%c0_65, %c8_66, %c0_67] : memref<14x32x128xf32, #tpu.memory_space<vmem>>, vector<3x16x128xf32>
      tpu.vector_store %arg16[%c0_65, %c8_66, %c0_67], %440 {strides = array<i32>} : memref<14x32x128xf32, #tpu.memory_space<vmem>>, vector<3x16x128xf32>,
    } else {
    }
    %c1_i32 = arith.constant 1 : i32
    %61 = arith.cmpi eq, %arg1, %c1_i32 : i32
    %62 = arith.extui %61 : i1 to i32
    %c0_i32_33 = arith.constant 0 : i32
    %63 = arith.cmpi ne, %62, %c0_i32_33 : i32
    scf.if %63 {
      %cst_64 = arith.constant 0.000000e+00 : f32
      %440 = vector.broadcast %cst_64 : f32 to vector<3x16x128xf32>
      %c11_65 = arith.constant 11 : index
      %c8_66 = arith.constant 8 : index
      %c0_67 = arith.constant 0 : index
      %441 = vector.load %arg16[%c11_65, %c8_66, %c0_67] : memref<14x32x128xf32, #tpu.memory_space<vmem>>, vector<3x16x128xf32>
      tpu.vector_store %arg16[%c11_65, %c8_66, %c0_67], %440 {strides = array<i32>} : memref<14x32x128xf32, #tpu.memory_space<vmem>>, vector<3x16x128xf32>,
    } else {
    }
    %c0_34 = arith.constant 0 : index
    %c0_35 = arith.constant 0 : index
    %64 = vector.load %arg10[%c0_34, %c0_35] : memref<49x128xf32, #tpu.memory_space<vmem>>, vector<49x128xf32>
    %c0_36 = arith.constant 0 : index
    %c5 = arith.constant 5 : index
    %c0_37 = arith.constant 0 : index
    %65 = vector.load %arg16[%c0_36, %c5, %c0_37] : memref<14x32x128xf32, #tpu.memory_space<vmem>>, vector<14x16x128xf32>
    %66 = vector.extract_strided_slice %65 {offsets = [0, 0, 0], sizes = [8, 16, 128], strides = [1, 1, 1]} : vector<14x16x128xf32> to vector<8x16x128xf32>
    %67 = vector.extract_strided_slice %64 {offsets = [0, 0], sizes = [1, 128], strides = [1, 1]} : vector<49x128xf32> to vector<1x128xf32>
    %68 = vector.shape_cast %67 : vector<1x128xf32> to vector<128xf32>
    %69 = vector.shape_cast %68 : vector<128xf32> to vector<1x1x128xf32>
    %70 = vector.broadcast %69 : vector<1x1x128xf32> to vector<8x16x128xf32>
    %71 = arith.mulf %66, %70 : vector<8x16x128xf32>
    %72 = vector.extract_strided_slice %65 {offsets = [1, 0, 0], sizes = [8, 16, 128], strides = [1, 1, 1]} : vector<14x16x128xf32> to vector<8x16x128xf32>
    %73 = vector.extract_strided_slice %64 {offsets = [7, 0], sizes = [1, 128], strides = [1, 1]} : vector<49x128xf32> to vector<1x128xf32>
    %74 = vector.shape_cast %73 : vector<1x128xf32> to vector<128xf32>
    %75 = vector.shape_cast %74 : vector<128xf32> to vector<1x1x128xf32>
    %76 = vector.broadcast %75 : vector<1x1x128xf32> to vector<8x16x128xf32>
    %77 = arith.mulf %72, %76 : vector<8x16x128xf32>
    %78 = arith.addf %71, %77 : vector<8x16x128xf32>
    %79 = vector.extract_strided_slice %65 {offsets = [2, 0, 0], sizes = [8, 16, 128], strides = [1, 1, 1]} : vector<14x16x128xf32> to vector<8x16x128xf32>
    %80 = vector.extract_strided_slice %64 {offsets = [14, 0], sizes = [1, 128], strides = [1, 1]} : vector<49x128xf32> to vector<1x128xf32>
    %81 = vector.shape_cast %80 : vector<1x128xf32> to vector<128xf32>
    %82 = vector.shape_cast %81 : vector<128xf32> to vector<1x1x128xf32>
    %83 = vector.broadcast %82 : vector<1x1x128xf32> to vector<8x16x128xf32>
    %84 = arith.mulf %79, %83 : vector<8x16x128xf32>
    %85 = arith.addf %78, %84 : vector<8x16x128xf32>
    %86 = vector.extract_strided_slice %65 {offsets = [3, 0, 0], sizes = [8, 16, 128], strides = [1, 1, 1]} : vector<14x16x128xf32> to vector<8x16x128xf32>
    %87 = vector.extract_strided_slice %64 {offsets = [21, 0], sizes = [1, 128], strides = [1, 1]} : vector<49x128xf32> to vector<1x128xf32>
    %88 = vector.shape_cast %87 : vector<1x128xf32> to vector<128xf32>
    %89 = vector.shape_cast %88 : vector<128xf32> to vector<1x1x128xf32>
    %90 = vector.broadcast %89 : vector<1x1x128xf32> to vector<8x16x128xf32>
    %91 = arith.mulf %86, %90 : vector<8x16x128xf32>
    %92 = arith.addf %85, %91 : vector<8x16x128xf32>
    %93 = vector.extract_strided_slice %65 {offsets = [4, 0, 0], sizes = [8, 16, 128], strides = [1, 1, 1]} : vector<14x16x128xf32> to vector<8x16x128xf32>
    %94 = vector.extract_strided_slice %64 {offsets = [28, 0], sizes = [1, 128], strides = [1, 1]} : vector<49x128xf32> to vector<1x128xf32>
    %95 = vector.shape_cast %94 : vector<1x128xf32> to vector<128xf32>
    %96 = vector.shape_cast %95 : vector<128xf32> to vector<1x1x128xf32>
    %97 = vector.broadcast %96 : vector<1x1x128xf32> to vector<8x16x128xf32>
    %98 = arith.mulf %93, %97 : vector<8x16x128xf32>
    %99 = arith.addf %92, %98 : vector<8x16x128xf32>
    %100 = vector.extract_strided_slice %65 {offsets = [5, 0, 0], sizes = [8, 16, 128], strides = [1, 1, 1]} : vector<14x16x128xf32> to vector<8x16x128xf32>
    %101 = vector.extract_strided_slice %64 {offsets = [35, 0], sizes = [1, 128], strides = [1, 1]} : vector<49x128xf32> to vector<1x128xf32>
    %102 = vector.shape_cast %101 : vector<1x128xf32> to vector<128xf32>
    %103 = vector.shape_cast %102 : vector<128xf32> to vector<1x1x128xf32>
    %104 = vector.broadcast %103 : vector<1x1x128xf32> to vector<8x16x128xf32>
    %105 = arith.mulf %100, %104 : vector<8x16x128xf32>
    %106 = arith.addf %99, %105 : vector<8x16x128xf32>
    %107 = vector.extract_strided_slice %65 {offsets = [6, 0, 0], sizes = [8, 16, 128], strides = [1, 1, 1]} : vector<14x16x128xf32> to vector<8x16x128xf32>
    %108 = vector.extract_strided_slice %64 {offsets = [42, 0], sizes = [1, 128], strides = [1, 1]} : vector<49x128xf32> to vector<1x128xf32>
    %109 = vector.shape_cast %108 : vector<1x128xf32> to vector<128xf32>
    %110 = vector.shape_cast %109 : vector<128xf32> to vector<1x1x128xf32>
    %111 = vector.broadcast %110 : vector<1x1x128xf32> to vector<8x16x128xf32>
    %112 = arith.mulf %107, %111 : vector<8x16x128xf32>
    %113 = arith.addf %106, %112 : vector<8x16x128xf32>
    %c0_38 = arith.constant 0 : index
    %c6 = arith.constant 6 : index
    %c0_39 = arith.constant 0 : index
    %114 = vector.load %arg16[%c0_38, %c6, %c0_39] : memref<14x32x128xf32, #tpu.memory_space<vmem>>, vector<14x16x128xf32>
    %115 = vector.extract_strided_slice %114 {offsets = [0, 0, 0], sizes = [8, 16, 128], strides = [1, 1, 1]} : vector<14x16x128xf32> to vector<8x16x128xf32>
    %116 = vector.extract_strided_slice %64 {offsets = [1, 0], sizes = [1, 128], strides = [1, 1]} : vector<49x128xf32> to vector<1x128xf32>
    %117 = vector.shape_cast %116 : vector<1x128xf32> to vector<128xf32>
    %118 = vector.shape_cast %117 : vector<128xf32> to vector<1x1x128xf32>
    %119 = vector.broadcast %118 : vector<1x1x128xf32> to vector<8x16x128xf32>
    %120 = arith.mulf %115, %119 : vector<8x16x128xf32>
    %121 = vector.extract_strided_slice %114 {offsets = [1, 0, 0], sizes = [8, 16, 128], strides = [1, 1, 1]} : vector<14x16x128xf32> to vector<8x16x128xf32>
    %122 = vector.extract_strided_slice %64 {offsets = [8, 0], sizes = [1, 128], strides = [1, 1]} : vector<49x128xf32> to vector<1x128xf32>
    %123 = vector.shape_cast %122 : vector<1x128xf32> to vector<128xf32>
    %124 = vector.shape_cast %123 : vector<128xf32> to vector<1x1x128xf32>
    %125 = vector.broadcast %124 : vector<1x1x128xf32> to vector<8x16x128xf32>
    %126 = arith.mulf %121, %125 : vector<8x16x128xf32>
    %127 = arith.addf %120, %126 : vector<8x16x128xf32>
    %128 = vector.extract_strided_slice %114 {offsets = [2, 0, 0], sizes = [8, 16, 128], strides = [1, 1, 1]} : vector<14x16x128xf32> to vector<8x16x128xf32>
    %129 = vector.extract_strided_slice %64 {offsets = [15, 0], sizes = [1, 128], strides = [1, 1]} : vector<49x128xf32> to vector<1x128xf32>
    %130 = vector.shape_cast %129 : vector<1x128xf32> to vector<128xf32>
    %131 = vector.shape_cast %130 : vector<128xf32> to vector<1x1x128xf32>
    %132 = vector.broadcast %131 : vector<1x1x128xf32> to vector<8x16x128xf32>
    %133 = arith.mulf %128, %132 : vector<8x16x128xf32>
    %134 = arith.addf %127, %133 : vector<8x16x128xf32>
    %135 = vector.extract_strided_slice %114 {offsets = [3, 0, 0], sizes = [8, 16, 128], strides = [1, 1, 1]} : vector<14x16x128xf32> to vector<8x16x128xf32>
    %136 = vector.extract_strided_slice %64 {offsets = [22, 0], sizes = [1, 128], strides = [1, 1]} : vector<49x128xf32> to vector<1x128xf32>
    %137 = vector.shape_cast %136 : vector<1x128xf32> to vector<128xf32>
    %138 = vector.shape_cast %137 : vector<128xf32> to vector<1x1x128xf32>
    %139 = vector.broadcast %138 : vector<1x1x128xf32> to vector<8x16x128xf32>
    %140 = arith.mulf %135, %139 : vector<8x16x128xf32>
    %141 = arith.addf %134, %140 : vector<8x16x128xf32>
    %142 = vector.extract_strided_slice %114 {offsets = [4, 0, 0], sizes = [8, 16, 128], strides = [1, 1, 1]} : vector<14x16x128xf32> to vector<8x16x128xf32>
    %143 = vector.extract_strided_slice %64 {offsets = [29, 0], sizes = [1, 128], strides = [1, 1]} : vector<49x128xf32> to vector<1x128xf32>
    %144 = vector.shape_cast %143 : vector<1x128xf32> to vector<128xf32>
    %145 = vector.shape_cast %144 : vector<128xf32> to vector<1x1x128xf32>
    %146 = vector.broadcast %145 : vector<1x1x128xf32> to vector<8x16x128xf32>
    %147 = arith.mulf %142, %146 : vector<8x16x128xf32>
    %148 = arith.addf %141, %147 : vector<8x16x128xf32>
    %149 = vector.extract_strided_slice %114 {offsets = [5, 0, 0], sizes = [8, 16, 128], strides = [1, 1, 1]} : vector<14x16x128xf32> to vector<8x16x128xf32>
    %150 = vector.extract_strided_slice %64 {offsets = [36, 0], sizes = [1, 128], strides = [1, 1]} : vector<49x128xf32> to vector<1x128xf32>
    %151 = vector.shape_cast %150 : vector<1x128xf32> to vector<128xf32>
    %152 = vector.shape_cast %151 : vector<128xf32> to vector<1x1x128xf32>
    %153 = vector.broadcast %152 : vector<1x1x128xf32> to vector<8x16x128xf32>
    %154 = arith.mulf %149, %153 : vector<8x16x128xf32>
    %155 = arith.addf %148, %154 : vector<8x16x128xf32>
    %156 = vector.extract_strided_slice %114 {offsets = [6, 0, 0], sizes = [8, 16, 128], strides = [1, 1, 1]} : vector<14x16x128xf32> to vector<8x16x128xf32>
    %157 = vector.extract_strided_slice %64 {offsets = [43, 0], sizes = [1, 128], strides = [1, 1]} : vector<49x128xf32> to vector<1x128xf32>
    %158 = vector.shape_cast %157 : vector<1x128xf32> to vector<128xf32>
    %159 = vector.shape_cast %158 : vector<128xf32> to vector<1x1x128xf32>
    %160 = vector.broadcast %159 : vector<1x1x128xf32> to vector<8x16x128xf32>
    %161 = arith.mulf %156, %160 : vector<8x16x128xf32>
    %162 = arith.addf %155, %161 : vector<8x16x128xf32>
    %c0_40 = arith.constant 0 : index
    %c7 = arith.constant 7 : index
    %c0_41 = arith.constant 0 : index
    %163 = vector.load %arg16[%c0_40, %c7, %c0_41] : memref<14x32x128xf32, #tpu.memory_space<vmem>>, vector<14x16x128xf32>
    %164 = vector.extract_strided_slice %163 {offsets = [0, 0, 0], sizes = [8, 16, 128], strides = [1, 1, 1]} : vector<14x16x128xf32> to vector<8x16x128xf32>
    %165 = vector.extract_strided_slice %64 {offsets = [2, 0], sizes = [1, 128], strides = [1, 1]} : vector<49x128xf32> to vector<1x128xf32>
    %166 = vector.shape_cast %165 : vector<1x128xf32> to vector<128xf32>
    %167 = vector.shape_cast %166 : vector<128xf32> to vector<1x1x128xf32>
    %168 = vector.broadcast %167 : vector<1x1x128xf32> to vector<8x16x128xf32>
    %169 = arith.mulf %164, %168 : vector<8x16x128xf32>
    %170 = vector.extract_strided_slice %163 {offsets = [1, 0, 0], sizes = [8, 16, 128], strides = [1, 1, 1]} : vector<14x16x128xf32> to vector<8x16x128xf32>
    %171 = vector.extract_strided_slice %64 {offsets = [9, 0], sizes = [1, 128], strides = [1, 1]} : vector<49x128xf32> to vector<1x128xf32>
    %172 = vector.shape_cast %171 : vector<1x128xf32> to vector<128xf32>
    %173 = vector.shape_cast %172 : vector<128xf32> to vector<1x1x128xf32>
    %174 = vector.broadcast %173 : vector<1x1x128xf32> to vector<8x16x128xf32>
    %175 = arith.mulf %170, %174 : vector<8x16x128xf32>
    %176 = arith.addf %169, %175 : vector<8x16x128xf32>
    %177 = vector.extract_strided_slice %163 {offsets = [2, 0, 0], sizes = [8, 16, 128], strides = [1, 1, 1]} : vector<14x16x128xf32> to vector<8x16x128xf32>
    %178 = vector.extract_strided_slice %64 {offsets = [16, 0], sizes = [1, 128], strides = [1, 1]} : vector<49x128xf32> to vector<1x128xf32>
    %179 = vector.shape_cast %178 : vector<1x128xf32> to vector<128xf32>
    %180 = vector.shape_cast %179 : vector<128xf32> to vector<1x1x128xf32>
    %181 = vector.broadcast %180 : vector<1x1x128xf32> to vector<8x16x128xf32>
    %182 = arith.mulf %177, %181 : vector<8x16x128xf32>
    %183 = arith.addf %176, %182 : vector<8x16x128xf32>
    %184 = vector.extract_strided_slice %163 {offsets = [3, 0, 0], sizes = [8, 16, 128], strides = [1, 1, 1]} : vector<14x16x128xf32> to vector<8x16x128xf32>
    %185 = vector.extract_strided_slice %64 {offsets = [23, 0], sizes = [1, 128], strides = [1, 1]} : vector<49x128xf32> to vector<1x128xf32>
    %186 = vector.shape_cast %185 : vector<1x128xf32> to vector<128xf32>
    %187 = vector.shape_cast %186 : vector<128xf32> to vector<1x1x128xf32>
    %188 = vector.broadcast %187 : vector<1x1x128xf32> to vector<8x16x128xf32>
    %189 = arith.mulf %184, %188 : vector<8x16x128xf32>
    %190 = arith.addf %183, %189 : vector<8x16x128xf32>
    %191 = vector.extract_strided_slice %163 {offsets = [4, 0, 0], sizes = [8, 16, 128], strides = [1, 1, 1]} : vector<14x16x128xf32> to vector<8x16x128xf32>
    %192 = vector.extract_strided_slice %64 {offsets = [30, 0], sizes = [1, 128], strides = [1, 1]} : vector<49x128xf32> to vector<1x128xf32>
    %193 = vector.shape_cast %192 : vector<1x128xf32> to vector<128xf32>
    %194 = vector.shape_cast %193 : vector<128xf32> to vector<1x1x128xf32>
    %195 = vector.broadcast %194 : vector<1x1x128xf32> to vector<8x16x128xf32>
    %196 = arith.mulf %191, %195 : vector<8x16x128xf32>
    %197 = arith.addf %190, %196 : vector<8x16x128xf32>
    %198 = vector.extract_strided_slice %163 {offsets = [5, 0, 0], sizes = [8, 16, 128], strides = [1, 1, 1]} : vector<14x16x128xf32> to vector<8x16x128xf32>
    %199 = vector.extract_strided_slice %64 {offsets = [37, 0], sizes = [1, 128], strides = [1, 1]} : vector<49x128xf32> to vector<1x128xf32>
    %200 = vector.shape_cast %199 : vector<1x128xf32> to vector<128xf32>
    %201 = vector.shape_cast %200 : vector<128xf32> to vector<1x1x128xf32>
    %202 = vector.broadcast %201 : vector<1x1x128xf32> to vector<8x16x128xf32>
    %203 = arith.mulf %198, %202 : vector<8x16x128xf32>
    %204 = arith.addf %197, %203 : vector<8x16x128xf32>
    %205 = vector.extract_strided_slice %163 {offsets = [6, 0, 0], sizes = [8, 16, 128], strides = [1, 1, 1]} : vector<14x16x128xf32> to vector<8x16x128xf32>
    %206 = vector.extract_strided_slice %64 {offsets = [44, 0], sizes = [1, 128], strides = [1, 1]} : vector<49x128xf32> to vector<1x128xf32>
    %207 = vector.shape_cast %206 : vector<1x128xf32> to vector<128xf32>
    %208 = vector.shape_cast %207 : vector<128xf32> to vector<1x1x128xf32>
    %209 = vector.broadcast %208 : vector<1x1x128xf32> to vector<8x16x128xf32>
    %210 = arith.mulf %205, %209 : vector<8x16x128xf32>
    %211 = arith.addf %204, %210 : vector<8x16x128xf32>
    %c0_42 = arith.constant 0 : index
    %c8_43 = arith.constant 8 : index
    %c0_44 = arith.constant 0 : index
    %212 = vector.load %arg16[%c0_42, %c8_43, %c0_44] : memref<14x32x128xf32, #tpu.memory_space<vmem>>, vector<14x16x128xf32>
    %213 = vector.extract_strided_slice %212 {offsets = [0, 0, 0], sizes = [8, 16, 128], strides = [1, 1, 1]} : vector<14x16x128xf32> to vector<8x16x128xf32>
    %214 = vector.extract_strided_slice %64 {offsets = [3, 0], sizes = [1, 128], strides = [1, 1]} : vector<49x128xf32> to vector<1x128xf32>
    %215 = vector.shape_cast %214 : vector<1x128xf32> to vector<128xf32>
    %216 = vector.shape_cast %215 : vector<128xf32> to vector<1x1x128xf32>
    %217 = vector.broadcast %216 : vector<1x1x128xf32> to vector<8x16x128xf32>
    %218 = arith.mulf %213, %217 : vector<8x16x128xf32>
    %219 = vector.extract_strided_slice %212 {offsets = [1, 0, 0], sizes = [8, 16, 128], strides = [1, 1, 1]} : vector<14x16x128xf32> to vector<8x16x128xf32>
    %220 = vector.extract_strided_slice %64 {offsets = [10, 0], sizes = [1, 128], strides = [1, 1]} : vector<49x128xf32> to vector<1x128xf32>
    %221 = vector.shape_cast %220 : vector<1x128xf32> to vector<128xf32>
    %222 = vector.shape_cast %221 : vector<128xf32> to vector<1x1x128xf32>
    %223 = vector.broadcast %222 : vector<1x1x128xf32> to vector<8x16x128xf32>
    %224 = arith.mulf %219, %223 : vector<8x16x128xf32>
    %225 = arith.addf %218, %224 : vector<8x16x128xf32>
    %226 = vector.extract_strided_slice %212 {offsets = [2, 0, 0], sizes = [8, 16, 128], strides = [1, 1, 1]} : vector<14x16x128xf32> to vector<8x16x128xf32>
    %227 = vector.extract_strided_slice %64 {offsets = [17, 0], sizes = [1, 128], strides = [1, 1]} : vector<49x128xf32> to vector<1x128xf32>
    %228 = vector.shape_cast %227 : vector<1x128xf32> to vector<128xf32>
    %229 = vector.shape_cast %228 : vector<128xf32> to vector<1x1x128xf32>
    %230 = vector.broadcast %229 : vector<1x1x128xf32> to vector<8x16x128xf32>
    %231 = arith.mulf %226, %230 : vector<8x16x128xf32>
    %232 = arith.addf %225, %231 : vector<8x16x128xf32>
    %233 = vector.extract_strided_slice %212 {offsets = [3, 0, 0], sizes = [8, 16, 128], strides = [1, 1, 1]} : vector<14x16x128xf32> to vector<8x16x128xf32>
    %234 = vector.extract_strided_slice %64 {offsets = [24, 0], sizes = [1, 128], strides = [1, 1]} : vector<49x128xf32> to vector<1x128xf32>
    %235 = vector.shape_cast %234 : vector<1x128xf32> to vector<128xf32>
    %236 = vector.shape_cast %235 : vector<128xf32> to vector<1x1x128xf32>
    %237 = vector.broadcast %236 : vector<1x1x128xf32> to vector<8x16x128xf32>
    %238 = arith.mulf %233, %237 : vector<8x16x128xf32>
    %239 = arith.addf %232, %238 : vector<8x16x128xf32>
    %240 = vector.extract_strided_slice %212 {offsets = [4, 0, 0], sizes = [8, 16, 128], strides = [1, 1, 1]} : vector<14x16x128xf32> to vector<8x16x128xf32>
    %241 = vector.extract_strided_slice %64 {offsets = [31, 0], sizes = [1, 128], strides = [1, 1]} : vector<49x128xf32> to vector<1x128xf32>
    %242 = vector.shape_cast %241 : vector<1x128xf32> to vector<128xf32>
    %243 = vector.shape_cast %242 : vector<128xf32> to vector<1x1x128xf32>
    %244 = vector.broadcast %243 : vector<1x1x128xf32> to vector<8x16x128xf32>
    %245 = arith.mulf %240, %244 : vector<8x16x128xf32>
    %246 = arith.addf %239, %245 : vector<8x16x128xf32>
    %247 = vector.extract_strided_slice %212 {offsets = [5, 0, 0], sizes = [8, 16, 128], strides = [1, 1, 1]} : vector<14x16x128xf32> to vector<8x16x128xf32>
    %248 = vector.extract_strided_slice %64 {offsets = [38, 0], sizes = [1, 128], strides = [1, 1]} : vector<49x128xf32> to vector<1x128xf32>
    %249 = vector.shape_cast %248 : vector<1x128xf32> to vector<128xf32>
    %250 = vector.shape_cast %249 : vector<128xf32> to vector<1x1x128xf32>
    %251 = vector.broadcast %250 : vector<1x1x128xf32> to vector<8x16x128xf32>
    %252 = arith.mulf %247, %251 : vector<8x16x128xf32>
    %253 = arith.addf %246, %252 : vector<8x16x128xf32>
    %254 = vector.extract_strided_slice %212 {offsets = [6, 0, 0], sizes = [8, 16, 128], strides = [1, 1, 1]} : vector<14x16x128xf32> to vector<8x16x128xf32>
    %255 = vector.extract_strided_slice %64 {offsets = [45, 0], sizes = [1, 128], strides = [1, 1]} : vector<49x128xf32> to vector<1x128xf32>
    %256 = vector.shape_cast %255 : vector<1x128xf32> to vector<128xf32>
    %257 = vector.shape_cast %256 : vector<128xf32> to vector<1x1x128xf32>
    %258 = vector.broadcast %257 : vector<1x1x128xf32> to vector<8x16x128xf32>
    %259 = arith.mulf %254, %258 : vector<8x16x128xf32>
    %260 = arith.addf %253, %259 : vector<8x16x128xf32>
    %c0_45 = arith.constant 0 : index
    %c9 = arith.constant 9 : index
    %c0_46 = arith.constant 0 : index
    %261 = vector.load %arg16[%c0_45, %c9, %c0_46] : memref<14x32x128xf32, #tpu.memory_space<vmem>>, vector<14x16x128xf32>
    %262 = vector.extract_strided_slice %261 {offsets = [0, 0, 0], sizes = [8, 16, 128], strides = [1, 1, 1]} : vector<14x16x128xf32> to vector<8x16x128xf32>
    %263 = vector.extract_strided_slice %64 {offsets = [4, 0], sizes = [1, 128], strides = [1, 1]} : vector<49x128xf32> to vector<1x128xf32>
    %264 = vector.shape_cast %263 : vector<1x128xf32> to vector<128xf32>
    %265 = vector.shape_cast %264 : vector<128xf32> to vector<1x1x128xf32>
    %266 = vector.broadcast %265 : vector<1x1x128xf32> to vector<8x16x128xf32>
    %267 = arith.mulf %262, %266 : vector<8x16x128xf32>
    %268 = vector.extract_strided_slice %261 {offsets = [1, 0, 0], sizes = [8, 16, 128], strides = [1, 1, 1]} : vector<14x16x128xf32> to vector<8x16x128xf32>
    %269 = vector.extract_strided_slice %64 {offsets = [11, 0], sizes = [1, 128], strides = [1, 1]} : vector<49x128xf32> to vector<1x128xf32>
    %270 = vector.shape_cast %269 : vector<1x128xf32> to vector<128xf32>
    %271 = vector.shape_cast %270 : vector<128xf32> to vector<1x1x128xf32>
    %272 = vector.broadcast %271 : vector<1x1x128xf32> to vector<8x16x128xf32>
    %273 = arith.mulf %268, %272 : vector<8x16x128xf32>
    %274 = arith.addf %267, %273 : vector<8x16x128xf32>
    %275 = vector.extract_strided_slice %261 {offsets = [2, 0, 0], sizes = [8, 16, 128], strides = [1, 1, 1]} : vector<14x16x128xf32> to vector<8x16x128xf32>
    %276 = vector.extract_strided_slice %64 {offsets = [18, 0], sizes = [1, 128], strides = [1, 1]} : vector<49x128xf32> to vector<1x128xf32>
    %277 = vector.shape_cast %276 : vector<1x128xf32> to vector<128xf32>
    %278 = vector.shape_cast %277 : vector<128xf32> to vector<1x1x128xf32>
    %279 = vector.broadcast %278 : vector<1x1x128xf32> to vector<8x16x128xf32>
    %280 = arith.mulf %275, %279 : vector<8x16x128xf32>
    %281 = arith.addf %274, %280 : vector<8x16x128xf32>
    %282 = vector.extract_strided_slice %261 {offsets = [3, 0, 0], sizes = [8, 16, 128], strides = [1, 1, 1]} : vector<14x16x128xf32> to vector<8x16x128xf32>
    %283 = vector.extract_strided_slice %64 {offsets = [25, 0], sizes = [1, 128], strides = [1, 1]} : vector<49x128xf32> to vector<1x128xf32>
    %284 = vector.shape_cast %283 : vector<1x128xf32> to vector<128xf32>
    %285 = vector.shape_cast %284 : vector<128xf32> to vector<1x1x128xf32>
    %286 = vector.broadcast %285 : vector<1x1x128xf32> to vector<8x16x128xf32>
    %287 = arith.mulf %282, %286 : vector<8x16x128xf32>
    %288 = arith.addf %281, %287 : vector<8x16x128xf32>
    %289 = vector.extract_strided_slice %261 {offsets = [4, 0, 0], sizes = [8, 16, 128], strides = [1, 1, 1]} : vector<14x16x128xf32> to vector<8x16x128xf32>
    %290 = vector.extract_strided_slice %64 {offsets = [32, 0], sizes = [1, 128], strides = [1, 1]} : vector<49x128xf32> to vector<1x128xf32>
    %291 = vector.shape_cast %290 : vector<1x128xf32> to vector<128xf32>
    %292 = vector.shape_cast %291 : vector<128xf32> to vector<1x1x128xf32>
    %293 = vector.broadcast %292 : vector<1x1x128xf32> to vector<8x16x128xf32>
    %294 = arith.mulf %289, %293 : vector<8x16x128xf32>
    %295 = arith.addf %288, %294 : vector<8x16x128xf32>
    %296 = vector.extract_strided_slice %261 {offsets = [5, 0, 0], sizes = [8, 16, 128], strides = [1, 1, 1]} : vector<14x16x128xf32> to vector<8x16x128xf32>
    %297 = vector.extract_strided_slice %64 {offsets = [39, 0], sizes = [1, 128], strides = [1, 1]} : vector<49x128xf32> to vector<1x128xf32>
    %298 = vector.shape_cast %297 : vector<1x128xf32> to vector<128xf32>
    %299 = vector.shape_cast %298 : vector<128xf32> to vector<1x1x128xf32>
    %300 = vector.broadcast %299 : vector<1x1x128xf32> to vector<8x16x128xf32>
    %301 = arith.mulf %296, %300 : vector<8x16x128xf32>
    %302 = arith.addf %295, %301 : vector<8x16x128xf32>
    %303 = vector.extract_strided_slice %261 {offsets = [6, 0, 0], sizes = [8, 16, 128], strides = [1, 1, 1]} : vector<14x16x128xf32> to vector<8x16x128xf32>
    %304 = vector.extract_strided_slice %64 {offsets = [46, 0], sizes = [1, 128], strides = [1, 1]} : vector<49x128xf32> to vector<1x128xf32>
    %305 = vector.shape_cast %304 : vector<1x128xf32> to vector<128xf32>
    %306 = vector.shape_cast %305 : vector<128xf32> to vector<1x1x128xf32>
    %307 = vector.broadcast %306 : vector<1x1x128xf32> to vector<8x16x128xf32>
    %308 = arith.mulf %303, %307 : vector<8x16x128xf32>
    %309 = arith.addf %302, %308 : vector<8x16x128xf32>
    %c0_47 = arith.constant 0 : index
    %c10 = arith.constant 10 : index
    %c0_48 = arith.constant 0 : index
    %310 = vector.load %arg16[%c0_47, %c10, %c0_48] : memref<14x32x128xf32, #tpu.memory_space<vmem>>, vector<14x16x128xf32>
    %311 = vector.extract_strided_slice %310 {offsets = [0, 0, 0], sizes = [8, 16, 128], strides = [1, 1, 1]} : vector<14x16x128xf32> to vector<8x16x128xf32>
    %312 = vector.extract_strided_slice %64 {offsets = [5, 0], sizes = [1, 128], strides = [1, 1]} : vector<49x128xf32> to vector<1x128xf32>
    %313 = vector.shape_cast %312 : vector<1x128xf32> to vector<128xf32>
    %314 = vector.shape_cast %313 : vector<128xf32> to vector<1x1x128xf32>
    %315 = vector.broadcast %314 : vector<1x1x128xf32> to vector<8x16x128xf32>
    %316 = arith.mulf %311, %315 : vector<8x16x128xf32>
    %317 = vector.extract_strided_slice %310 {offsets = [1, 0, 0], sizes = [8, 16, 128], strides = [1, 1, 1]} : vector<14x16x128xf32> to vector<8x16x128xf32>
    %318 = vector.extract_strided_slice %64 {offsets = [12, 0], sizes = [1, 128], strides = [1, 1]} : vector<49x128xf32> to vector<1x128xf32>
    %319 = vector.shape_cast %318 : vector<1x128xf32> to vector<128xf32>
    %320 = vector.shape_cast %319 : vector<128xf32> to vector<1x1x128xf32>
    %321 = vector.broadcast %320 : vector<1x1x128xf32> to vector<8x16x128xf32>
    %322 = arith.mulf %317, %321 : vector<8x16x128xf32>
    %323 = arith.addf %316, %322 : vector<8x16x128xf32>
    %324 = vector.extract_strided_slice %310 {offsets = [2, 0, 0], sizes = [8, 16, 128], strides = [1, 1, 1]} : vector<14x16x128xf32> to vector<8x16x128xf32>
    %325 = vector.extract_strided_slice %64 {offsets = [19, 0], sizes = [1, 128], strides = [1, 1]} : vector<49x128xf32> to vector<1x128xf32>
    %326 = vector.shape_cast %325 : vector<1x128xf32> to vector<128xf32>
    %327 = vector.shape_cast %326 : vector<128xf32> to vector<1x1x128xf32>
    %328 = vector.broadcast %327 : vector<1x1x128xf32> to vector<8x16x128xf32>
    %329 = arith.mulf %324, %328 : vector<8x16x128xf32>
    %330 = arith.addf %323, %329 : vector<8x16x128xf32>
    %331 = vector.extract_strided_slice %310 {offsets = [3, 0, 0], sizes = [8, 16, 128], strides = [1, 1, 1]} : vector<14x16x128xf32> to vector<8x16x128xf32>
    %332 = vector.extract_strided_slice %64 {offsets = [26, 0], sizes = [1, 128], strides = [1, 1]} : vector<49x128xf32> to vector<1x128xf32>
    %333 = vector.shape_cast %332 : vector<1x128xf32> to vector<128xf32>
    %334 = vector.shape_cast %333 : vector<128xf32> to vector<1x1x128xf32>
    %335 = vector.broadcast %334 : vector<1x1x128xf32> to vector<8x16x128xf32>
    %336 = arith.mulf %331, %335 : vector<8x16x128xf32>
    %337 = arith.addf %330, %336 : vector<8x16x128xf32>
    %338 = vector.extract_strided_slice %310 {offsets = [4, 0, 0], sizes = [8, 16, 128], strides = [1, 1, 1]} : vector<14x16x128xf32> to vector<8x16x128xf32>
    %339 = vector.extract_strided_slice %64 {offsets = [33, 0], sizes = [1, 128], strides = [1, 1]} : vector<49x128xf32> to vector<1x128xf32>
    %340 = vector.shape_cast %339 : vector<1x128xf32> to vector<128xf32>
    %341 = vector.shape_cast %340 : vector<128xf32> to vector<1x1x128xf32>
    %342 = vector.broadcast %341 : vector<1x1x128xf32> to vector<8x16x128xf32>
    %343 = arith.mulf %338, %342 : vector<8x16x128xf32>
    %344 = arith.addf %337, %343 : vector<8x16x128xf32>
    %345 = vector.extract_strided_slice %310 {offsets = [5, 0, 0], sizes = [8, 16, 128], strides = [1, 1, 1]} : vector<14x16x128xf32> to vector<8x16x128xf32>
    %346 = vector.extract_strided_slice %64 {offsets = [40, 0], sizes = [1, 128], strides = [1, 1]} : vector<49x128xf32> to vector<1x128xf32>
    %347 = vector.shape_cast %346 : vector<1x128xf32> to vector<128xf32>
    %348 = vector.shape_cast %347 : vector<128xf32> to vector<1x1x128xf32>
    %349 = vector.broadcast %348 : vector<1x1x128xf32> to vector<8x16x128xf32>
    %350 = arith.mulf %345, %349 : vector<8x16x128xf32>
    %351 = arith.addf %344, %350 : vector<8x16x128xf32>
    %352 = vector.extract_strided_slice %310 {offsets = [6, 0, 0], sizes = [8, 16, 128], strides = [1, 1, 1]} : vector<14x16x128xf32> to vector<8x16x128xf32>
    %353 = vector.extract_strided_slice %64 {offsets = [47, 0], sizes = [1, 128], strides = [1, 1]} : vector<49x128xf32> to vector<1x128xf32>
    %354 = vector.shape_cast %353 : vector<1x128xf32> to vector<128xf32>
    %355 = vector.shape_cast %354 : vector<128xf32> to vector<1x1x128xf32>
    %356 = vector.broadcast %355 : vector<1x1x128xf32> to vector<8x16x128xf32>
    %357 = arith.mulf %352, %356 : vector<8x16x128xf32>
    %358 = arith.addf %351, %357 : vector<8x16x128xf32>
    %c0_49 = arith.constant 0 : index
    %c11 = arith.constant 11 : index
    %c0_50 = arith.constant 0 : index
    %359 = vector.load %arg16[%c0_49, %c11, %c0_50] : memref<14x32x128xf32, #tpu.memory_space<vmem>>, vector<14x16x128xf32>
    %360 = vector.extract_strided_slice %359 {offsets = [0, 0, 0], sizes = [8, 16, 128], strides = [1, 1, 1]} : vector<14x16x128xf32> to vector<8x16x128xf32>
    %361 = vector.extract_strided_slice %64 {offsets = [6, 0], sizes = [1, 128], strides = [1, 1]} : vector<49x128xf32> to vector<1x128xf32>
    %362 = vector.shape_cast %361 : vector<1x128xf32> to vector<128xf32>
    %363 = vector.shape_cast %362 : vector<128xf32> to vector<1x1x128xf32>
    %364 = vector.broadcast %363 : vector<1x1x128xf32> to vector<8x16x128xf32>
    %365 = arith.mulf %360, %364 : vector<8x16x128xf32>
    %366 = vector.extract_strided_slice %359 {offsets = [1, 0, 0], sizes = [8, 16, 128], strides = [1, 1, 1]} : vector<14x16x128xf32> to vector<8x16x128xf32>
    %367 = vector.extract_strided_slice %64 {offsets = [13, 0], sizes = [1, 128], strides = [1, 1]} : vector<49x128xf32> to vector<1x128xf32>
    %368 = vector.shape_cast %367 : vector<1x128xf32> to vector<128xf32>
    %369 = vector.shape_cast %368 : vector<128xf32> to vector<1x1x128xf32>
    %370 = vector.broadcast %369 : vector<1x1x128xf32> to vector<8x16x128xf32>
    %371 = arith.mulf %366, %370 : vector<8x16x128xf32>
    %372 = arith.addf %365, %371 : vector<8x16x128xf32>
    %373 = vector.extract_strided_slice %359 {offsets = [2, 0, 0], sizes = [8, 16, 128], strides = [1, 1, 1]} : vector<14x16x128xf32> to vector<8x16x128xf32>
    %374 = vector.extract_strided_slice %64 {offsets = [20, 0], sizes = [1, 128], strides = [1, 1]} : vector<49x128xf32> to vector<1x128xf32>
    %375 = vector.shape_cast %374 : vector<1x128xf32> to vector<128xf32>
    %376 = vector.shape_cast %375 : vector<128xf32> to vector<1x1x128xf32>
    %377 = vector.broadcast %376 : vector<1x1x128xf32> to vector<8x16x128xf32>
    %378 = arith.mulf %373, %377 : vector<8x16x128xf32>
    %379 = arith.addf %372, %378 : vector<8x16x128xf32>
    %380 = vector.extract_strided_slice %359 {offsets = [3, 0, 0], sizes = [8, 16, 128], strides = [1, 1, 1]} : vector<14x16x128xf32> to vector<8x16x128xf32>
    %381 = vector.extract_strided_slice %64 {offsets = [27, 0], sizes = [1, 128], strides = [1, 1]} : vector<49x128xf32> to vector<1x128xf32>
    %382 = vector.shape_cast %381 : vector<1x128xf32> to vector<128xf32>
    %383 = vector.shape_cast %382 : vector<128xf32> to vector<1x1x128xf32>
    %384 = vector.broadcast %383 : vector<1x1x128xf32> to vector<8x16x128xf32>
    %385 = arith.mulf %380, %384 : vector<8x16x128xf32>
    %386 = arith.addf %379, %385 : vector<8x16x128xf32>
    %387 = vector.extract_strided_slice %359 {offsets = [4, 0, 0], sizes = [8, 16, 128], strides = [1, 1, 1]} : vector<14x16x128xf32> to vector<8x16x128xf32>
    %388 = vector.extract_strided_slice %64 {offsets = [34, 0], sizes = [1, 128], strides = [1, 1]} : vector<49x128xf32> to vector<1x128xf32>
    %389 = vector.shape_cast %388 : vector<1x128xf32> to vector<128xf32>
    %390 = vector.shape_cast %389 : vector<128xf32> to vector<1x1x128xf32>
    %391 = vector.broadcast %390 : vector<1x1x128xf32> to vector<8x16x128xf32>
    %392 = arith.mulf %387, %391 : vector<8x16x128xf32>
    %393 = arith.addf %386, %392 : vector<8x16x128xf32>
    %394 = vector.extract_strided_slice %359 {offsets = [5, 0, 0], sizes = [8, 16, 128], strides = [1, 1, 1]} : vector<14x16x128xf32> to vector<8x16x128xf32>
    %395 = vector.extract_strided_slice %64 {offsets = [41, 0], sizes = [1, 128], strides = [1, 1]} : vector<49x128xf32> to vector<1x128xf32>
    %396 = vector.shape_cast %395 : vector<1x128xf32> to vector<128xf32>
    %397 = vector.shape_cast %396 : vector<128xf32> to vector<1x1x128xf32>
    %398 = vector.broadcast %397 : vector<1x1x128xf32> to vector<8x16x128xf32>
    %399 = arith.mulf %394, %398 : vector<8x16x128xf32>
    %400 = arith.addf %393, %399 : vector<8x16x128xf32>
    %401 = vector.extract_strided_slice %359 {offsets = [6, 0, 0], sizes = [8, 16, 128], strides = [1, 1, 1]} : vector<14x16x128xf32> to vector<8x16x128xf32>
    %402 = vector.extract_strided_slice %64 {offsets = [48, 0], sizes = [1, 128], strides = [1, 1]} : vector<49x128xf32> to vector<1x128xf32>
    %403 = vector.shape_cast %402 : vector<1x128xf32> to vector<128xf32>
    %404 = vector.shape_cast %403 : vector<128xf32> to vector<1x1x128xf32>
    %405 = vector.broadcast %404 : vector<1x1x128xf32> to vector<8x16x128xf32>
    %406 = arith.mulf %401, %405 : vector<8x16x128xf32>
    %407 = arith.addf %400, %406 : vector<8x16x128xf32>
    %408 = arith.addf %113, %162 : vector<8x16x128xf32>
    %409 = arith.addf %211, %260 : vector<8x16x128xf32>
    %410 = arith.addf %408, %409 : vector<8x16x128xf32>
    %411 = arith.addf %309, %358 : vector<8x16x128xf32>
    %c0_51 = arith.constant 0 : index
    %c0_52 = arith.constant 0 : index
    %412 = vector.load %arg11[%c0_51, %c0_52] : memref<1x128xf32, #tpu.memory_space<vmem>>, vector<1x128xf32>
    %413 = vector.shape_cast %412 : vector<1x128xf32> to vector<128xf32>
    %414 = vector.shape_cast %413 : vector<128xf32> to vector<1x1x128xf32>
    %415 = vector.broadcast %414 : vector<1x1x128xf32> to vector<8x16x128xf32>
    %416 = arith.addf %407, %415 : vector<8x16x128xf32>
    %417 = arith.addf %411, %416 : vector<8x16x128xf32>
    %418 = arith.addf %410, %417 : vector<8x16x128xf32>
    %419 = arith.mulf %52, %418 : vector<8x16x128xf32>
    %420 = arith.truncf %419 : vector<8x16x128xf32> to vector<8x16x128xbf16>
    %421 = vector.shape_cast %420 : vector<8x16x128xbf16> to vector<128x128xbf16>
    %c0_53 = arith.constant 0 : index
    %c0_54 = arith.constant 0 : index
    %422 = vector.load %arg12[%c0_53, %c0_54] : memref<128x128xbf16, #tpu.memory_space<vmem>>, vector<128x128xbf16>
    %cst_55 = arith.constant dense<0.000000e+00> : vector<128x128xf32>
    %423 = tpu.matmul %421, %422, %cst_55 {dimension_numbers = #tpu.dot_dimension_numbers<[1], [0], [0], [1], [0, 0, 1, 1], [], []>} : vector<128x128xbf16>, vector<128x128xbf16>, vector<128x128xf32> -> vector<128x128xf32>
    %c0_56 = arith.constant 0 : index
    %c0_57 = arith.constant 0 : index
    %424 = vector.load %arg13[%c0_56, %c0_57] : memref<1x128xf32, #tpu.memory_space<vmem>>, vector<1x128xf32>
    %425 = vector.shape_cast %424 : vector<1x128xf32> to vector<128xf32>
    %426 = vector.shape_cast %425 : vector<128xf32> to vector<1x128xf32>
    %427 = vector.broadcast %426 : vector<1x128xf32> to vector<128x128xf32>
    %428 = arith.addf %423, %427 : vector<128x128xf32>
    %429 = vector.shape_cast %428 : vector<128x128xf32> to vector<8x16x128xf32>
    %c0_58 = arith.constant 0 : index
    %c0_59 = arith.constant 0 : index
    %430 = vector.load %arg14[%c0_58, %c0_59] : memref<1x128xf32, #tpu.memory_space<vmem>>, vector<1x128xf32>
    %431 = vector.shape_cast %430 : vector<1x128xf32> to vector<128xf32>
    %432 = vector.shape_cast %431 : vector<128xf32> to vector<1x1x128xf32>
    %433 = vector.broadcast %432 : vector<1x1x128xf32> to vector<8x16x128xf32>
    %434 = arith.mulf %429, %433 : vector<8x16x128xf32>
    %435 = vector.extract_strided_slice %1 {offsets = [3, 0, 0], sizes = [8, 16, 128], strides = [1, 1, 1]} : vector<14x16x128xf32> to vector<8x16x128xf32>
    %436 = arith.addf %434, %435 : vector<8x16x128xf32>
    %c0_60 = arith.constant 0 : index
    %c0_61 = arith.constant 0 : index
    %c0_62 = arith.constant 0 : index
    %c0_63 = arith.constant 0 : index
    %437 = vector.load %arg15[%c0_60, %c0_61, %c0_62, %c0_63] : memref<1x8x16x128xf32, #tpu.memory_space<vmem>>, vector<1x8x16x128xf32>
    %438 = vector.shape_cast %437 : vector<1x8x16x128xf32> to vector<8x16x128xf32>
    %439 = vector.shape_cast %436 : vector<8x16x128xf32> to vector<1x8x16x128xf32>
    tpu.vector_store %arg15[%c0_60, %c0_61, %c0_62, %c0_63], %439 {strides = array<i32>} : memref<1x8x16x128xf32, #tpu.memory_space<vmem>>, vector<1x8x16x128xf32>,
    return
  }
  func.func @transform_0(%arg0: i32, %arg1: i32) -> (i32, i32, i32, i32) {
    %c2_i32 = arith.constant 2 : i32
    %0 = arith.muli %arg0, %c2_i32 : i32
    %1 = arith.addi %0, %arg1 : i32
    %c0_i32 = arith.constant 0 : i32
    %c0_i32_0 = arith.constant 0 : i32
    %c0_i32_1 = arith.constant 0 : i32
    %c0_i32_2 = arith.constant 0 : i32
    return %1, %c0_i32, %c0_i32_0, %c0_i32_1 : i32, i32, i32, i32
  }
  func.func @transform_1(%arg0: i32, %arg1: i32) -> (i32, i32) {
    %c0_i32 = arith.constant 0 : i32
    %c0_i32_0 = arith.constant 0 : i32
    %c0_i32_1 = arith.constant 0 : i32
    return %c0_i32, %c0_i32_0 : i32, i32
  }
  func.func @transform_2(%arg0: i32, %arg1: i32) -> (i32, i32) {
    %c0_i32 = arith.constant 0 : i32
    %c0_i32_0 = arith.constant 0 : i32
    %c0_i32_1 = arith.constant 0 : i32
    return %c0_i32, %c0_i32_0 : i32, i32
  }
  func.func @transform_3(%arg0: i32, %arg1: i32) -> (i32, i32) {
    %c0_i32 = arith.constant 0 : i32
    %c0_i32_0 = arith.constant 0 : i32
    %c0_i32_1 = arith.constant 0 : i32
    return %c0_i32, %c0_i32_0 : i32, i32
  }
  func.func @transform_4(%arg0: i32, %arg1: i32) -> (i32, i32) {
    %c0_i32 = arith.constant 0 : i32
    %c0_i32_0 = arith.constant 0 : i32
    %c0_i32_1 = arith.constant 0 : i32
    return %c0_i32, %c0_i32_0 : i32, i32
  }
  func.func @transform_5(%arg0: i32, %arg1: i32) -> (i32, i32) {
    %c0_i32 = arith.constant 0 : i32
    %c0_i32_0 = arith.constant 0 : i32
    %c0_i32_1 = arith.constant 0 : i32
    return %c0_i32, %c0_i32_0 : i32, i32
  }
  func.func @transform_6(%arg0: i32, %arg1: i32) -> (i32, i32) {
    %c0_i32 = arith.constant 0 : i32
    %c0_i32_0 = arith.constant 0 : i32
    %c0_i32_1 = arith.constant 0 : i32
    return %c0_i32, %c0_i32_0 : i32, i32
  }
  func.func @transform_7(%arg0: i32, %arg1: i32) -> (i32, i32) {
    %c0_i32 = arith.constant 0 : i32
    %c0_i32_0 = arith.constant 0 : i32
    %c0_i32_1 = arith.constant 0 : i32
    return %c0_i32, %c0_i32_0 : i32, i32
  }
  func.func @transform_8(%arg0: i32, %arg1: i32) -> (i32, i32) {
    %c0_i32 = arith.constant 0 : i32
    %c0_i32_0 = arith.constant 0 : i32
    %c0_i32_1 = arith.constant 0 : i32
    return %c0_i32, %c0_i32_0 : i32, i32
  }
  func.func @transform_9(%arg0: i32, %arg1: i32) -> (i32, i32) {
    %c0_i32 = arith.constant 0 : i32
    %c0_i32_0 = arith.constant 0 : i32
    %c0_i32_1 = arith.constant 0 : i32
    return %c0_i32, %c0_i32_0 : i32, i32
  }
  func.func @transform_10(%arg0: i32, %arg1: i32) -> (i32, i32) {
    %c0_i32 = arith.constant 0 : i32
    %c0_i32_0 = arith.constant 0 : i32
    %c0_i32_1 = arith.constant 0 : i32
    return %c0_i32, %c0_i32_0 : i32, i32
  }
  func.func @transform_11(%arg0: i32, %arg1: i32) -> (i32, i32) {
    %c0_i32 = arith.constant 0 : i32
    %c0_i32_0 = arith.constant 0 : i32
    %c0_i32_1 = arith.constant 0 : i32
    return %c0_i32, %c0_i32_0 : i32, i32
  }
  func.func @transform_12(%arg0: i32, %arg1: i32) -> (i32, i32) {
    %c0_i32 = arith.constant 0 : i32
    %c0_i32_0 = arith.constant 0 : i32
    %c0_i32_1 = arith.constant 0 : i32
    return %c0_i32, %c0_i32_0 : i32, i32
  }
  func.func @transform_13(%arg0: i32, %arg1: i32) -> (i32, i32, i32, i32) {
    %c0_i32 = arith.constant 0 : i32
    %c0_i32_0 = arith.constant 0 : i32
    %c0_i32_1 = arith.constant 0 : i32
    return %arg0, %arg1, %c0_i32, %c0_i32_0 : i32, i32, i32, i32
  }
}

</mosaic_0001>

<llo_original>
// kernel: gsau_forward.1
$region0: #{gsau_forward.1}
  #allocation0 [shape = 'u32[]', space=smem, size = 0x4, offset = 0x4, fixed_abs, tag = 'smem constant byte address 0x4 - core index']
  #allocation1 [shape = 'u32[144,128]{1,0:T(1,128)}', space=vmem, size = 0x12000, scoped, tag = 'internal scratch']
  #allocation2 [shape = 'f32[14,32,128]{2,1,0:T(8,128)}', space=vmem, size = 0x38000, scoped, tag = 'scratch operand']
  %s0 = inlined_call_operand.vmem [shape: f32[4,14,16,128], index: 0, kind: input, shape index: {}]
  %s1 = inlined_call_operand.vmem [shape: f32[1,128], index: 1, kind: input, shape index: {}]
  %s2 = inlined_call_operand.vmem [shape: f32[1,128], index: 2, kind: input, shape index: {}]
  %s3 = inlined_call_operand.vmem [shape: f32[1,128], index: 3, kind: input, shape index: {}]
  %s4 = inlined_call_operand.vmem [shape: bf16[128,128], index: 4, kind: input, shape index: {}]
  %s5 = inlined_call_operand.vmem [shape: f32[1,128], index: 5, kind: input, shape index: {}]
  %s6 = inlined_call_operand.vmem [shape: bf16[128,128], index: 6, kind: input, shape index: {}]
  %s7 = inlined_call_operand.vmem [shape: f32[1,128], index: 7, kind: input, shape index: {}]
  %s8 = inlined_call_operand.vmem [shape: f32[49,128], index: 8, kind: input, shape index: {}]
  %s9 = inlined_call_operand.vmem [shape: f32[1,128], index: 9, kind: input, shape index: {}]
  %s10 = inlined_call_operand.vmem [shape: bf16[128,128], index: 10, kind: input, shape index: {}]
  %s11 = inlined_call_operand.vmem [shape: f32[1,128], index: 11, kind: input, shape index: {}]
  %s12 = inlined_call_operand.vmem [shape: f32[1,128], index: 12, kind: input, shape index: {}]
  %s13 = inlined_call_operand.vmem [shape: f32[2,16,16,128], index: 13, kind: output, shape index: {}]
  %s14 = sld [smem:[#allocation0]]
  $region93: #{gsau_forward.1} parent=0
    _
  %s16 = ssub.s32 1, %s14
  %s17 = scalar_select 0, %s16, %s14
  loop: start=0, step=1, limit=6
  $region2: #{gsau_forward.1} parent=0 // loop_pre_header
    _
  $region3: #{gsau_forward.1} parent=0 // loop_header
    %s19 = sphi 0, %s23
    %p20 = scmp.ge.s32.totalorder %s19, 6
    %s26 = sphi 0, %s38
    %s27 = sphi 0, %s34
    %s28 = sphi 0, %s26
    %s29 = sphi 0, %s27
    %s30 = sphi 0, %s28
    %s31 = sphi 0, %s29
    %s45 = sphi 0, %s47
    %s48 = sphi 0, %s45
    %s49 = sphi 0, %s48
    %s65 = sphi 0, %s49
    %s69 = sphi 0, %s69
    %s71 = sphi 0, %s69
    %s72 = sphi 0, %s71
    %s86 = sphi 0, %s72
    %s90 = sphi 0, %s90
    %s92 = sphi 0, %s90
    %s93 = sphi 0, %s92
    %s107 = sphi 0, %s93
    %s111 = sphi 0, %s111
    %s113 = sphi 0, %s111
    %s114 = sphi 0, %s113
    %s128 = sphi 0, %s114
    %s132 = sphi 0, %s132
    %s134 = sphi 0, %s132
    %s135 = sphi 0, %s134
    %s149 = sphi 0, %s135
    %s153 = sphi 0, %s153
    %s155 = sphi 0, %s153
    %s156 = sphi 0, %s155
    %s170 = sphi 0, %s156
    %s174 = sphi 0, %s174
    %s176 = sphi 0, %s174
    %s177 = sphi 0, %s176
    %s191 = sphi 0, %s177
    %s195 = sphi 0, %s195
    %s197 = sphi 0, %s195
    %s198 = sphi 0, %s197
    %s212 = sphi 0, %s198
    %s216 = sphi 0, %s216
    %s218 = sphi 0, %s216
    %s219 = sphi 0, %s218
    %s233 = sphi 0, %s219
    %s237 = sphi 0, %s237
    %s239 = sphi 0, %s237
    %s240 = sphi 0, %s239
    %s254 = sphi 0, %s240
    %s258 = sphi 0, %s258
    %s260 = sphi 0, %s258
    %s261 = sphi 0, %s260
    %s275 = sphi 0, %s261
    %s279 = sphi 0, %s279
    %s281 = sphi 0, %s279
    %s282 = sphi 0, %s281
    %s296 = sphi 0, %s282
    %s300 = sphi 0, %s300
    %s302 = sphi 0, %s300
    %s303 = sphi 0, %s302
    %s317 = sphi 0, %s303
    %s325 = sphi 0, %s327
    %s328 = sphi 0, %s325
    %s329 = sphi 0, %s328
    %s345 = sphi 0, %s329
  $region4: #{gsau_forward.1} parent=0 // loop_header_branch
    %22 = sbr.rel (%p20) target = $region8
  $region5: #{gsau_forward.1} parent=0 // loop_body
    %s24 = ssub.s32 %s19, 1
    %s25 = ssub.s32 %s19, 2
    %s32 = sadd.s32 1, %s27
    %p33 = scmp.ge.s32.totalorder %s32, 2
    %s34 = scalar_select %p33, 0, %s32
    %s35 = sadd.s32 1, %s26
    %s36 = scalar_select %p33, %s35, %s26
    %p37 = scmp.ge.s32.totalorder %s36, 2
    %s38 = scalar_select %p37, 0, %s36
    %s39 = smul.u32 %s26, 2
    %s40 = sadd.s32 %s39, %s27
    %s41 = smul.u32 %s38, 2
    %s42 = sadd.s32 %s41, %s34
    %s43 = ssub.s32 %s40, %s42
    %p44 = scmp.eq.s32.totalorder %s43, 0
    %s46 = sadd.s32 %s45, 1
    %s47 = scalar_select %p44, %s45, %s46
    %p50 = pneg %p44
    %p51 = scmp.eq.s32.totalorder %s19, 3
    %p52 = por %p50, %p51
    %p53 = scmp.ne.s32.totalorder %s45, %s48
    %p54 = scmp.eq.s32.totalorder %s19, 0
    %p55 = por %p53, %p54
    %p56 = scmp.ne.s32.totalorder %s45, %s48
    %p57 = scmp.eq.s32.totalorder %s24, 3
    %p58 = por %p56, %p57
    %p59 = scmp.ne.s32.totalorder %s48, %s49
    %p60 = scmp.eq.s32.totalorder %s24, 0
    %p61 = por %p59, %p60
    %p62 = scmp.ne.s32.totalorder %s48, %s49
    %p63 = scmp.eq.s32.totalorder %s25, 3
    %p64 = por %p62, %p63
    %p66 = scmp.ne.s32.totalorder %s49, %s65
    %p67 = scmp.eq.s32.totalorder %s25, 0
    %p68 = por %p66, %p67
    %s70 = sadd.s32 %s69, 1
    %p73 = scmp.eq.s32.totalorder %s19, 3
    %p74 = scmp.ne.s32.totalorder %s69, %s71
    %p75 = scmp.eq.s32.totalorder %s19, 0
    %p76 = por %p74, %p75
    %p77 = scmp.ne.s32.totalorder %s69, %s71
    %p78 = scmp.eq.s32.totalorder %s24, 3
    %p79 = por %p77, %p78
    %p80 = scmp.ne.s32.totalorder %s71, %s72
    %p81 = scmp.eq.s32.totalorder %s24, 0
    %p82 = por %p80, %p81
    %p83 = scmp.ne.s32.totalorder %s71, %s72
    %p84 = scmp.eq.s32.totalorder %s25, 3
    %p85 = por %p83, %p84
    %p87 = scmp.ne.s32.totalorder %s72, %s86
    %p88 = scmp.eq.s32.totalorder %s25, 0
    %p89 = por %p87, %p88
    %s91 = sadd.s32 %s90, 1
    %p94 = scmp.eq.s32.totalorder %s19, 3
    %p95 = scmp.ne.s32.totalorder %s90, %s92
    %p96 = scmp.eq.s32.totalorder %s19, 0
    %p97 = por %p95, %p96
    %p98 = scmp.ne.s32.totalorder %s90, %s92
    %p99 = scmp.eq.s32.totalorder %s24, 3
    %p100 = por %p98, %p99
    %p101 = scmp.ne.s32.totalorder %s92, %s93
    %p102 = scmp.eq.s32.totalorder %s24, 0
    %p103 = por %p101, %p102
    %p104 = scmp.ne.s32.totalorder %s92, %s93
    %p105 = scmp.eq.s32.totalorder %s25, 3
    %p106 = por %p104, %p105
    %p108 = scmp.ne.s32.totalorder %s93, %s107
    %p109 = scmp.eq.s32.totalorder %s25, 0
    %p110 = por %p108, %p109
    %s112 = sadd.s32 %s111, 1
    %p115 = scmp.eq.s32.totalorder %s19, 3
    %p116 = scmp.ne.s32.totalorder %s111, %s113
    %p117 = scmp.eq.s32.totalorder %s19, 0
    %p118 = por %p116, %p117
    %p119 = scmp.ne.s32.totalorder %s111, %s113
    %p120 = scmp.eq.s32.totalorder %s24, 3
    %p121 = por %p119, %p120
    %p122 = scmp.ne.s32.totalorder %s113, %s114
    %p123 = scmp.eq.s32.totalorder %s24, 0
    %p124 = por %p122, %p123
    %p125 = scmp.ne.s32.totalorder %s113, %s114
    %p126 = scmp.eq.s32.totalorder %s25, 3
    %p127 = por %p125, %p126
    %p129 = scmp.ne.s32.totalorder %s114, %s128
    %p130 = scmp.eq.s32.totalorder %s25, 0
    %p131 = por %p129, %p130
    %s133 = sadd.s32 %s132, 1
    %p136 = scmp.eq.s32.totalorder %s19, 3
    %p137 = scmp.ne.s32.totalorder %s132, %s134
    %p138 = scmp.eq.s32.totalorder %s19, 0
    %p139 = por %p137, %p138
    %p140 = scmp.ne.s32.totalorder %s132, %s134
    %p141 = scmp.eq.s32.totalorder %s24, 3
    %p142 = por %p140, %p141
    %p143 = scmp.ne.s32.totalorder %s134, %s135
    %p144 = scmp.eq.s32.totalorder %s24, 0
    %p145 = por %p143, %p144
    %p146 = scmp.ne.s32.totalorder %s134, %s135
    %p147 = scmp.eq.s32.totalorder %s25, 3
    %p148 = por %p146, %p147
    %p150 = scmp.ne.s32.totalorder %s135, %s149
    %p151 = scmp.eq.s32.totalorder %s25, 0
    %p152 = por %p150, %p151
    %s154 = sadd.s32 %s153, 1
    %p157 = scmp.eq.s32.totalorder %s19, 3
    %p158 = scmp.ne.s32.totalorder %s153, %s155
    %p159 = scmp.eq.s32.totalorder %s19, 0
    %p160 = por %p158, %p159
    %p161 = scmp.ne.s32.totalorder %s153, %s155
    %p162 = scmp.eq.s32.totalorder %s24, 3
    %p163 = por %p161, %p162
    %p164 = scmp.ne.s32.totalorder %s155, %s156
    %p165 = scmp.eq.s32.totalorder %s24, 0
    %p166 = por %p164, %p165
    %p167 = scmp.ne.s32.totalorder %s155, %s156
    %p168 = scmp.eq.s32.totalorder %s25, 3
    %p169 = por %p167, %p168
    %p171 = scmp.ne.s32.totalorder %s156, %s170
    %p172 = scmp.eq.s32.totalorder %s25, 0
    %p173 = por %p171, %p172
    %s175 = sadd.s32 %s174, 1
    %p178 = scmp.eq.s32.totalorder %s19, 3
    %p179 = scmp.ne.s32.totalorder %s174, %s176
    %p180 = scmp.eq.s32.totalorder %s19, 0
    %p181 = por %p179, %p180
    %p182 = scmp.ne.s32.totalorder %s174, %s176
    %p183 = scmp.eq.s32.totalorder %s24, 3
    %p184 = por %p182, %p183
    %p185 = scmp.ne.s32.totalorder %s176, %s177
    %p186 = scmp.eq.s32.totalorder %s24, 0
    %p187 = por %p185, %p186
    %p188 = scmp.ne.s32.totalorder %s176, %s177
    %p189 = scmp.eq.s32.totalorder %s25, 3
    %p190 = por %p188, %p189
    %p192 = scmp.ne.s32.totalorder %s177, %s191
    %p193 = scmp.eq.s32.totalorder %s25, 0
    %p194 = por %p192, %p193
    %s196 = sadd.s32 %s195, 1
    %p199 = scmp.eq.s32.totalorder %s19, 3
    %p200 = scmp.ne.s32.totalorder %s195, %s197
    %p201 = scmp.eq.s32.totalorder %s19, 0
    %p202 = por %p200, %p201
    %p203 = scmp.ne.s32.totalorder %s195, %s197
    %p204 = scmp.eq.s32.totalorder %s24, 3
    %p205 = por %p203, %p204
    %p206 = scmp.ne.s32.totalorder %s197, %s198
    %p207 = scmp.eq.s32.totalorder %s24, 0
    %p208 = por %p206, %p207
    %p209 = scmp.ne.s32.totalorder %s197, %s198
    %p210 = scmp.eq.s32.totalorder %s25, 3
    %p211 = por %p209, %p210
    %p213 = scmp.ne.s32.totalorder %s198, %s212
    %p214 = scmp.eq.s32.totalorder %s25, 0
    %p215 = por %p213, %p214
    %s217 = sadd.s32 %s216, 1
    %p220 = scmp.eq.s32.totalorder %s19, 3
    %p221 = scmp.ne.s32.totalorder %s216, %s218
    %p222 = scmp.eq.s32.totalorder %s19, 0
    %p223 = por %p221, %p222
    %p224 = scmp.ne.s32.totalorder %s216, %s218
    %p225 = scmp.eq.s32.totalorder %s24, 3
    %p226 = por %p224, %p225
    %p227 = scmp.ne.s32.totalorder %s218, %s219
    %p228 = scmp.eq.s32.totalorder %s24, 0
    %p229 = por %p227, %p228
    %p230 = scmp.ne.s32.totalorder %s218, %s219
    %p231 = scmp.eq.s32.totalorder %s25, 3
    %p232 = por %p230, %p231
    %p234 = scmp.ne.s32.totalorder %s219, %s233
    %p235 = scmp.eq.s32.totalorder %s25, 0
    %p236 = por %p234, %p235
    %s238 = sadd.s32 %s237, 1
    %p241 = scmp.eq.s32.totalorder %s19, 3
    %p242 = scmp.ne.s32.totalorder %s237, %s239
    %p243 = scmp.eq.s32.totalorder %s19, 0
    %p244 = por %p242, %p243
    %p245 = scmp.ne.s32.totalorder %s237, %s239
    %p246 = scmp.eq.s32.totalorder %s24, 3
    %p247 = por %p245, %p246
    %p248 = scmp.ne.s32.totalorder %s239, %s240
    %p249 = scmp.eq.s32.totalorder %s24, 0
    %p250 = por %p248, %p249
    %p251 = scmp.ne.s32.totalorder %s239, %s240
    %p252 = scmp.eq.s32.totalorder %s25, 3
    %p253 = por %p251, %p252
    %p255 = scmp.ne.s32.totalorder %s240, %s254
    %p256 = scmp.eq.s32.totalorder %s25, 0
    %p257 = por %p255, %p256
    %s259 = sadd.s32 %s258, 1
    %p262 = scmp.eq.s32.totalorder %s19, 3
    %p263 = scmp.ne.s32.totalorder %s258, %s260
    %p264 = scmp.eq.s32.totalorder %s19, 0
    %p265 = por %p263, %p264
    %p266 = scmp.ne.s32.totalorder %s258, %s260
    %p267 = scmp.eq.s32.totalorder %s24, 3
    %p268 = por %p266, %p267
    %p269 = scmp.ne.s32.totalorder %s260, %s261
    %p270 = scmp.eq.s32.totalorder %s24, 0
    %p271 = por %p269, %p270
    %p272 = scmp.ne.s32.totalorder %s260, %s261
    %p273 = scmp.eq.s32.totalorder %s25, 3
    %p274 = por %p272, %p273
    %p276 = scmp.ne.s32.totalorder %s261, %s275
    %p277 = scmp.eq.s32.totalorder %s25, 0
    %p278 = por %p276, %p277
    %s280 = sadd.s32 %s279, 1
    %p283 = scmp.eq.s32.totalorder %s19, 3
    %p284 = scmp.ne.s32.totalorder %s279, %s281
    %p285 = scmp.eq.s32.totalorder %s19, 0
    %p286 = por %p284, %p285
    %p287 = scmp.ne.s32.totalorder %s279, %s281
    %p288 = scmp.eq.s32.totalorder %s24, 3
    %p289 = por %p287, %p288
    %p290 = scmp.ne.s32.totalorder %s281, %s282
    %p291 = scmp.eq.s32.totalorder %s24, 0
    %p292 = por %p290, %p291
    %p293 = scmp.ne.s32.totalorder %s281, %s282
    %p294 = scmp.eq.s32.totalorder %s25, 3
    %p295 = por %p293, %p294
    %p297 = scmp.ne.s32.totalorder %s282, %s296
    %p298 = scmp.eq.s32.totalorder %s25, 0
    %p299 = por %p297, %p298
    %s301 = sadd.s32 %s300, 1
    %p304 = scmp.eq.s32.totalorder %s19, 3
    %p305 = scmp.ne.s32.totalorder %s300, %s302
    %p306 = scmp.eq.s32.totalorder %s19, 0
    %p307 = por %p305, %p306
    %p308 = scmp.ne.s32.totalorder %s300, %s302
    %p309 = scmp.eq.s32.totalorder %s24, 3
    %p310 = por %p308, %p309
    %p311 = scmp.ne.s32.totalorder %s302, %s303
    %p312 = scmp.eq.s32.totalorder %s24, 0
    %p313 = por %p311, %p312
    %p314 = scmp.ne.s32.totalorder %s302, %s303
    %p315 = scmp.eq.s32.totalorder %s25, 3
    %p316 = por %p314, %p315
    %p318 = scmp.ne.s32.totalorder %s303, %s317
    %p319 = scmp.eq.s32.totalorder %s25, 0
    %p320 = por %p318, %p319
    %s321 = ssub.s32 %s26, %s38
    %s322 = ssub.s32 %s27, %s34
    %s323 = sor.u32 %s321, %s322
    %p324 = scmp.eq.s32.totalorder %s323, 0
    %s326 = sadd.s32 %s325, 1
    %s327 = scalar_select %p324, %s325, %s326
    %p330 = pneg %p324
    %p331 = scmp.eq.s32.totalorder %s19, 3
    %p332 = por %p330, %p331
    %p333 = scmp.ne.s32.totalorder %s325, %s328
    %p334 = scmp.eq.s32.totalorder %s19, 0
    %p335 = por %p333, %p334
    %p336 = scmp.ne.s32.totalorder %s325, %s328
    %p337 = scmp.eq.s32.totalorder %s24, 3
    %p338 = por %p336, %p337
    %p339 = scmp.ne.s32.totalorder %s328, %s329
    %p340 = scmp.eq.s32.totalorder %s24, 0
    %p341 = por %p339, %p340
    %p342 = scmp.ne.s32.totalorder %s328, %s329
    %p343 = scmp.eq.s32.totalorder %s25, 3
    %p344 = por %p342, %p343
    %p346 = scmp.ne.s32.totalorder %s329, %s345
    %p347 = scmp.eq.s32.totalorder %s25, 0
    %p348 = por %p346, %p347
    %p349 = scmp.le.s32.totalorder 1, %s19
    %p350 = scmp.lt.s32.totalorder %s19, 5
    %p351 = pnand %p349, %p350
    %p352 = pneg %p351
    // Predicated region
    $region9: #{gsau_forward.1} parent=5 // pred_check
      _
    $region10: #{gsau_forward.1} parent=5 // pred_check_branch
      %354 = sbr.rel (%p351) target = $region12
    $region11: #{gsau_forward.1} parent=5 // pred_region
      %s355 = ssub.s32 %s19, 1
      // Predicated region
      $region13: #{gsau_forward.1} parent=11 // pred_check
        %p356 = pneg %p82
      $region14: #{gsau_forward.1} parent=11 // pred_check_branch
        %358 = sbr.rel (%p356) target = $region16
      $region15: #{gsau_forward.1} parent=11 // pred_region
        _
      $region16: #{gsau_forward.1} parent=11 // pred_fallthru
        _
      // Predicated region
      $region17: #{gsau_forward.1} parent=11 // pred_check
        %p359 = pneg %p103
      $region18: #{gsau_forward.1} parent=11 // pred_check_branch
        %361 = sbr.rel (%p359) target = $region20
      $region19: #{gsau_forward.1} parent=11 // pred_region
        _
      $region20: #{gsau_forward.1} parent=11 // pred_fallthru
        _
      // Predicated region
      $region21: #{gsau_forward.1} parent=11 // pred_check
        %p362 = pneg %p124
      $region22: #{gsau_forward.1} parent=11 // pred_check_branch
        %364 = sbr.rel (%p362) target = $region24
      $region23: #{gsau_forward.1} parent=11 // pred_region
        _
      $region24: #{gsau_forward.1} parent=11 // pred_fallthru
        _
      // Predicated region
      $region25: #{gsau_forward.1} parent=11 // pred_check
        %p365 = pneg %p145
      $region26: #{gsau_forward.1} parent=11 // pred_check_branch
        %367 = sbr.rel (%p365) target = $region28
      $region27: #{gsau_forward.1} parent=11 // pred_region
        _
      $region28: #{gsau_forward.1} parent=11 // pred_fallthru
        _
      // Predicated region
      $region29: #{gsau_forward.1} parent=11 // pred_check
        %p368 = pneg %p166
      $region30: #{gsau_forward.1} parent=11 // pred_check_branch
        %370 = sbr.rel (%p368) target = $region32
      $region31: #{gsau_forward.1} parent=11 // pred_region
        _
      $region32: #{gsau_forward.1} parent=11 // pred_fallthru
        _
      // Predicated region
      $region33: #{gsau_forward.1} parent=11 // pred_check
        %p371 = pneg %p187
      $region34: #{gsau_forward.1} parent=11 // pred_check_branch
        %373 = sbr.rel (%p371) target = $region36
      $region35: #{gsau_forward.1} parent=11 // pred_region
        _
      $region36: #{gsau_forward.1} parent=11 // pred_fallthru
        _
      // Predicated region
      $region37: #{gsau_forward.1} parent=11 // pred_check
        %p374 = pneg %p208
      $region38: #{gsau_forward.1} parent=11 // pred_check_branch
        %376 = sbr.rel (%p374) target = $region40
      $region39: #{gsau_forward.1} parent=11 // pred_region
        _
      $region40: #{gsau_forward.1} parent=11 // pred_fallthru
        _
      // Predicated region
      $region41: #{gsau_forward.1} parent=11 // pred_check
        %p377 = pneg %p229
      $region42: #{gsau_forward.1} parent=11 // pred_check_branch
        %379 = sbr.rel (%p377) target = $region44
      $region43: #{gsau_forward.1} parent=11 // pred_region
        _
      $region44: #{gsau_forward.1} parent=11 // pred_fallthru
        _
      // Predicated region
      $region45: #{gsau_forward.1} parent=11 // pred_check
        %p380 = pneg %p250
      $region46: #{gsau_forward.1} parent=11 // pred_check_branch
        %382 = sbr.rel (%p380) target = $region48
      $region47: #{gsau_forward.1} parent=11 // pred_region
        _
      $region48: #{gsau_forward.1} parent=11 // pred_fallthru
        _
      // Predicated region
      $region49: #{gsau_forward.1} parent=11 // pred_check
        %p383 = pneg %p271
      $region50: #{gsau_forward.1} parent=11 // pred_check_branch
        %385 = sbr.rel (%p383) target = $region52
      $region51: #{gsau_forward.1} parent=11 // pred_region
        _
      $region52: #{gsau_forward.1} parent=11 // pred_fallthru
        _
      // Predicated region
      $region53: #{gsau_forward.1} parent=11 // pred_check
        %p386 = pneg %p292
      $region54: #{gsau_forward.1} parent=11 // pred_check_branch
        %388 = sbr.rel (%p386) target = $region56
      $region55: #{gsau_forward.1} parent=11 // pred_region
        _
      $region56: #{gsau_forward.1} parent=11 // pred_fallthru
        _
      // Predicated region
      $region57: #{gsau_forward.1} parent=11 // pred_check
        %p389 = pneg %p313
      $region58: #{gsau_forward.1} parent=11 // pred_check_branch
        %391 = sbr.rel (%p389) target = $region60
      $region59: #{gsau_forward.1} parent=11 // pred_region
        _
      $region60: #{gsau_forward.1} parent=11 // pred_fallthru
        _
    $region12: #{gsau_forward.1} parent=5 // pred_fallthru
      _
    %p392 = scmp.lt.s32.totalorder %s19, 4
    // Predicated region
    $region61: #{gsau_forward.1} parent=5 // pred_check
      %p393 = pneg %p392
    $region62: #{gsau_forward.1} parent=5 // pred_check_branch
      %395 = sbr.rel (%p393) target = $region64
    $region63: #{gsau_forward.1} parent=5 // pred_region
      // Predicated region
      $region65: #{gsau_forward.1} parent=63 // pred_check
        %p396 = pneg %p55
      $region66: #{gsau_forward.1} parent=63 // pred_check_branch
        %398 = sbr.rel (%p396) target = $region68
      $region67: #{gsau_forward.1} parent=63 // pred_region
        %s399 = smul.u32 %s26, 2
        %s400 = sadd.s32 %s399, %s27
        %p401 = scmp.lt.s32.totalorder %s400, 3
        %s402 = scalar_select %p401, %s400, 3
        %s403 = smul.addr %s402, 28
        %s404 = smul.addr %s403, 8
        %s405 = scalar_lea.vmem %s0, %s404
        %s406 = smul.u32 %s26, 2
        %s407 = sadd.s32 %s406, %s27
      $region68: #{gsau_forward.1} parent=63 // pred_fallthru
        _
    $region64: #{gsau_forward.1} parent=5 // pred_fallthru
      _
    %p408 = scmp.le.s32.totalorder 1, %s19
    %p409 = scmp.lt.s32.totalorder %s19, 5
    %p410 = pnand %p408, %p409
    %p411 = pneg %p410
    // Predicated region
    $region69: #{gsau_forward.1} parent=5 // pred_check
      _
    $region70: #{gsau_forward.1} parent=5 // pred_check_branch
      %413 = sbr.rel (%p410) target = $region72
    $region71: #{gsau_forward.1} parent=5 // pred_region
      %s414 = ssub.s32 %s19, 1
      %s415 = smul.u32 %s28, 2
      %s416 = sadd.s32 %s415, %s29
      %p417 = scmp.lt.s32.totalorder %s416, 3
      %s418 = scalar_select %p417, %s416, 3
      %s419 = smul.addr %s418, 28
      %s420 = smul.addr %s419, 8
      %s421 = scalar_lea.vmem %s0, %s420
      %p422 = pneg %p61
      %p423 = pneg %p58
      %p424 = pneg %p82
      %p425 = pneg %p79
      %p426 = pneg %p103
      %p427 = pneg %p100
      %p428 = pneg %p124
      %p429 = pneg %p121
      %p430 = pneg %p145
      %p431 = pneg %p142
      %p432 = pneg %p166
      %p433 = pneg %p163
      %p434 = pneg %p187
      %p435 = pneg %p184
      %p436 = pneg %p208
      %p437 = pneg %p205
      %p438 = pneg %p229
      %p439 = pneg %p226
      %p440 = pneg %p250
      %p441 = pneg %p247
      %p442 = pneg %p271
      %p443 = pneg %p268
      %p444 = pneg %p292
      %p445 = pneg %p289
      %p446 = pneg %p313
      %p447 = pneg %p310
      %p448 = pneg %p341
      %p449 = pneg %p338
      %s450 = smul.u32 8, %s29
      %p451 = scmp.lt.s32.totalorder %s28, 1
      %s452 = scalar_select %p451, %s28, 1
      %p453 = scmp.lt.s32.totalorder %s450, 15
      %s454 = scalar_select %p453, %s450, 15
      %s455 = smul.addr %s454, 2
      %s456 = smul.addr %s452, 32
      %s457 = sadd.s32 %s455, %s456
      %s458 = smul.addr %s457, 8
      %s459 = scalar_lea.vmem %s13, %s458
      %s460 = smul.u32 %s28, 2
      %s461 = sadd.s32 %s460, %s29
      %p462 = scmp.lt.s32.totalorder %s461, 3
      %s463 = scalar_select %p462, %s461, 3
      %s464 = smul.addr %s463, 28
      %s465 = smul.addr %s464, 8
      %s466 = scalar_lea.vmem %s0, %s465
      %s467 = smul.u32 %s28, 2
      %s468 = sadd.s32 %s467, %s29
      %s469 = smul.u32 8, %s29
      %p470 = scmp.lt.s32.totalorder %s28, 1
      %s471 = scalar_select %p470, %s28, 1
      %p472 = scmp.lt.s32.totalorder %s469, 15
      %s473 = scalar_select %p472, %s469, 15
      %s474 = smul.addr %s473, 2
      %s475 = smul.addr %s471, 32
      %s476 = sadd.s32 %s474, %s475
      %s477 = smul.addr %s476, 8
      %s478 = scalar_lea.vmem %s13, %s477
      %s479 = smul.u32 8, %s29
      %v481 = vld [vmem:[%s466] sm:$0xff]
      %v482 = vld [vmem:[%s466 + $0x8] sm:$0xff]
      %v483 = vld [vmem:[%s466 + $0x10] sm:$0xff]
      %v484 = vld [vmem:[%s466 + $0x18] sm:$0xff]
      %v485 = vld [vmem:[%s466 + $0x20] sm:$0xff]
      %v486 = vld [vmem:[%s466 + $0x28] sm:$0xff]
      %v487 = vld [vmem:[%s466 + $0x30] sm:$0xff]
      %v488 = vld [vmem:[%s466 + $0x38] sm:$0xff]
      %v489 = vld [vmem:[%s466 + $0x40] sm:$0xff]
      %v490 = vld [vmem:[%s466 + $0x48] sm:$0xff]
      %v491 = vld [vmem:[%s466 + $0x50] sm:$0xff]
      %v492 = vld [vmem:[%s466 + $0x58] sm:$0xff]
      %v493 = vld [vmem:[%s466 + $0x60] sm:$0xff]
      %v494 = vld [vmem:[%s466 + $0x68] sm:$0xff]
      %v495 = vld [vmem:[%s466 + $0x70] sm:$0xff]
      %v496 = vld [vmem:[%s466 + $0x78] sm:$0xff]
      %v497 = vld [vmem:[%s466 + $0x80] sm:$0xff]
      %v498 = vld [vmem:[%s466 + $0x88] sm:$0xff]
      %v499 = vld [vmem:[%s466 + $0x90] sm:$0xff]
      %v500 = vld [vmem:[%s466 + $0x98] sm:$0xff]
      %v501 = vld [vmem:[%s466 + $0xa0] sm:$0xff]
      %v502 = vld [vmem:[%s466 + $0xa8] sm:$0xff]
      %v503 = vld [vmem:[%s466 + $0xb0] sm:$0xff]
      %v504 = vld [vmem:[%s466 + $0xb8] sm:$0xff]
      %v505 = vld [vmem:[%s466 + $0xc0] sm:$0xff]
      %v506 = vld [vmem:[%s466 + $0xc8] sm:$0xff]
      %v507 = vld [vmem:[%s466 + $0xd0] sm:$0xff]
      %v508 = vld [vmem:[%s466 + $0xd8] sm:$0xff]
      %509 = vadd.xlane.f32.xlu0 %v481
      %v510 = vpop.xlane.xlu0 %509
      %511 = vadd.xlane.f32.xlu0 %v482
      %v512 = vpop.xlane.xlu0 %511
      %513 = vadd.xlane.f32.xlu0 %v483
      %v514 = vpop.xlane.xlu0 %513
      %515 = vadd.xlane.f32.xlu0 %v484
      %v516 = vpop.xlane.xlu0 %515
      %517 = vadd.xlane.f32.xlu0 %v485
      %v518 = vpop.xlane.xlu0 %517
      %519 = vadd.xlane.f32.xlu0 %v486
      %v520 = vpop.xlane.xlu0 %519
      %521 = vadd.xlane.f32.xlu0 %v487
      %v522 = vpop.xlane.xlu0 %521
      %523 = vadd.xlane.f32.xlu0 %v488
      %v524 = vpop.xlane.xlu0 %523
      %525 = vadd.xlane.f32.xlu0 %v489
      %v526 = vpop.xlane.xlu0 %525
      %527 = vadd.xlane.f32.xlu0 %v490
      %v528 = vpop.xlane.xlu0 %527
      %529 = vadd.xlane.f32.xlu0 %v491
      %v530 = vpop.xlane.xlu0 %529
      %531 = vadd.xlane.f32.xlu0 %v492
      %v532 = vpop.xlane.xlu0 %531
      %533 = vadd.xlane.f32.xlu0 %v493
      %v534 = vpop.xlane.xlu0 %533
      %535 = vadd.xlane.f32.xlu0 %v494
      %v536 = vpop.xlane.xlu0 %535
      %537 = vadd.xlane.f32.xlu0 %v495
      %v538 = vpop.xlane.xlu0 %537
      %539 = vadd.xlane.f32.xlu0 %v496
      %v540 = vpop.xlane.xlu0 %539
      %541 = vadd.xlane.f32.xlu0 %v497
      %v542 = vpop.xlane.xlu0 %541
      %543 = vadd.xlane.f32.xlu0 %v498
      %v544 = vpop.xlane.xlu0 %543
      %545 = vadd.xlane.f32.xlu0 %v499
      %v546 = vpop.xlane.xlu0 %545
      %547 = vadd.xlane.f32.xlu0 %v500
      %v548 = vpop.xlane.xlu0 %547
      %549 = vadd.xlane.f32.xlu0 %v501
      %v550 = vpop.xlane.xlu0 %549
      %551 = vadd.xlane.f32.xlu0 %v502
      %v552 = vpop.xlane.xlu0 %551
      %553 = vadd.xlane.f32.xlu0 %v503
      %v554 = vpop.xlane.xlu0 %553
      %555 = vadd.xlane.f32.xlu0 %v504
      %v556 = vpop.xlane.xlu0 %555
      %557 = vadd.xlane.f32.xlu0 %v505
      %v558 = vpop.xlane.xlu0 %557
      %559 = vadd.xlane.f32.xlu0 %v506
      %v560 = vpop.xlane.xlu0 %559
      %561 = vadd.xlane.f32.xlu0 %v507
      %v562 = vpop.xlane.xlu0 %561
      %563 = vadd.xlane.f32.xlu0 %v508
      %v564 = vpop.xlane.xlu0 %563
      %v565 = vmul.f32 %v510, 0.25
      %v566 = vmul.f32 %v512, 0.25
      %v567 = vmul.f32 %v514, 0.25
      %v568 = vmul.f32 %v516, 0.25
      %v569 = vmul.f32 %v518, 0.25
      %v570 = vmul.f32 %v520, 0.25
      %v571 = vmul.f32 %v522, 0.25
      %v572 = vmul.f32 %v524, 0.25
      %v573 = vmul.f32 %v526, 0.25
      %v574 = vmul.f32 %v528, 0.25
      %v575 = vmul.f32 %v530, 0.25
      %v576 = vmul.f32 %v532, 0.25
      %v577 = vmul.f32 %v534, 0.25
      %v578 = vmul.f32 %v536, 0.25
      %v579 = vmul.f32 %v538, 0.25
      %v580 = vmul.f32 %v540, 0.25
      %v581 = vmul.f32 %v542, 0.25
      %v582 = vmul.f32 %v544, 0.25
      %v583 = vmul.f32 %v546, 0.25
      %v584 = vmul.f32 %v548, 0.25
      %v585 = vmul.f32 %v550, 0.25
      %v586 = vmul.f32 %v552, 0.25
      %v587 = vmul.f32 %v554, 0.25
      %v588 = vmul.f32 %v556, 0.25
      %v589 = vmul.f32 %v558, 0.25
      %v590 = vmul.f32 %v560, 0.25
      %v591 = vmul.f32 %v562, 0.25
      %v592 = vmul.f32 %v564, 0.25
      %v593 = vsub.f32 %v481, %v565
      %v594 = vsub.f32 %v482, %v566
      %v595 = vsub.f32 %v483, %v567
      %v596 = vsub.f32 %v484, %v568
      %v597 = vsub.f32 %v485, %v569
      %v598 = vsub.f32 %v486, %v570
      %v599 = vsub.f32 %v487, %v571
      %v600 = vsub.f32 %v488, %v572
      %v601 = vsub.f32 %v489, %v573
      %v602 = vsub.f32 %v490, %v574
      %v603 = vsub.f32 %v491, %v575
      %v604 = vsub.f32 %v492, %v576
      %v605 = vsub.f32 %v493, %v577
      %v606 = vsub.f32 %v494, %v578
      %v607 = vsub.f32 %v495, %v579
      %v608 = vsub.f32 %v496, %v580
      %v609 = vsub.f32 %v497, %v581
      %v610 = vsub.f32 %v498, %v582
      %v611 = vsub.f32 %v499, %v583
      %v612 = vsub.f32 %v500, %v584
      %v613 = vsub.f32 %v501, %v585
      %v614 = vsub.f32 %v502, %v586
      %v615 = vsub.f32 %v503, %v587
      %v616 = vsub.f32 %v504, %v588
      %v617 = vsub.f32 %v505, %v589
      %v618 = vsub.f32 %v506, %v590
      %v619 = vsub.f32 %v507, %v591
      %v620 = vsub.f32 %v508, %v592
      %v621 = vmul.f32 %v593, %v593
      %v622 = vmul.f32 %v594, %v594
      %v623 = vmul.f32 %v595, %v595
      %v624 = vmul.f32 %v596, %v596
      %v625 = vmul.f32 %v597, %v597
      %v626 = vmul.f32 %v598, %v598
      %v627 = vmul.f32 %v599, %v599
      %v628 = vmul.f32 %v600, %v600
      %v629 = vmul.f32 %v601, %v601
      %v630 = vmul.f32 %v602, %v602
      %v631 = vmul.f32 %v603, %v603
      %v632 = vmul.f32 %v604, %v604
      %v633 = vmul.f32 %v605, %v605
      %v634 = vmul.f32 %v606, %v606
      %v635 = vmul.f32 %v607, %v607
      %v636 = vmul.f32 %v608, %v608
      %v637 = vmul.f32 %v609, %v609
      %v638 = vmul.f32 %v610, %v610
      %v639 = vmul.f32 %v611, %v611
      %v640 = vmul.f32 %v612, %v612
      %v641 = vmul.f32 %v613, %v613
      %v642 = vmul.f32 %v614, %v614
      %v643 = vmul.f32 %v615, %v615
      %v644 = vmul.f32 %v616, %v616
      %v645 = vmul.f32 %v617, %v617
      %v646 = vmul.f32 %v618, %v618
      %v647 = vmul.f32 %v619, %v619
      %v648 = vmul.f32 %v620, %v620
      %v649 = vld [vmem:[%s1] sm:$0x1]
      %v651 = vlaneseq
      %v652 = vshrl.u32 %v651, 7
      %v653 = vsub.s32 0, %v652
      %v654 = vrot.slane %v649, %v653
      %v656 = vmul.f32 %v621, %v654
      %v657 = vmul.f32 %v622, %v654
      %v658 = vmul.f32 %v623, %v654
      %v659 = vmul.f32 %v624, %v654
      %v660 = vmul.f32 %v625, %v654
      %v661 = vmul.f32 %v626, %v654
      %v662 = vmul.f32 %v627, %v654
      %v663 = vmul.f32 %v628, %v654
      %v664 = vmul.f32 %v629, %v654
      %v665 = vmul.f32 %v630, %v654
      %v666 = vmul.f32 %v631, %v654
      %v667 = vmul.f32 %v632, %v654
      %v668 = vmul.f32 %v633, %v654
      %v669 = vmul.f32 %v634, %v654
      %v670 = vmul.f32 %v635, %v654
      %v671 = vmul.f32 %v636, %v654
      %v672 = vmul.f32 %v637, %v654
      %v673 = vmul.f32 %v638, %v654
      %v674 = vmul.f32 %v639, %v654
      %v675 = vmul.f32 %v640, %v654
      %v676 = vmul.f32 %v641, %v654
      %v677 = vmul.f32 %v642, %v654
      %v678 = vmul.f32 %v643, %v654
      %v679 = vmul.f32 %v644, %v654
      %v680 = vmul.f32 %v645, %v654
      %v681 = vmul.f32 %v646, %v654
      %v682 = vmul.f32 %v647, %v654
      %v683 = vmul.f32 %v648, %v654
      %684 = vadd.xlane.f32.xlu0 %v656
      %v685 = vpop.xlane.xlu0 %684
      %686 = vadd.xlane.f32.xlu0 %v657
      %v687 = vpop.xlane.xlu0 %686
      %688 = vadd.xlane.f32.xlu0 %v658
      %v689 = vpop.xlane.xlu0 %688
      %690 = vadd.xlane.f32.xlu0 %v659
      %v691 = vpop.xlane.xlu0 %690
      %692 = vadd.xlane.f32.xlu0 %v660
      %v693 = vpop.xlane.xlu0 %692
      %694 = vadd.xlane.f32.xlu0 %v661
      %v695 = vpop.xlane.xlu0 %694
      %696 = vadd.xlane.f32.xlu0 %v662
      %v697 = vpop.xlane.xlu0 %696
      %698 = vadd.xlane.f32.xlu0 %v663
      %v699 = vpop.xlane.xlu0 %698
      %700 = vadd.xlane.f32.xlu0 %v664
      %v701 = vpop.xlane.xlu0 %700
      %702 = vadd.xlane.f32.xlu0 %v665
      %v703 = vpop.xlane.xlu0 %702
      %704 = vadd.xlane.f32.xlu0 %v666
      %v705 = vpop.xlane.xlu0 %704
      %706 = vadd.xlane.f32.xlu0 %v667
      %v707 = vpop.xlane.xlu0 %706
      %708 = vadd.xlane.f32.xlu0 %v668
      %v709 = vpop.xlane.xlu0 %708
      %710 = vadd.xlane.f32.xlu0 %v669
      %v711 = vpop.xlane.xlu0 %710
      %712 = vadd.xlane.f32.xlu0 %v670
      %v713 = vpop.xlane.xlu0 %712
      %714 = vadd.xlane.f32.xlu0 %v671
      %v715 = vpop.xlane.xlu0 %714
      %716 = vadd.xlane.f32.xlu0 %v672
      %v717 = vpop.xlane.xlu0 %716
      %718 = vadd.xlane.f32.xlu0 %v673
      %v719 = vpop.xlane.xlu0 %718
      %720 = vadd.xlane.f32.xlu0 %v674
      %v721 = vpop.xlane.xlu0 %720
      %722 = vadd.xlane.f32.xlu0 %v675
      %v723 = vpop.xlane.xlu0 %722
      %724 = vadd.xlane.f32.xlu0 %v676
      %v725 = vpop.xlane.xlu0 %724
      %726 = vadd.xlane.f32.xlu0 %v677
      %v727 = vpop.xlane.xlu0 %726
      %728 = vadd.xlane.f32.xlu0 %v678
      %v729 = vpop.xlane.xlu0 %728
      %730 = vadd.xlane.f32.xlu0 %v679
      %v731 = vpop.xlane.xlu0 %730
      %732 = vadd.xlane.f32.xlu0 %v680
      %v733 = vpop.xlane.xlu0 %732
      %734 = vadd.xlane.f32.xlu0 %v681
      %v735 = vpop.xlane.xlu0 %734
      %736 = vadd.xlane.f32.xlu0 %v682
      %v737 = vpop.xlane.xlu0 %736
      %738 = vadd.xlane.f32.xlu0 %v683
      %v739 = vpop.xlane.xlu0 %738
      %v740 = vmul.f32 %v685, 0.25
      %v741 = vmul.f32 %v687, 0.25
      %v742 = vmul.f32 %v689, 0.25
      %v743 = vmul.f32 %v691, 0.25
      %v744 = vmul.f32 %v693, 0.25
      %v745 = vmul.f32 %v695, 0.25
      %v746 = vmul.f32 %v697, 0.25
      %v747 = vmul.f32 %v699, 0.25
      %v748 = vmul.f32 %v701, 0.25
      %v749 = vmul.f32 %v703, 0.25
      %v750 = vmul.f32 %v705, 0.25
      %v751 = vmul.f32 %v707, 0.25
      %v752 = vmul.f32 %v709, 0.25
      %v753 = vmul.f32 %v711, 0.25
      %v754 = vmul.f32 %v713, 0.25
      %v755 = vmul.f32 %v715, 0.25
      %v756 = vmul.f32 %v717, 0.25
      %v757 = vmul.f32 %v719, 0.25
      %v758 = vmul.f32 %v721, 0.25
      %v759 = vmul.f32 %v723, 0.25
      %v760 = vmul.f32 %v725, 0.25
      %v761 = vmul.f32 %v727, 0.25
      %v762 = vmul.f32 %v729, 0.25
      %v763 = vmul.f32 %v731, 0.25
      %v764 = vmul.f32 %v733, 0.25
      %v765 = vmul.f32 %v735, 0.25
      %v766 = vmul.f32 %v737, 0.25
      %v767 = vmul.f32 %v739, 0.25
      %v768 = vadd.f32 %v740, 1e-06
      %v769 = vadd.f32 %v741, 1e-06
      %v770 = vadd.f32 %v742, 1e-06
      %v771 = vadd.f32 %v743, 1e-06
      %v772 = vadd.f32 %v744, 1e-06
      %v773 = vadd.f32 %v745, 1e-06
      %v774 = vadd.f32 %v746, 1e-06
      %v775 = vadd.f32 %v747, 1e-06
      %v776 = vadd.f32 %v748, 1e-06
      %v777 = vadd.f32 %v749, 1e-06
      %v778 = vadd.f32 %v750, 1e-06
      %v779 = vadd.f32 %v751, 1e-06
      %v780 = vadd.f32 %v752, 1e-06
      %v781 = vadd.f32 %v753, 1e-06
      %v782 = vadd.f32 %v754, 1e-06
      %v783 = vadd.f32 %v755, 1e-06
      %v784 = vadd.f32 %v756, 1e-06
      %v785 = vadd.f32 %v757, 1e-06
      %v786 = vadd.f32 %v758, 1e-06
      %v787 = vadd.f32 %v759, 1e-06
      %v788 = vadd.f32 %v760, 1e-06
      %v789 = vadd.f32 %v761, 1e-06
      %v790 = vadd.f32 %v762, 1e-06
      %v791 = vadd.f32 %v763, 1e-06
      %v792 = vadd.f32 %v764, 1e-06
      %v793 = vadd.f32 %v765, 1e-06
      %v794 = vadd.f32 %v766, 1e-06
      %v795 = vadd.f32 %v767, 1e-06
      %v796 = vrsqrt.pop %v768
      %v797 = vrsqrt.pop %v769
      %v798 = vrsqrt.pop %v770
      %v799 = vrsqrt.pop %v771
      %v800 = vrsqrt.pop %v772
      %v801 = vrsqrt.pop %v773
      %v802 = vrsqrt.pop %v774
      %v803 = vrsqrt.pop %v775
      %v804 = vrsqrt.pop %v776
      %v805 = vrsqrt.pop %v777
      %v806 = vrsqrt.pop %v778
      %v807 = vrsqrt.pop %v779
      %v808 = vrsqrt.pop %v780
      %v809 = vrsqrt.pop %v781
      %v810 = vrsqrt.pop %v782
      %v811 = vrsqrt.pop %v783
      %v812 = vrsqrt.pop %v784
      %v813 = vrsqrt.pop %v785
      %v814 = vrsqrt.pop %v786
      %v815 = vrsqrt.pop %v787
      %v816 = vrsqrt.pop %v788
      %v817 = vrsqrt.pop %v789
      %v818 = vrsqrt.pop %v790
      %v819 = vrsqrt.pop %v791
      %v820 = vrsqrt.pop %v792
      %v821 = vrsqrt.pop %v793
      %v822 = vrsqrt.pop %v794
      %v823 = vrsqrt.pop %v795
      %v824 = vmul.f32 %v593, %v796
      %v825 = vmul.f32 %v594, %v797
      %v826 = vmul.f32 %v595, %v798
      %v827 = vmul.f32 %v596, %v799
      %v828 = vmul.f32 %v597, %v800
      %v829 = vmul.f32 %v598, %v801
      %v830 = vmul.f32 %v599, %v802
      %v831 = vmul.f32 %v600, %v803
      %v832 = vmul.f32 %v601, %v804
      %v833 = vmul.f32 %v602, %v805
      %v834 = vmul.f32 %v603, %v806
      %v835 = vmul.f32 %v604, %v807
      %v836 = vmul.f32 %v605, %v808
      %v837 = vmul.f32 %v606, %v809
      %v838 = vmul.f32 %v607, %v810
      %v839 = vmul.f32 %v608, %v811
      %v840 = vmul.f32 %v609, %v812
      %v841 = vmul.f32 %v610, %v813
      %v842 = vmul.f32 %v611, %v814
      %v843 = vmul.f32 %v612, %v815
      %v844 = vmul.f32 %v613, %v816
      %v845 = vmul.f32 %v614, %v817
      %v846 = vmul.f32 %v615, %v818
      %v847 = vmul.f32 %v616, %v819
      %v848 = vmul.f32 %v617, %v820
      %v849 = vmul.f32 %v618, %v821
      %v850 = vmul.f32 %v619, %v822
      %v851 = vmul.f32 %v620, %v823
      %v852 = vld [vmem:[%s2] sm:$0x1]
      %v854 = vlaneseq
      %v855 = vshrl.u32 %v854, 7
      %v856 = vsub.s32 0, %v855
      %v857 = vrot.slane %v852, %v856
      %v859 = vmul.f32 %v824, %v857
      %v860 = vmul.f32 %v825, %v857
      %v861 = vmul.f32 %v826, %v857
      %v862 = vmul.f32 %v827, %v857
      %v863 = vmul.f32 %v828, %v857
      %v864 = vmul.f32 %v829, %v857
      %v865 = vmul.f32 %v830, %v857
      %v866 = vmul.f32 %v831, %v857
      %v867 = vmul.f32 %v832, %v857
      %v868 = vmul.f32 %v833, %v857
      %v869 = vmul.f32 %v834, %v857
      %v870 = vmul.f32 %v835, %v857
      %v871 = vmul.f32 %v836, %v857
      %v872 = vmul.f32 %v837, %v857
      %v873 = vmul.f32 %v838, %v857
      %v874 = vmul.f32 %v839, %v857
      %v875 = vmul.f32 %v840, %v857
      %v876 = vmul.f32 %v841, %v857
      %v877 = vmul.f32 %v842, %v857
      %v878 = vmul.f32 %v843, %v857
      %v879 = vmul.f32 %v844, %v857
      %v880 = vmul.f32 %v845, %v857
      %v881 = vmul.f32 %v846, %v857
      %v882 = vmul.f32 %v847, %v857
      %v883 = vmul.f32 %v848, %v857
      %v884 = vmul.f32 %v849, %v857
      %v885 = vmul.f32 %v850, %v857
      %v886 = vmul.f32 %v851, %v857
      %v887 = vld [vmem:[%s3] sm:$0x1]
      %v889 = vlaneseq
      %v890 = vshrl.u32 %v889, 7
      %v891 = vsub.s32 0, %v890
      %v892 = vrot.slane %v887, %v891
      %v894 = vadd.f32 %v859, %v892
      %v895 = vadd.f32 %v860, %v892
      %v896 = vadd.f32 %v861, %v892
      %v897 = vadd.f32 %v862, %v892
      %v898 = vadd.f32 %v863, %v892
      %v899 = vadd.f32 %v864, %v892
      %v900 = vadd.f32 %v865, %v892
      %v901 = vadd.f32 %v866, %v892
      %v902 = vadd.f32 %v867, %v892
      %v903 = vadd.f32 %v868, %v892
      %v904 = vadd.f32 %v869, %v892
      %v905 = vadd.f32 %v870, %v892
      %v906 = vadd.f32 %v871, %v892
      %v907 = vadd.f32 %v872, %v892
      %v908 = vadd.f32 %v873, %v892
      %v909 = vadd.f32 %v874, %v892
      %v910 = vadd.f32 %v875, %v892
      %v911 = vadd.f32 %v876, %v892
      %v912 = vadd.f32 %v877, %v892
      %v913 = vadd.f32 %v878, %v892
      %v914 = vadd.f32 %v879, %v892
      %v915 = vadd.f32 %v880, %v892
      %v916 = vadd.f32 %v881, %v892
      %v917 = vadd.f32 %v882, %v892
      %v918 = vadd.f32 %v883, %v892
      %v919 = vadd.f32 %v884, %v892
      %v920 = vadd.f32 %v885, %v892
      %v921 = vadd.f32 %v886, %v892
      %v922 = vpack.c.bf16 %v895, %v894
      %v923 = vpack.c.bf16 %v897, %v896
      %v924 = vpack.c.bf16 %v899, %v898
      %v925 = vpack.c.bf16 %v901, %v900
      %v926 = vpack.c.bf16 %v903, %v902
      %v927 = vpack.c.bf16 %v905, %v904
      %v928 = vpack.c.bf16 %v907, %v906
      %v929 = vpack.c.bf16 %v909, %v908
      %v930 = vpack.c.bf16 %v911, %v910
      %v931 = vpack.c.bf16 %v913, %v912
      %v932 = vpack.c.bf16 %v915, %v914
      %v933 = vpack.c.bf16 %v917, %v916
      %v934 = vpack.c.bf16 %v919, %v918
      %v935 = vpack.c.bf16 %v921, %v920
      %v936 = vld [vmem:[%s4] sm:$0xf]
      %v937 = vld [vmem:[%s4 + $0x4] sm:$0xf]
      %v938 = vld [vmem:[%s4 + $0x8] sm:$0xf]
      %v939 = vld [vmem:[%s4 + $0xc] sm:$0xf]
      %v940 = vld [vmem:[%s4 + $0x10] sm:$0xf]
      %v941 = vld [vmem:[%s4 + $0x14] sm:$0xf]
      %v942 = vld [vmem:[%s4 + $0x18] sm:$0xf]
      %v943 = vld [vmem:[%s4 + $0x1c] sm:$0xf]
      %v944 = vld [vmem:[%s4 + $0x20] sm:$0xf]
      %v945 = vld [vmem:[%s4 + $0x24] sm:$0xf]
      %v946 = vld [vmem:[%s4 + $0x28] sm:$0xf]
      %v947 = vld [vmem:[%s4 + $0x2c] sm:$0xf]
      %v948 = vld [vmem:[%s4 + $0x30] sm:$0xf]
      %v949 = vld [vmem:[%s4 + $0x34] sm:$0xf]
      %v950 = vld [vmem:[%s4 + $0x38] sm:$0xf]
      %v951 = vld [vmem:[%s4 + $0x3c] sm:$0xf]
      %v952 = vld [vmem:[%s5] sm:$0x1]
      %v954 = vlaneseq
      %v955 = vshrl.u32 %v954, 7
      %v956 = vsub.s32 0, %v955
      %v957 = vrot.slane %v952, %v956
      %v975 = vunpack.c.l.b16 %v936
      %v976 = vunpack.c.l.b16 %v937
      %v977 = vunpack.c.l.b16 %v938
      %v978 = vunpack.c.l.b16 %v939
      %v979 = vunpack.c.l.b16 %v940
      %v980 = vunpack.c.l.b16 %v941
      %v981 = vunpack.c.l.b16 %v942
      %v982 = vunpack.c.l.b16 %v943
      %v983 = vunpack.c.l.b16 %v944
      %v984 = vunpack.c.l.b16 %v945
      %v985 = vunpack.c.l.b16 %v946
      %v986 = vunpack.c.l.b16 %v947
      %v987 = vunpack.c.l.b16 %v948
      %v988 = vunpack.c.l.b16 %v949
      %v989 = vunpack.c.l.b16 %v950
      %v990 = vunpack.c.l.b16 %v951
      %v991 = vpack.c.b16 %v976, %v975
      %v992 = vpack.c.b16 %v978, %v977
      %v993 = vpack.c.b16 %v980, %v979
      %v994 = vpack.c.b16 %v982, %v981
      %v995 = vpack.c.b16 %v984, %v983
      %v996 = vpack.c.b16 %v986, %v985
      %v997 = vpack.c.b16 %v988, %v987
      %v998 = vpack.c.b16 %v990, %v989
      %1007 = vmatprep.subr.bf16.mxu0 0
      %1008 = vmatpush1.bf16.msra.mxu0 %v991
      %1009 = vmatprep.subr.bf16.mxu0 0
      %1010 = vmatpush1.bf16.msra.mxu0 %v992
      %1011 = vmatprep.subr.bf16.mxu0 0
      %1012 = vmatpush1.bf16.msra.mxu0 %v993
      %1013 = vmatprep.subr.bf16.mxu0 0
      %1014 = vmatpush1.bf16.msra.mxu0 %v994
      %1015 = vmatprep.subr.bf16.mxu0 0
      %1016 = vmatpush1.bf16.msra.mxu0 %v995
      %1017 = vmatprep.subr.bf16.mxu0 0
      %1018 = vmatpush1.bf16.msra.mxu0 %v996
      %1019 = vmatprep.subr.bf16.mxu0 0
      %1020 = vmatpush1.bf16.msra.mxu0 %v997
      %1021 = vmatprep.subr.bf16.mxu0 0
      %1022 = vmatpush1.bf16.msra.mxu0 %v998
      %1023 = vmatprep.subr.bf16.mxu0 0
      %1024 = vmatpush1.bf16.msra.mxu0 0
      %1025 = vmatprep.subr.bf16.mxu0 0
      %1026 = vmatpush1.bf16.msra.mxu0 0
      %1027 = vmatprep.subr.bf16.mxu0 0
      %1028 = vmatpush1.bf16.msra.mxu0 0
      %1029 = vmatprep.subr.bf16.mxu0 0
      %1030 = vmatpush1.bf16.msra.mxu0 0
      %1031 = vmatprep.subr.bf16.mxu0 0
      %1032 = vmatpush1.bf16.msra.mxu0 0
      %1033 = vmatprep.subr.bf16.mxu0 0
      %1034 = vmatpush1.bf16.msra.mxu0 0
      %1035 = vmatprep.subr.bf16.mxu0 0
      %1036 = vmatpush1.bf16.msra.mxu0 0
      %1037 = vmatprep.subr.bf16.mxu0 0
      %1038 = vmatpush1.bf16.msra.mxu0 0
      %1039 = vmatprep.mubr.bf16.mxu0 0
      %1040 = vmatmul.mubr.bf16.gmra.mrb[0].mxu0 %v922
      %v1041 = vpop.f32.mrb[0].mxu0
      %v1042 = vadd.f32 %v957, %v1041
      %v1043 = vpop.f32.mrb[0].mxu0
      %v1044 = vpop.f32.mrb[0].mxu0
      %v1045 = vadd.f32 %v957, %v1044
      %v1046 = vpop.f32.mrb[0].mxu0
      %1047 = vmatprep.mubr.bf16.mxu0 0
      %1048 = vmatmul.mubr.bf16.gmra.mrb[0].mxu0 %v923
      %v1049 = vpop.f32.mrb[0].mxu0
      %v1050 = vadd.f32 %v957, %v1049
      %v1051 = vpop.f32.mrb[0].mxu0
      %v1052 = vpop.f32.mrb[0].mxu0
      %v1053 = vadd.f32 %v957, %v1052
      %v1054 = vpop.f32.mrb[0].mxu0
      %1055 = vmatprep.mubr.bf16.mxu0 0
      %1056 = vmatmul.mubr.bf16.gmra.mrb[0].mxu0 %v924
      %v1057 = vpop.f32.mrb[0].mxu0
      %v1058 = vadd.f32 %v957, %v1057
      %v1059 = vpop.f32.mrb[0].mxu0
      %v1060 = vpop.f32.mrb[0].mxu0
      %v1061 = vadd.f32 %v957, %v1060
      %v1062 = vpop.f32.mrb[0].mxu0
      %1063 = vmatprep.mubr.bf16.mxu0 0
      %1064 = vmatmul.mubr.bf16.gmra.mrb[0].mxu0 %v925
      %v1065 = vpop.f32.mrb[0].mxu0
      %v1066 = vadd.f32 %v957, %v1065
      %v1067 = vpop.f32.mrb[0].mxu0
      %v1068 = vpop.f32.mrb[0].mxu0
      %v1069 = vadd.f32 %v957, %v1068
      %v1070 = vpop.f32.mrb[0].mxu0
      %1071 = vmatprep.mubr.bf16.mxu0 0
      %1072 = vmatmul.mubr.bf16.gmra.mrb[0].mxu0 %v926
      %v1073 = vpop.f32.mrb[0].mxu0
      %v1074 = vadd.f32 %v957, %v1073
      %v1075 = vpop.f32.mrb[0].mxu0
      %v1076 = vpop.f32.mrb[0].mxu0
      %v1077 = vadd.f32 %v957, %v1076
      %v1078 = vpop.f32.mrb[0].mxu0
      %1079 = vmatprep.mubr.bf16.mxu0 0
      %1080 = vmatmul.mubr.bf16.gmra.mrb[0].mxu0 %v927
      %v1081 = vpop.f32.mrb[0].mxu0
      %v1082 = vadd.f32 %v957, %v1081
      %v1083 = vpop.f32.mrb[0].mxu0
      %v1084 = vpop.f32.mrb[0].mxu0
      %v1085 = vadd.f32 %v957, %v1084
      %v1086 = vpop.f32.mrb[0].mxu0
      %1087 = vmatprep.mubr.bf16.mxu0 0
      %1088 = vmatmul.mubr.bf16.gmra.mrb[0].mxu0 %v928
      %v1089 = vpop.f32.mrb[0].mxu0
      %v1090 = vadd.f32 %v957, %v1089
      %v1091 = vpop.f32.mrb[0].mxu0
      %v1092 = vpop.f32.mrb[0].mxu0
      %v1093 = vadd.f32 %v957, %v1092
      %v1094 = vpop.f32.mrb[0].mxu0
      %1095 = vmatprep.mubr.bf16.mxu0 0
      %1096 = vmatmul.mubr.bf16.gmra.mrb[0].mxu0 %v929
      %v1097 = vpop.f32.mrb[0].mxu0
      %v1098 = vadd.f32 %v957, %v1097
      %v1099 = vpop.f32.mrb[0].mxu0
      %v1100 = vpop.f32.mrb[0].mxu0
      %v1101 = vadd.f32 %v957, %v1100
      %v1102 = vpop.f32.mrb[0].mxu0
      %1103 = vmatprep.mubr.bf16.mxu0 0
      %1104 = vmatmul.mubr.bf16.gmra.mrb[0].mxu0 %v930
      %v1105 = vpop.f32.mrb[0].mxu0
      %v1106 = vadd.f32 %v957, %v1105
      %v1107 = vpop.f32.mrb[0].mxu0
      %v1108 = vpop.f32.mrb[0].mxu0
      %v1109 = vadd.f32 %v957, %v1108
      %v1110 = vpop.f32.mrb[0].mxu0
      %1111 = vmatprep.mubr.bf16.mxu0 0
      %1112 = vmatmul.mubr.bf16.gmra.mrb[0].mxu0 %v931
      %v1113 = vpop.f32.mrb[0].mxu0
      %v1114 = vadd.f32 %v957, %v1113
      %v1115 = vpop.f32.mrb[0].mxu0
      %v1116 = vpop.f32.mrb[0].mxu0
      %v1117 = vadd.f32 %v957, %v1116
      %v1118 = vpop.f32.mrb[0].mxu0
      %1119 = vmatprep.mubr.bf16.mxu0 0
      %1120 = vmatmul.mubr.bf16.gmra.mrb[0].mxu0 %v932
      %v1121 = vpop.f32.mrb[0].mxu0
      %v1122 = vadd.f32 %v957, %v1121
      %v1123 = vpop.f32.mrb[0].mxu0
      %v1124 = vpop.f32.mrb[0].mxu0
      %v1125 = vadd.f32 %v957, %v1124
      %v1126 = vpop.f32.mrb[0].mxu0
      %1127 = vmatprep.mubr.bf16.mxu0 0
      %1128 = vmatmul.mubr.bf16.gmra.mrb[0].mxu0 %v933
      %v1129 = vpop.f32.mrb[0].mxu0
      %v1130 = vadd.f32 %v957, %v1129
      %v1131 = vpop.f32.mrb[0].mxu0
      %v1132 = vpop.f32.mrb[0].mxu0
      %v1133 = vadd.f32 %v957, %v1132
      %v1134 = vpop.f32.mrb[0].mxu0
      %1135 = vmatprep.mubr.bf16.mxu0 0
      %1136 = vmatmul.mubr.bf16.gmra.mrb[0].mxu0 %v934
      %v1137 = vpop.f32.mrb[0].mxu0
      %v1138 = vadd.f32 %v957, %v1137
      %v1139 = vpop.f32.mrb[0].mxu0
      %v1140 = vpop.f32.mrb[0].mxu0
      %v1141 = vadd.f32 %v957, %v1140
      %v1142 = vpop.f32.mrb[0].mxu0
      %1143 = vmatprep.mubr.bf16.mxu0 0
      %1144 = vmatmul.mubr.bf16.gmra.mrb[0].mxu0 %v935
      %v1145 = vpop.f32.mrb[0].mxu0
      %v1146 = vadd.f32 %v957, %v1145
      %v1147 = vpop.f32.mrb[0].mxu0
      %v1148 = vpop.f32.mrb[0].mxu0
      %v1149 = vadd.f32 %v957, %v1148
      %v1150 = vpop.f32.mrb[0].mxu0
      %1151 = vdwg.mxu0
      %v1152 = vld [vmem:[%s6] sm:$0xf]
      %v1153 = vld [vmem:[%s6 + $0x4] sm:$0xf]
      %v1154 = vld [vmem:[%s6 + $0x8] sm:$0xf]
      %v1155 = vld [vmem:[%s6 + $0xc] sm:$0xf]
      %v1156 = vld [vmem:[%s6 + $0x10] sm:$0xf]
      %v1157 = vld [vmem:[%s6 + $0x14] sm:$0xf]
      %v1158 = vld [vmem:[%s6 + $0x18] sm:$0xf]
      %v1159 = vld [vmem:[%s6 + $0x1c] sm:$0xf]
      %v1160 = vld [vmem:[%s6 + $0x20] sm:$0xf]
      %v1161 = vld [vmem:[%s6 + $0x24] sm:$0xf]
      %v1162 = vld [vmem:[%s6 + $0x28] sm:$0xf]
      %v1163 = vld [vmem:[%s6 + $0x2c] sm:$0xf]
      %v1164 = vld [vmem:[%s6 + $0x30] sm:$0xf]
      %v1165 = vld [vmem:[%s6 + $0x34] sm:$0xf]
      %v1166 = vld [vmem:[%s6 + $0x38] sm:$0xf]
      %v1167 = vld [vmem:[%s6 + $0x3c] sm:$0xf]
      %v1168 = vld [vmem:[%s7] sm:$0x1]
      %v1170 = vlaneseq
      %v1171 = vshrl.u32 %v1170, 7
      %v1172 = vsub.s32 0, %v1171
      %v1173 = vrot.slane %v1168, %v1172
      %v1191 = vunpack.c.l.b16 %v1152
      %v1192 = vunpack.c.l.b16 %v1153
      %v1193 = vunpack.c.l.b16 %v1154
      %v1194 = vunpack.c.l.b16 %v1155
      %v1195 = vunpack.c.l.b16 %v1156
      %v1196 = vunpack.c.l.b16 %v1157
      %v1197 = vunpack.c.l.b16 %v1158
      %v1198 = vunpack.c.l.b16 %v1159
      %v1199 = vunpack.c.l.b16 %v1160
      %v1200 = vunpack.c.l.b16 %v1161
      %v1201 = vunpack.c.l.b16 %v1162
      %v1202 = vunpack.c.l.b16 %v1163
      %v1203 = vunpack.c.l.b16 %v1164
      %v1204 = vunpack.c.l.b16 %v1165
      %v1205 = vunpack.c.l.b16 %v1166
      %v1206 = vunpack.c.l.b16 %v1167
      %v1207 = vpack.c.b16 %v1192, %v1191
      %v1208 = vpack.c.b16 %v1194, %v1193
      %v1209 = vpack.c.b16 %v1196, %v1195
      %v1210 = vpack.c.b16 %v1198, %v1197
      %v1211 = vpack.c.b16 %v1200, %v1199
      %v1212 = vpack.c.b16 %v1202, %v1201
      %v1213 = vpack.c.b16 %v1204, %v1203
      %v1214 = vpack.c.b16 %v1206, %v1205
      %1223 = vmatprep.subr.bf16.mxu0 0
      %1224 = vmatpush1.bf16.msra.mxu0 %v1207
      %1225 = vmatprep.subr.bf16.mxu0 0
      %1226 = vmatpush1.bf16.msra.mxu0 %v1208
      %1227 = vmatprep.subr.bf16.mxu0 0
      %1228 = vmatpush1.bf16.msra.mxu0 %v1209
      %1229 = vmatprep.subr.bf16.mxu0 0
      %1230 = vmatpush1.bf16.msra.mxu0 %v1210
      %1231 = vmatprep.subr.bf16.mxu0 0
      %1232 = vmatpush1.bf16.msra.mxu0 %v1211
      %1233 = vmatprep.subr.bf16.mxu0 0
      %1234 = vmatpush1.bf16.msra.mxu0 %v1212
      %1235 = vmatprep.subr.bf16.mxu0 0
      %1236 = vmatpush1.bf16.msra.mxu0 %v1213
      %1237 = vmatprep.subr.bf16.mxu0 0
      %1238 = vmatpush1.bf16.msra.mxu0 %v1214
      %1239 = vmatprep.subr.bf16.mxu0 0
      %1240 = vmatpush1.bf16.msra.mxu0 0
      %1241 = vmatprep.subr.bf16.mxu0 0
      %1242 = vmatpush1.bf16.msra.mxu0 0
      %1243 = vmatprep.subr.bf16.mxu0 0
      %1244 = vmatpush1.bf16.msra.mxu0 0
      %1245 = vmatprep.subr.bf16.mxu0 0
      %1246 = vmatpush1.bf16.msra.mxu0 0
      %1247 = vmatprep.subr.bf16.mxu0 0
      %1248 = vmatpush1.bf16.msra.mxu0 0
      %1249 = vmatprep.subr.bf16.mxu0 0
      %1250 = vmatpush1.bf16.msra.mxu0 0
      %1251 = vmatprep.subr.bf16.mxu0 0
      %1252 = vmatpush1.bf16.msra.mxu0 0
      %1253 = vmatprep.subr.bf16.mxu0 0
      %1254 = vmatpush1.bf16.msra.mxu0 0
      %1255 = vmatprep.mubr.bf16.mxu0 0
      %1256 = vmatmul.mubr.bf16.gmra.mrb[0].mxu0 %v925
      %v1257 = vpop.f32.mrb[0].mxu0
      %v1258 = vadd.f32 %v1173, %v1257
      %v1259 = vpop.f32.mrb[0].mxu0
      %v1260 = vpop.f32.mrb[0].mxu0
      %v1261 = vadd.f32 %v1173, %v1260
      %v1262 = vpop.f32.mrb[0].mxu0
      %1263 = vmatprep.mubr.bf16.mxu0 0
      %1264 = vmatmul.mubr.bf16.gmra.mrb[0].mxu0 %v926
      %v1265 = vpop.f32.mrb[0].mxu0
      %v1266 = vadd.f32 %v1173, %v1265
      %v1267 = vpop.f32.mrb[0].mxu0
      %v1268 = vpop.f32.mrb[0].mxu0
      %v1269 = vadd.f32 %v1173, %v1268
      %v1270 = vpop.f32.mrb[0].mxu0
      %1271 = vmatprep.mubr.bf16.mxu0 0
      %1272 = vmatmul.mubr.bf16.gmra.mrb[0].mxu0 %v927
      %v1273 = vpop.f32.mrb[0].mxu0
      %v1274 = vadd.f32 %v1173, %v1273
      %v1275 = vpop.f32.mrb[0].mxu0
      %v1276 = vpop.f32.mrb[0].mxu0
      %v1277 = vadd.f32 %v1173, %v1276
      %v1278 = vpop.f32.mrb[0].mxu0
      %1279 = vmatprep.mubr.bf16.mxu0 0
      %1280 = vmatmul.mubr.bf16.gmra.mrb[0].mxu0 %v928
      %v1281 = vpop.f32.mrb[0].mxu0
      %v1282 = vadd.f32 %v1173, %v1281
      %v1283 = vpop.f32.mrb[0].mxu0
      %v1284 = vpop.f32.mrb[0].mxu0
      %v1285 = vadd.f32 %v1173, %v1284
      %v1286 = vpop.f32.mrb[0].mxu0
      %1287 = vmatprep.mubr.bf16.mxu0 0
      %1288 = vmatmul.mubr.bf16.gmra.mrb[0].mxu0 %v929
      %v1289 = vpop.f32.mrb[0].mxu0
      %v1290 = vadd.f32 %v1173, %v1289
      %v1291 = vpop.f32.mrb[0].mxu0
      %v1292 = vpop.f32.mrb[0].mxu0
      %v1293 = vadd.f32 %v1173, %v1292
      %v1294 = vpop.f32.mrb[0].mxu0
      %1295 = vmatprep.mubr.bf16.mxu0 0
      %1296 = vmatmul.mubr.bf16.gmra.mrb[0].mxu0 %v930
      %v1297 = vpop.f32.mrb[0].mxu0
      %v1298 = vadd.f32 %v1173, %v1297
      %v1299 = vpop.f32.mrb[0].mxu0
      %v1300 = vpop.f32.mrb[0].mxu0
      %v1301 = vadd.f32 %v1173, %v1300
      %v1302 = vpop.f32.mrb[0].mxu0
      %1303 = vmatprep.mubr.bf16.mxu0 0
      %1304 = vmatmul.mubr.bf16.gmra.mrb[0].mxu0 %v931
      %v1305 = vpop.f32.mrb[0].mxu0
      %v1306 = vadd.f32 %v1173, %v1305
      %v1307 = vpop.f32.mrb[0].mxu0
      %v1308 = vpop.f32.mrb[0].mxu0
      %v1309 = vadd.f32 %v1173, %v1308
      %v1310 = vpop.f32.mrb[0].mxu0
      %1311 = vmatprep.mubr.bf16.mxu0 0
      %1312 = vmatmul.mubr.bf16.gmra.mrb[0].mxu0 %v932
      %v1313 = vpop.f32.mrb[0].mxu0
      %v1314 = vadd.f32 %v1173, %v1313
      %v1315 = vpop.f32.mrb[0].mxu0
      %v1316 = vpop.f32.mrb[0].mxu0
      %v1317 = vadd.f32 %v1173, %v1316
      %v1318 = vpop.f32.mrb[0].mxu0
      %1319 = vdwg.mxu0
      %1320 = vst [vmem:[#allocation2] sm:$0xff] 0.0
      %1321 = vst [vmem:[#allocation2 + $0x20] sm:$0xff] 0.0
      %1322 = vst [vmem:[#allocation2 + $0x40] sm:$0xff] 0.0
      %1323 = vst [vmem:[#allocation2 + $0x60] sm:$0xff] 0.0
      %1324 = vst [vmem:[#allocation2 + $0x80] sm:$0xff] 0.0
      %1325 = vst [vmem:[#allocation2 + $0xa0] sm:$0xff] 0.0
      %1326 = vst [vmem:[#allocation2 + $0xc0] sm:$0xff] 0.0
      %1327 = vst [vmem:[#allocation2 + $0xe0] sm:$0xff] 0.0
      %1328 = vst [vmem:[#allocation2 + $0x100] sm:$0xff] 0.0
      %1329 = vst [vmem:[#allocation2 + $0x120] sm:$0xff] 0.0
      %1330 = vst [vmem:[#allocation2 + $0x140] sm:$0xff] 0.0
      %1331 = vst [vmem:[#allocation2 + $0x160] sm:$0xff] 0.0
      %1332 = vst [vmem:[#allocation2 + $0x180] sm:$0xff] 0.0
      %1333 = vst [vmem:[#allocation2 + $0x1a0] sm:$0xff] 0.0
      %1334 = vst [vmem:[#allocation2 + $0x18] sm:$0xff] 0.0
      %1335 = vst [vmem:[#allocation2 + $0x38] sm:$0xff] 0.0
      %1336 = vst [vmem:[#allocation2 + $0x58] sm:$0xff] 0.0
      %1337 = vst [vmem:[#allocation2 + $0x78] sm:$0xff] 0.0
      %1338 = vst [vmem:[#allocation2 + $0x98] sm:$0xff] 0.0
      %1339 = vst [vmem:[#allocation2 + $0xb8] sm:$0xff] 0.0
      %1340 = vst [vmem:[#allocation2 + $0xd8] sm:$0xff] 0.0
      %1341 = vst [vmem:[#allocation2 + $0xf8] sm:$0xff] 0.0
      %1342 = vst [vmem:[#allocation2 + $0x118] sm:$0xff] 0.0
      %1343 = vst [vmem:[#allocation2 + $0x138] sm:$0xff] 0.0
      %1344 = vst [vmem:[#allocation2 + $0x158] sm:$0xff] 0.0
      %1345 = vst [vmem:[#allocation2 + $0x178] sm:$0xff] 0.0
      %1346 = vst [vmem:[#allocation2 + $0x198] sm:$0xff] 0.0
      %1347 = vst [vmem:[#allocation2 + $0x1b8] sm:$0xff] 0.0
      %1348 = vst [vmem:[#allocation2 + $0x8] sm:$0xff] %v1042
      %1349 = vst [vmem:[#allocation2 + $0x10] sm:$0xff] %v1045
      %1350 = vst [vmem:[#allocation2 + $0x28] sm:$0xff] %v1050
      %1351 = vst [vmem:[#allocation2 + $0x30] sm:$0xff] %v1053
      %1352 = vst [vmem:[#allocation2 + $0x48] sm:$0xff] %v1058
      %1353 = vst [vmem:[#allocation2 + $0x50] sm:$0xff] %v1061
      %1354 = vst [vmem:[#allocation2 + $0x68] sm:$0xff] %v1066
      %1355 = vst [vmem:[#allocation2 + $0x70] sm:$0xff] %v1069
      %1356 = vst [vmem:[#allocation2 + $0x88] sm:$0xff] %v1074
      %1357 = vst [vmem:[#allocation2 + $0x90] sm:$0xff] %v1077
      %1358 = vst [vmem:[#allocation2 + $0xa8] sm:$0xff] %v1082
      %1359 = vst [vmem:[#allocation2 + $0xb0] sm:$0xff] %v1085
      %1360 = vst [vmem:[#allocation2 + $0xc8] sm:$0xff] %v1090
      %1361 = vst [vmem:[#allocation2 + $0xd0] sm:$0xff] %v1093
      %1362 = vst [vmem:[#allocation2 + $0xe8] sm:$0xff] %v1098
      %1363 = vst [vmem:[#allocation2 + $0xf0] sm:$0xff] %v1101
      %1364 = vst [vmem:[#allocation2 + $0x108] sm:$0xff] %v1106
      %1365 = vst [vmem:[#allocation2 + $0x110] sm:$0xff] %v1109
      %1366 = vst [vmem:[#allocation2 + $0x128] sm:$0xff] %v1114
      %1367 = vst [vmem:[#allocation2 + $0x130] sm:$0xff] %v1117
      %1368 = vst [vmem:[#allocation2 + $0x148] sm:$0xff] %v1122
      %1369 = vst [vmem:[#allocation2 + $0x150] sm:$0xff] %v1125
      %1370 = vst [vmem:[#allocation2 + $0x168] sm:$0xff] %v1130
      %1371 = vst [vmem:[#allocation2 + $0x170] sm:$0xff] %v1133
      %1372 = vst [vmem:[#allocation2 + $0x188] sm:$0xff] %v1138
      %1373 = vst [vmem:[#allocation2 + $0x190] sm:$0xff] %v1141
      %1374 = vst [vmem:[#allocation2 + $0x1a8] sm:$0xff] %v1146
      %1375 = vst [vmem:[#allocation2 + $0x1b0] sm:$0xff] %v1149
      %p1376 = scmp.eq.s32.totalorder %s29, 0
      // Predicated region
      $region73: #{gsau_forward.1} parent=71 // pred_check
        %p1377 = pneg %p1376
      $region74: #{gsau_forward.1} parent=71 // pred_check_branch
        %1379 = sbr.rel (%p1377) target = $region76
      $region75: #{gsau_forward.1} parent=71 // pred_region
        %1380 = vst [vmem:[#allocation2 + $0x8] sm:$0xff] 0.0
        %1381 = vst [vmem:[#allocation2 + $0x10] sm:$0xff] 0.0
        %1382 = vst [vmem:[#allocation2 + $0x28] sm:$0xff] 0.0
        %1383 = vst [vmem:[#allocation2 + $0x30] sm:$0xff] 0.0
        %1384 = vst [vmem:[#allocation2 + $0x48] sm:$0xff] 0.0
        %1385 = vst [vmem:[#allocation2 + $0x50] sm:$0xff] 0.0
      $region76: #{gsau_forward.1} parent=71 // pred_fallthru
        _
      %p1386 = scmp.eq.s32.totalorder %s29, 1
      // Predicated region
      $region77: #{gsau_forward.1} parent=71 // pred_check
        %p1387 = pneg %p1386
      $region78: #{gsau_forward.1} parent=71 // pred_check_branch
        %1389 = sbr.rel (%p1387) target = $region80
      $region79: #{gsau_forward.1} parent=71 // pred_region
        %s1390 = scalar_lea.vmem [#allocation2], 352
        %1391 = vst [vmem:[%s1390 + $0x8] sm:$0xff] 0.0
        %1392 = vst [vmem:[%s1390 + $0x10] sm:$0xff] 0.0
        %1393 = vst [vmem:[%s1390 + $0x28] sm:$0xff] 0.0
        %1394 = vst [vmem:[%s1390 + $0x30] sm:$0xff] 0.0
        %1395 = vst [vmem:[%s1390 + $0x48] sm:$0xff] 0.0
        %1396 = vst [vmem:[%s1390 + $0x50] sm:$0xff] 0.0
      $region80: #{gsau_forward.1} parent=71 // pred_fallthru
        _
      %v1397 = vld [vmem:[%s8] sm:$0xff]
      %v1398 = vld [vmem:[%s8 + $0x8] sm:$0xff]
      %v1399 = vld [vmem:[%s8 + $0x10] sm:$0xff]
      %v1400 = vld [vmem:[%s8 + $0x18] sm:$0xff]
      %v1401 = vld [vmem:[%s8 + $0x20] sm:$0xff]
      %v1402 = vld [vmem:[%s8 + $0x28] sm:$0xff]
      %v1403 = vld [vmem:[%s8 + $0x30] sm:$0x1]
      %v1404 = vld [vmem:[#allocation2 + $0x5] sm:$0xff]
      %v1405 = vld [vmem:[#allocation2 + $0xd] sm:$0xff]
      %v1406 = vld [vmem:[#allocation2 + $0x25] sm:$0xff]
      %v1407 = vld [vmem:[#allocation2 + $0x2d] sm:$0xff]
      %v1408 = vld [vmem:[#allocation2 + $0x45] sm:$0xff]
      %v1409 = vld [vmem:[#allocation2 + $0x4d] sm:$0xff]
      %v1410 = vld [vmem:[#allocation2 + $0x65] sm:$0xff]
      %v1411 = vld [vmem:[#allocation2 + $0x6d] sm:$0xff]
      %v1412 = vld [vmem:[#allocation2 + $0x85] sm:$0xff]
      %v1413 = vld [vmem:[#allocation2 + $0x8d] sm:$0xff]
      %v1414 = vld [vmem:[#allocation2 + $0xa5] sm:$0xff]
      %v1415 = vld [vmem:[#allocation2 + $0xad] sm:$0xff]
      %v1416 = vld [vmem:[#allocation2 + $0xc5] sm:$0xff]
      %v1417 = vld [vmem:[#allocation2 + $0xcd] sm:$0xff]
      %v1418 = vld [vmem:[#allocation2 + $0xe5] sm:$0xff]
      %v1419 = vld [vmem:[#allocation2 + $0xed] sm:$0xff]
      %v1420 = vld [vmem:[#allocation2 + $0x105] sm:$0xff]
      %v1421 = vld [vmem:[#allocation2 + $0x10d] sm:$0xff]
      %v1422 = vld [vmem:[#allocation2 + $0x125] sm:$0xff]
      %v1423 = vld [vmem:[#allocation2 + $0x12d] sm:$0xff]
      %v1424 = vld [vmem:[#allocation2 + $0x145] sm:$0xff]
      %v1425 = vld [vmem:[#allocation2 + $0x14d] sm:$0xff]
      %v1426 = vld [vmem:[#allocation2 + $0x165] sm:$0xff]
      %v1427 = vld [vmem:[#allocation2 + $0x16d] sm:$0xff]
      %v1428 = vld [vmem:[#allocation2 + $0x185] sm:$0xff]
      %v1429 = vld [vmem:[#allocation2 + $0x18d] sm:$0xff]
      %v1430 = vld [vmem:[#allocation2 + $0x1a5] sm:$0xff]
      %v1431 = vld [vmem:[#allocation2 + $0x1ad] sm:$0xff]
      %v1432 = vlaneseq
      %v1433 = vshrl.u32 %v1432, 7
      %v1434 = vsub.s32 0, %v1433
      %v1435 = vrot.slane %v1397, %v1434
      %v1436 = vmul.f32 %v1404, %v1435
      %v1437 = vmul.f32 %v1405, %v1435
      %v1438 = vmul.f32 %v1406, %v1435
      %v1439 = vmul.f32 %v1407, %v1435
      %v1440 = vmul.f32 %v1408, %v1435
      %v1441 = vmul.f32 %v1409, %v1435
      %v1442 = vmul.f32 %v1410, %v1435
      %v1443 = vmul.f32 %v1411, %v1435
      %v1444 = vmul.f32 %v1412, %v1435
      %v1445 = vmul.f32 %v1413, %v1435
      %v1446 = vmul.f32 %v1414, %v1435
      %v1447 = vmul.f32 %v1415, %v1435
      %v1448 = vmul.f32 %v1416, %v1435
      %v1449 = vmul.f32 %v1417, %v1435
      %v1450 = vmul.f32 %v1418, %v1435
      %v1451 = vmul.f32 %v1419, %v1435
      %v1452 = vlaneseq
      %v1453 = vshrl.u32 %v1452, 7
      %v1454 = vsub.s32 7, %v1453
      %v1455 = vrot.slane %v1397, %v1454
      %v1456 = vmul.f32 %v1406, %v1455
      %v1457 = vmul.f32 %v1407, %v1455
      %v1458 = vmul.f32 %v1408, %v1455
      %v1459 = vmul.f32 %v1409, %v1455
      %v1460 = vmul.f32 %v1410, %v1455
      %v1461 = vmul.f32 %v1411, %v1455
      %v1462 = vmul.f32 %v1412, %v1455
      %v1463 = vmul.f32 %v1413, %v1455
      %v1464 = vmul.f32 %v1414, %v1455
      %v1465 = vmul.f32 %v1415, %v1455
      %v1466 = vmul.f32 %v1416, %v1455
      %v1467 = vmul.f32 %v1417, %v1455
      %v1468 = vmul.f32 %v1418, %v1455
      %v1469 = vmul.f32 %v1419, %v1455
      %v1470 = vmul.f32 %v1420, %v1455
      %v1471 = vmul.f32 %v1421, %v1455
      %v1472 = vadd.f32 %v1436, %v1456
      %v1473 = vadd.f32 %v1437, %v1457
      %v1474 = vadd.f32 %v1438, %v1458
      %v1475 = vadd.f32 %v1439, %v1459
      %v1476 = vadd.f32 %v1440, %v1460
      %v1477 = vadd.f32 %v1441, %v1461
      %v1478 = vadd.f32 %v1442, %v1462
      %v1479 = vadd.f32 %v1443, %v1463
      %v1480 = vadd.f32 %v1444, %v1464
      %v1481 = vadd.f32 %v1445, %v1465
      %v1482 = vadd.f32 %v1446, %v1466
      %v1483 = vadd.f32 %v1447, %v1467
      %v1484 = vadd.f32 %v1448, %v1468
      %v1485 = vadd.f32 %v1449, %v1469
      %v1486 = vadd.f32 %v1450, %v1470
      %v1487 = vadd.f32 %v1451, %v1471
      %v1488 = vlaneseq
      %v1489 = vshrl.u32 %v1488, 7
      %v1490 = vsub.s32 6, %v1489
      %v1491 = vrot.slane %v1398, %v1490
      %v1492 = vmul.f32 %v1408, %v1491
      %v1493 = vmul.f32 %v1409, %v1491
      %v1494 = vmul.f32 %v1410, %v1491
      %v1495 = vmul.f32 %v1411, %v1491
      %v1496 = vmul.f32 %v1412, %v1491
      %v1497 = vmul.f32 %v1413, %v1491
      %v1498 = vmul.f32 %v1414, %v1491
      %v1499 = vmul.f32 %v1415, %v1491
      %v1500 = vmul.f32 %v1416, %v1491
      %v1501 = vmul.f32 %v1417, %v1491
      %v1502 = vmul.f32 %v1418, %v1491
      %v1503 = vmul.f32 %v1419, %v1491
      %v1504 = vmul.f32 %v1420, %v1491
      %v1505 = vmul.f32 %v1421, %v1491
      %v1506 = vmul.f32 %v1422, %v1491
      %v1507 = vmul.f32 %v1423, %v1491
      %v1508 = vadd.f32 %v1472, %v1492
      %v1509 = vadd.f32 %v1473, %v1493
      %v1510 = vadd.f32 %v1474, %v1494
      %v1511 = vadd.f32 %v1475, %v1495
      %v1512 = vadd.f32 %v1476, %v1496
      %v1513 = vadd.f32 %v1477, %v1497
      %v1514 = vadd.f32 %v1478, %v1498
      %v1515 = vadd.f32 %v1479, %v1499
      %v1516 = vadd.f32 %v1480, %v1500
      %v1517 = vadd.f32 %v1481, %v1501
      %v1518 = vadd.f32 %v1482, %v1502
      %v1519 = vadd.f32 %v1483, %v1503
      %v1520 = vadd.f32 %v1484, %v1504
      %v1521 = vadd.f32 %v1485, %v1505
      %v1522 = vadd.f32 %v1486, %v1506
      %v1523 = vadd.f32 %v1487, %v1507
      %v1524 = vlaneseq
      %v1525 = vshrl.u32 %v1524, 7
      %v1526 = vsub.s32 5, %v1525
      %v1527 = vrot.slane %v1399, %v1526
      %v1528 = vmul.f32 %v1410, %v1527
      %v1529 = vmul.f32 %v1411, %v1527
      %v1530 = vmul.f32 %v1412, %v1527
      %v1531 = vmul.f32 %v1413, %v1527
      %v1532 = vmul.f32 %v1414, %v1527
      %v1533 = vmul.f32 %v1415, %v1527
      %v1534 = vmul.f32 %v1416, %v1527
      %v1535 = vmul.f32 %v1417, %v1527
      %v1536 = vmul.f32 %v1418, %v1527
      %v1537 = vmul.f32 %v1419, %v1527
      %v1538 = vmul.f32 %v1420, %v1527
      %v1539 = vmul.f32 %v1421, %v1527
      %v1540 = vmul.f32 %v1422, %v1527
      %v1541 = vmul.f32 %v1423, %v1527
      %v1542 = vmul.f32 %v1424, %v1527
      %v1543 = vmul.f32 %v1425, %v1527
      %v1544 = vadd.f32 %v1508, %v1528
      %v1545 = vadd.f32 %v1509, %v1529
      %v1546 = vadd.f32 %v1510, %v1530
      %v1547 = vadd.f32 %v1511, %v1531
      %v1548 = vadd.f32 %v1512, %v1532
      %v1549 = vadd.f32 %v1513, %v1533
      %v1550 = vadd.f32 %v1514, %v1534
      %v1551 = vadd.f32 %v1515, %v1535
      %v1552 = vadd.f32 %v1516, %v1536
      %v1553 = vadd.f32 %v1517, %v1537
      %v1554 = vadd.f32 %v1518, %v1538
      %v1555 = vadd.f32 %v1519, %v1539
      %v1556 = vadd.f32 %v1520, %v1540
      %v1557 = vadd.f32 %v1521, %v1541
      %v1558 = vadd.f32 %v1522, %v1542
      %v1559 = vadd.f32 %v1523, %v1543
      %v1560 = vlaneseq
      %v1561 = vshrl.u32 %v1560, 7
      %v1562 = vsub.s32 4, %v1561
      %v1563 = vrot.slane %v1400, %v1562
      %v1564 = vmul.f32 %v1412, %v1563
      %v1565 = vmul.f32 %v1413, %v1563
      %v1566 = vmul.f32 %v1414, %v1563
      %v1567 = vmul.f32 %v1415, %v1563
      %v1568 = vmul.f32 %v1416, %v1563
      %v1569 = vmul.f32 %v1417, %v1563
      %v1570 = vmul.f32 %v1418, %v1563
      %v1571 = vmul.f32 %v1419, %v1563
      %v1572 = vmul.f32 %v1420, %v1563
      %v1573 = vmul.f32 %v1421, %v1563
      %v1574 = vmul.f32 %v1422, %v1563
      %v1575 = vmul.f32 %v1423, %v1563
      %v1576 = vmul.f32 %v1424, %v1563
      %v1577 = vmul.f32 %v1425, %v1563
      %v1578 = vmul.f32 %v1426, %v1563
      %v1579 = vmul.f32 %v1427, %v1563
      %v1580 = vadd.f32 %v1544, %v1564
      %v1581 = vadd.f32 %v1545, %v1565
      %v1582 = vadd.f32 %v1546, %v1566
      %v1583 = vadd.f32 %v1547, %v1567
      %v1584 = vadd.f32 %v1548, %v1568
      %v1585 = vadd.f32 %v1549, %v1569
      %v1586 = vadd.f32 %v1550, %v1570
      %v1587 = vadd.f32 %v1551, %v1571
      %v1588 = vadd.f32 %v1552, %v1572
      %v1589 = vadd.f32 %v1553, %v1573
      %v1590 = vadd.f32 %v1554, %v1574
      %v1591 = vadd.f32 %v1555, %v1575
      %v1592 = vadd.f32 %v1556, %v1576
      %v1593 = vadd.f32 %v1557, %v1577
      %v1594 = vadd.f32 %v1558, %v1578
      %v1595 = vadd.f32 %v1559, %v1579
      %v1596 = vlaneseq
      %v1597 = vshrl.u32 %v1596, 7
      %v1598 = vsub.s32 3, %v1597
      %v1599 = vrot.slane %v1401, %v1598
      %v1600 = vmul.f32 %v1414, %v1599
      %v1601 = vmul.f32 %v1415, %v1599
      %v1602 = vmul.f32 %v1416, %v1599
      %v1603 = vmul.f32 %v1417, %v1599
      %v1604 = vmul.f32 %v1418, %v1599
      %v1605 = vmul.f32 %v1419, %v1599
      %v1606 = vmul.f32 %v1420, %v1599
      %v1607 = vmul.f32 %v1421, %v1599
      %v1608 = vmul.f32 %v1422, %v1599
      %v1609 = vmul.f32 %v1423, %v1599
      %v1610 = vmul.f32 %v1424, %v1599
      %v1611 = vmul.f32 %v1425, %v1599
      %v1612 = vmul.f32 %v1426, %v1599
      %v1613 = vmul.f32 %v1427, %v1599
      %v1614 = vmul.f32 %v1428, %v1599
      %v1615 = vmul.f32 %v1429, %v1599
      %v1616 = vadd.f32 %v1580, %v1600
      %v1617 = vadd.f32 %v1581, %v1601
      %v1618 = vadd.f32 %v1582, %v1602
      %v1619 = vadd.f32 %v1583, %v1603
      %v1620 = vadd.f32 %v1584, %v1604
      %v1621 = vadd.f32 %v1585, %v1605
      %v1622 = vadd.f32 %v1586, %v1606
      %v1623 = vadd.f32 %v1587, %v1607
      %v1624 = vadd.f32 %v1588, %v1608
      %v1625 = vadd.f32 %v1589, %v1609
      %v1626 = vadd.f32 %v1590, %v1610
      %v1627 = vadd.f32 %v1591, %v1611
      %v1628 = vadd.f32 %v1592, %v1612
      %v1629 = vadd.f32 %v1593, %v1613
      %v1630 = vadd.f32 %v1594, %v1614
      %v1631 = vadd.f32 %v1595, %v1615
      %v1632 = vlaneseq
      %v1633 = vshrl.u32 %v1632, 7
      %v1634 = vsub.s32 2, %v1633
      %v1635 = vrot.slane %v1402, %v1634
      %v1636 = vmul.f32 %v1416, %v1635
      %v1637 = vmul.f32 %v1417, %v1635
      %v1638 = vmul.f32 %v1418, %v1635
      %v1639 = vmul.f32 %v1419, %v1635
      %v1640 = vmul.f32 %v1420, %v1635
      %v1641 = vmul.f32 %v1421, %v1635
      %v1642 = vmul.f32 %v1422, %v1635
      %v1643 = vmul.f32 %v1423, %v1635
      %v1644 = vmul.f32 %v1424, %v1635
      %v1645 = vmul.f32 %v1425, %v1635
      %v1646 = vmul.f32 %v1426, %v1635
      %v1647 = vmul.f32 %v1427, %v1635
      %v1648 = vmul.f32 %v1428, %v1635
      %v1649 = vmul.f32 %v1429, %v1635
      %v1650 = vmul.f32 %v1430, %v1635
      %v1651 = vmul.f32 %v1431, %v1635
      %v1652 = vadd.f32 %v1616, %v1636
      %v1653 = vadd.f32 %v1617, %v1637
      %v1654 = vadd.f32 %v1618, %v1638
      %v1655 = vadd.f32 %v1619, %v1639
      %v1656 = vadd.f32 %v1620, %v1640
      %v1657 = vadd.f32 %v1621, %v1641
      %v1658 = vadd.f32 %v1622, %v1642
      %v1659 = vadd.f32 %v1623, %v1643
      %v1660 = vadd.f32 %v1624, %v1644
      %v1661 = vadd.f32 %v1625, %v1645
      %v1662 = vadd.f32 %v1626, %v1646
      %v1663 = vadd.f32 %v1627, %v1647
      %v1664 = vadd.f32 %v1628, %v1648
      %v1665 = vadd.f32 %v1629, %v1649
      %v1666 = vadd.f32 %v1630, %v1650
      %v1667 = vadd.f32 %v1631, %v1651
      %v1668 = vld [vmem:[#allocation2 + $0x6] sm:$0xff]
      %v1669 = vld [vmem:[#allocation2 + $0xe] sm:$0xff]
      %v1670 = vld [vmem:[#allocation2 + $0x26] sm:$0xff]
      %v1671 = vld [vmem:[#allocation2 + $0x2e] sm:$0xff]
      %v1672 = vld [vmem:[#allocation2 + $0x46] sm:$0xff]
      %v1673 = vld [vmem:[#allocation2 + $0x4e] sm:$0xff]
      %v1674 = vld [vmem:[#allocation2 + $0x66] sm:$0xff]
      %v1675 = vld [vmem:[#allocation2 + $0x6e] sm:$0xff]
      %v1676 = vld [vmem:[#allocation2 + $0x86] sm:$0xff]
      %v1677 = vld [vmem:[#allocation2 + $0x8e] sm:$0xff]
      %v1678 = vld [vmem:[#allocation2 + $0xa6] sm:$0xff]
      %v1679 = vld [vmem:[#allocation2 + $0xae] sm:$0xff]
      %v1680 = vld [vmem:[#allocation2 + $0xc6] sm:$0xff]
      %v1681 = vld [vmem:[#allocation2 + $0xce] sm:$0xff]
      %v1682 = vld [vmem:[#allocation2 + $0xe6] sm:$0xff]
      %v1683 = vld [vmem:[#allocation2 + $0xee] sm:$0xff]
      %v1684 = vld [vmem:[#allocation2 + $0x106] sm:$0xff]
      %v1685 = vld [vmem:[#allocation2 + $0x10e] sm:$0xff]
      %v1686 = vld [vmem:[#allocation2 + $0x126] sm:$0xff]
      %v1687 = vld [vmem:[#allocation2 + $0x12e] sm:$0xff]
      %v1688 = vld [vmem:[#allocation2 + $0x146] sm:$0xff]
      %v1689 = vld [vmem:[#allocation2 + $0x14e] sm:$0xff]
      %v1690 = vld [vmem:[#allocation2 + $0x166] sm:$0xff]
      %v1691 = vld [vmem:[#allocation2 + $0x16e] sm:$0xff]
      %v1692 = vld [vmem:[#allocation2 + $0x186] sm:$0xff]
      %v1693 = vld [vmem:[#allocation2 + $0x18e] sm:$0xff]
      %v1694 = vld [vmem:[#allocation2 + $0x1a6] sm:$0xff]
      %v1695 = vld [vmem:[#allocation2 + $0x1ae] sm:$0xff]
      %v1696 = vlaneseq
      %v1697 = vshrl.u32 %v1696, 7
      %v1698 = vsub.s32 1, %v1697
      %v1699 = vrot.slane %v1397, %v1698
      %v1700 = vmul.f32 %v1668, %v1699
      %v1701 = vmul.f32 %v1669, %v1699
      %v1702 = vmul.f32 %v1670, %v1699
      %v1703 = vmul.f32 %v1671, %v1699
      %v1704 = vmul.f32 %v1672, %v1699
      %v1705 = vmul.f32 %v1673, %v1699
      %v1706 = vmul.f32 %v1674, %v1699
      %v1707 = vmul.f32 %v1675, %v1699
      %v1708 = vmul.f32 %v1676, %v1699
      %v1709 = vmul.f32 %v1677, %v1699
      %v1710 = vmul.f32 %v1678, %v1699
      %v1711 = vmul.f32 %v1679, %v1699
      %v1712 = vmul.f32 %v1680, %v1699
      %v1713 = vmul.f32 %v1681, %v1699
      %v1714 = vmul.f32 %v1682, %v1699
      %v1715 = vmul.f32 %v1683, %v1699
      %v1716 = vlaneseq
      %v1717 = vshrl.u32 %v1716, 7
      %v1718 = vsub.s32 0, %v1717
      %v1719 = vrot.slane %v1398, %v1718
      %v1720 = vmul.f32 %v1670, %v1719
      %v1721 = vmul.f32 %v1671, %v1719
      %v1722 = vmul.f32 %v1672, %v1719
      %v1723 = vmul.f32 %v1673, %v1719
      %v1724 = vmul.f32 %v1674, %v1719
      %v1725 = vmul.f32 %v1675, %v1719
      %v1726 = vmul.f32 %v1676, %v1719
      %v1727 = vmul.f32 %v1677, %v1719
      %v1728 = vmul.f32 %v1678, %v1719
      %v1729 = vmul.f32 %v1679, %v1719
      %v1730 = vmul.f32 %v1680, %v1719
      %v1731 = vmul.f32 %v1681, %v1719
      %v1732 = vmul.f32 %v1682, %v1719
      %v1733 = vmul.f32 %v1683, %v1719
      %v1734 = vmul.f32 %v1684, %v1719
      %v1735 = vmul.f32 %v1685, %v1719
      %v1736 = vadd.f32 %v1700, %v1720
      %v1737 = vadd.f32 %v1701, %v1721
      %v1738 = vadd.f32 %v1702, %v1722
      %v1739 = vadd.f32 %v1703, %v1723
      %v1740 = vadd.f32 %v1704, %v1724
      %v1741 = vadd.f32 %v1705, %v1725
      %v1742 = vadd.f32 %v1706, %v1726
      %v1743 = vadd.f32 %v1707, %v1727
      %v1744 = vadd.f32 %v1708, %v1728
      %v1745 = vadd.f32 %v1709, %v1729
      %v1746 = vadd.f32 %v1710, %v1730
      %v1747 = vadd.f32 %v1711, %v1731
      %v1748 = vadd.f32 %v1712, %v1732
      %v1749 = vadd.f32 %v1713, %v1733
      %v1750 = vadd.f32 %v1714, %v1734
      %v1751 = vadd.f32 %v1715, %v1735
      %v1752 = vlaneseq
      %v1753 = vshrl.u32 %v1752, 7
      %v1754 = vsub.s32 7, %v1753
      %v1755 = vrot.slane %v1398, %v1754
      %v1756 = vmul.f32 %v1672, %v1755
      %v1757 = vmul.f32 %v1673, %v1755
      %v1758 = vmul.f32 %v1674, %v1755
      %v1759 = vmul.f32 %v1675, %v1755
      %v1760 = vmul.f32 %v1676, %v1755
      %v1761 = vmul.f32 %v1677, %v1755
      %v1762 = vmul.f32 %v1678, %v1755
      %v1763 = vmul.f32 %v1679, %v1755
      %v1764 = vmul.f32 %v1680, %v1755
      %v1765 = vmul.f32 %v1681, %v1755
      %v1766 = vmul.f32 %v1682, %v1755
      %v1767 = vmul.f32 %v1683, %v1755
      %v1768 = vmul.f32 %v1684, %v1755
      %v1769 = vmul.f32 %v1685, %v1755
      %v1770 = vmul.f32 %v1686, %v1755
      %v1771 = vmul.f32 %v1687, %v1755
      %v1772 = vadd.f32 %v1736, %v1756
      %v1773 = vadd.f32 %v1737, %v1757
      %v1774 = vadd.f32 %v1738, %v1758
      %v1775 = vadd.f32 %v1739, %v1759
      %v1776 = vadd.f32 %v1740, %v1760
      %v1777 = vadd.f32 %v1741, %v1761
      %v1778 = vadd.f32 %v1742, %v1762
      %v1779 = vadd.f32 %v1743, %v1763
      %v1780 = vadd.f32 %v1744, %v1764
      %v1781 = vadd.f32 %v1745, %v1765
      %v1782 = vadd.f32 %v1746, %v1766
      %v1783 = vadd.f32 %v1747, %v1767
      %v1784 = vadd.f32 %v1748, %v1768
      %v1785 = vadd.f32 %v1749, %v1769
      %v1786 = vadd.f32 %v1750, %v1770
      %v1787 = vadd.f32 %v1751, %v1771
      %v1788 = vlaneseq
      %v1789 = vshrl.u32 %v1788, 7
      %v1790 = vsub.s32 6, %v1789
      %v1791 = vrot.slane %v1399, %v1790
      %v1792 = vmul.f32 %v1674, %v1791
      %v1793 = vmul.f32 %v1675, %v1791
      %v1794 = vmul.f32 %v1676, %v1791
      %v1795 = vmul.f32 %v1677, %v1791
      %v1796 = vmul.f32 %v1678, %v1791
      %v1797 = vmul.f32 %v1679, %v1791
      %v1798 = vmul.f32 %v1680, %v1791
      %v1799 = vmul.f32 %v1681, %v1791
      %v1800 = vmul.f32 %v1682, %v1791
      %v1801 = vmul.f32 %v1683, %v1791
      %v1802 = vmul.f32 %v1684, %v1791
      %v1803 = vmul.f32 %v1685, %v1791
      %v1804 = vmul.f32 %v1686, %v1791
      %v1805 = vmul.f32 %v1687, %v1791
      %v1806 = vmul.f32 %v1688, %v1791
      %v1807 = vmul.f32 %v1689, %v1791
      %v1808 = vadd.f32 %v1772, %v1792
      %v1809 = vadd.f32 %v1773, %v1793
      %v1810 = vadd.f32 %v1774, %v1794
      %v1811 = vadd.f32 %v1775, %v1795
      %v1812 = vadd.f32 %v1776, %v1796
      %v1813 = vadd.f32 %v1777, %v1797
      %v1814 = vadd.f32 %v1778, %v1798
      %v1815 = vadd.f32 %v1779, %v1799
      %v1816 = vadd.f32 %v1780, %v1800
      %v1817 = vadd.f32 %v1781, %v1801
      %v1818 = vadd.f32 %v1782, %v1802
      %v1819 = vadd.f32 %v1783, %v1803
      %v1820 = vadd.f32 %v1784, %v1804
      %v1821 = vadd.f32 %v1785, %v1805
      %v1822 = vadd.f32 %v1786, %v1806
      %v1823 = vadd.f32 %v1787, %v1807
      %v1824 = vlaneseq
      %v1825 = vshrl.u32 %v1824, 7
      %v1826 = vsub.s32 5, %v1825
      %v1827 = vrot.slane %v1400, %v1826
      %v1828 = vmul.f32 %v1676, %v1827
      %v1829 = vmul.f32 %v1677, %v1827
      %v1830 = vmul.f32 %v1678, %v1827
      %v1831 = vmul.f32 %v1679, %v1827
      %v1832 = vmul.f32 %v1680, %v1827
      %v1833 = vmul.f32 %v1681, %v1827
      %v1834 = vmul.f32 %v1682, %v1827
      %v1835 = vmul.f32 %v1683, %v1827
      %v1836 = vmul.f32 %v1684, %v1827
      %v1837 = vmul.f32 %v1685, %v1827
      %v1838 = vmul.f32 %v1686, %v1827
      %v1839 = vmul.f32 %v1687, %v1827
      %v1840 = vmul.f32 %v1688, %v1827
      %v1841 = vmul.f32 %v1689, %v1827
      %v1842 = vmul.f32 %v1690, %v1827
      %v1843 = vmul.f32 %v1691, %v1827
      %v1844 = vadd.f32 %v1808, %v1828
      %v1845 = vadd.f32 %v1809, %v1829
      %v1846 = vadd.f32 %v1810, %v1830
      %v1847 = vadd.f32 %v1811, %v1831
      %v1848 = vadd.f32 %v1812, %v1832
      %v1849 = vadd.f32 %v1813, %v1833
      %v1850 = vadd.f32 %v1814, %v1834
      %v1851 = vadd.f32 %v1815, %v1835
      %v1852 = vadd.f32 %v1816, %v1836
      %v1853 = vadd.f32 %v1817, %v1837
      %v1854 = vadd.f32 %v1818, %v1838
      %v1855 = vadd.f32 %v1819, %v1839
      %v1856 = vadd.f32 %v1820, %v1840
      %v1857 = vadd.f32 %v1821, %v1841
      %v1858 = vadd.f32 %v1822, %v1842
      %v1859 = vadd.f32 %v1823, %v1843
      %v1860 = vlaneseq
      %v1861 = vshrl.u32 %v1860, 7
      %v1862 = vsub.s32 4, %v1861
      %v1863 = vrot.slane %v1401, %v1862
      %v1864 = vmul.f32 %v1678, %v1863
      %v1865 = vmul.f32 %v1679, %v1863
      %v1866 = vmul.f32 %v1680, %v1863
      %v1867 = vmul.f32 %v1681, %v1863
      %v1868 = vmul.f32 %v1682, %v1863
      %v1869 = vmul.f32 %v1683, %v1863
      %v1870 = vmul.f32 %v1684, %v1863
      %v1871 = vmul.f32 %v1685, %v1863
      %v1872 = vmul.f32 %v1686, %v1863
      %v1873 = vmul.f32 %v1687, %v1863
      %v1874 = vmul.f32 %v1688, %v1863
      %v1875 = vmul.f32 %v1689, %v1863
      %v1876 = vmul.f32 %v1690, %v1863
      %v1877 = vmul.f32 %v1691, %v1863
      %v1878 = vmul.f32 %v1692, %v1863
      %v1879 = vmul.f32 %v1693, %v1863
      %v1880 = vadd.f32 %v1844, %v1864
      %v1881 = vadd.f32 %v1845, %v1865
      %v1882 = vadd.f32 %v1846, %v1866
      %v1883 = vadd.f32 %v1847, %v1867
      %v1884 = vadd.f32 %v1848, %v1868
      %v1885 = vadd.f32 %v1849, %v1869
      %v1886 = vadd.f32 %v1850, %v1870
      %v1887 = vadd.f32 %v1851, %v1871
      %v1888 = vadd.f32 %v1852, %v1872
      %v1889 = vadd.f32 %v1853, %v1873
      %v1890 = vadd.f32 %v1854, %v1874
      %v1891 = vadd.f32 %v1855, %v1875
      %v1892 = vadd.f32 %v1856, %v1876
      %v1893 = vadd.f32 %v1857, %v1877
      %v1894 = vadd.f32 %v1858, %v1878
      %v1895 = vadd.f32 %v1859, %v1879
      %v1896 = vlaneseq
      %v1897 = vshrl.u32 %v1896, 7
      %v1898 = vsub.s32 3, %v1897
      %v1899 = vrot.slane %v1402, %v1898
      %v1900 = vmul.f32 %v1680, %v1899
      %v1901 = vmul.f32 %v1681, %v1899
      %v1902 = vmul.f32 %v1682, %v1899
      %v1903 = vmul.f32 %v1683, %v1899
      %v1904 = vmul.f32 %v1684, %v1899
      %v1905 = vmul.f32 %v1685, %v1899
      %v1906 = vmul.f32 %v1686, %v1899
      %v1907 = vmul.f32 %v1687, %v1899
      %v1908 = vmul.f32 %v1688, %v1899
      %v1909 = vmul.f32 %v1689, %v1899
      %v1910 = vmul.f32 %v1690, %v1899
      %v1911 = vmul.f32 %v1691, %v1899
      %v1912 = vmul.f32 %v1692, %v1899
      %v1913 = vmul.f32 %v1693, %v1899
      %v1914 = vmul.f32 %v1694, %v1899
      %v1915 = vmul.f32 %v1695, %v1899
      %v1916 = vadd.f32 %v1880, %v1900
      %v1917 = vadd.f32 %v1881, %v1901
      %v1918 = vadd.f32 %v1882, %v1902
      %v1919 = vadd.f32 %v1883, %v1903
      %v1920 = vadd.f32 %v1884, %v1904
      %v1921 = vadd.f32 %v1885, %v1905
      %v1922 = vadd.f32 %v1886, %v1906
      %v1923 = vadd.f32 %v1887, %v1907
      %v1924 = vadd.f32 %v1888, %v1908
      %v1925 = vadd.f32 %v1889, %v1909
      %v1926 = vadd.f32 %v1890, %v1910
      %v1927 = vadd.f32 %v1891, %v1911
      %v1928 = vadd.f32 %v1892, %v1912
      %v1929 = vadd.f32 %v1893, %v1913
      %v1930 = vadd.f32 %v1894, %v1914
      %v1931 = vadd.f32 %v1895, %v1915
      %v1932 = vld [vmem:[#allocation2 + $0x7] sm:$0xff]
      %v1933 = vld [vmem:[#allocation2 + $0xf] sm:$0xff]
      %v1934 = vld [vmem:[#allocation2 + $0x27] sm:$0xff]
      %v1935 = vld [vmem:[#allocation2 + $0x2f] sm:$0xff]
      %v1936 = vld [vmem:[#allocation2 + $0x47] sm:$0xff]
      %v1937 = vld [vmem:[#allocation2 + $0x4f] sm:$0xff]
      %v1938 = vld [vmem:[#allocation2 + $0x67] sm:$0xff]
      %v1939 = vld [vmem:[#allocation2 + $0x6f] sm:$0xff]
      %v1940 = vld [vmem:[#allocation2 + $0x87] sm:$0xff]
      %v1941 = vld [vmem:[#allocation2 + $0x8f] sm:$0xff]
      %v1942 = vld [vmem:[#allocation2 + $0xa7] sm:$0xff]
      %v1943 = vld [vmem:[#allocation2 + $0xaf] sm:$0xff]
      %v1944 = vld [vmem:[#allocation2 + $0xc7] sm:$0xff]
      %v1945 = vld [vmem:[#allocation2 + $0xcf] sm:$0xff]
      %v1946 = vld [vmem:[#allocation2 + $0xe7] sm:$0xff]
      %v1947 = vld [vmem:[#allocation2 + $0xef] sm:$0xff]
      %v1948 = vld [vmem:[#allocation2 + $0x107] sm:$0xff]
      %v1949 = vld [vmem:[#allocation2 + $0x10f] sm:$0xff]
      %v1950 = vld [vmem:[#allocation2 + $0x127] sm:$0xff]
      %v1951 = vld [vmem:[#allocation2 + $0x12f] sm:$0xff]
      %v1952 = vld [vmem:[#allocation2 + $0x147] sm:$0xff]
      %v1953 = vld [vmem:[#allocation2 + $0x14f] sm:$0xff]
      %v1954 = vld [vmem:[#allocation2 + $0x167] sm:$0xff]
      %v1955 = vld [vmem:[#allocation2 + $0x16f] sm:$0xff]
      %v1956 = vld [vmem:[#allocation2 + $0x187] sm:$0xff]
      %v1957 = vld [vmem:[#allocation2 + $0x18f] sm:$0xff]
      %v1958 = vld [vmem:[#allocation2 + $0x1a7] sm:$0xff]
      %v1959 = vld [vmem:[#allocation2 + $0x1af] sm:$0xff]
      %v1960 = vlaneseq
      %v1961 = vshrl.u32 %v1960, 7
      %v1962 = vsub.s32 2, %v1961
      %v1963 = vrot.slane %v1397, %v1962
      %v1964 = vmul.f32 %v1932, %v1963
      %v1965 = vmul.f32 %v1933, %v1963
      %v1966 = vmul.f32 %v1934, %v1963
      %v1967 = vmul.f32 %v1935, %v1963
      %v1968 = vmul.f32 %v1936, %v1963
      %v1969 = vmul.f32 %v1937, %v1963
      %v1970 = vmul.f32 %v1938, %v1963
      %v1971 = vmul.f32 %v1939, %v1963
      %v1972 = vmul.f32 %v1940, %v1963
      %v1973 = vmul.f32 %v1941, %v1963
      %v1974 = vmul.f32 %v1942, %v1963
      %v1975 = vmul.f32 %v1943, %v1963
      %v1976 = vmul.f32 %v1944, %v1963
      %v1977 = vmul.f32 %v1945, %v1963
      %v1978 = vmul.f32 %v1946, %v1963
      %v1979 = vmul.f32 %v1947, %v1963
      %v1980 = vlaneseq
      %v1981 = vshrl.u32 %v1980, 7
      %v1982 = vsub.s32 1, %v1981
      %v1983 = vrot.slane %v1398, %v1982
      %v1984 = vmul.f32 %v1934, %v1983
      %v1985 = vmul.f32 %v1935, %v1983
      %v1986 = vmul.f32 %v1936, %v1983
      %v1987 = vmul.f32 %v1937, %v1983
      %v1988 = vmul.f32 %v1938, %v1983
      %v1989 = vmul.f32 %v1939, %v1983
      %v1990 = vmul.f32 %v1940, %v1983
      %v1991 = vmul.f32 %v1941, %v1983
      %v1992 = vmul.f32 %v1942, %v1983
      %v1993 = vmul.f32 %v1943, %v1983
      %v1994 = vmul.f32 %v1944, %v1983
      %v1995 = vmul.f32 %v1945, %v1983
      %v1996 = vmul.f32 %v1946, %v1983
      %v1997 = vmul.f32 %v1947, %v1983
      %v1998 = vmul.f32 %v1948, %v1983
      %v1999 = vmul.f32 %v1949, %v1983
      %v2000 = vadd.f32 %v1964, %v1984
      %v2001 = vadd.f32 %v1965, %v1985
      %v2002 = vadd.f32 %v1966, %v1986
      %v2003 = vadd.f32 %v1967, %v1987
      %v2004 = vadd.f32 %v1968, %v1988
      %v2005 = vadd.f32 %v1969, %v1989
      %v2006 = vadd.f32 %v1970, %v1990
      %v2007 = vadd.f32 %v1971, %v1991
      %v2008 = vadd.f32 %v1972, %v1992
      %v2009 = vadd.f32 %v1973, %v1993
      %v2010 = vadd.f32 %v1974, %v1994
      %v2011 = vadd.f32 %v1975, %v1995
      %v2012 = vadd.f32 %v1976, %v1996
      %v2013 = vadd.f32 %v1977, %v1997
      %v2014 = vadd.f32 %v1978, %v1998
      %v2015 = vadd.f32 %v1979, %v1999
      %v2016 = vlaneseq
      %v2017 = vshrl.u32 %v2016, 7
      %v2018 = vsub.s32 0, %v2017
      %v2019 = vrot.slane %v1399, %v2018
      %v2020 = vmul.f32 %v1936, %v2019
      %v2021 = vmul.f32 %v1937, %v2019
      %v2022 = vmul.f32 %v1938, %v2019
      %v2023 = vmul.f32 %v1939, %v2019
      %v2024 = vmul.f32 %v1940, %v2019
      %v2025 = vmul.f32 %v1941, %v2019
      %v2026 = vmul.f32 %v1942, %v2019
      %v2027 = vmul.f32 %v1943, %v2019
      %v2028 = vmul.f32 %v1944, %v2019
      %v2029 = vmul.f32 %v1945, %v2019
      %v2030 = vmul.f32 %v1946, %v2019
      %v2031 = vmul.f32 %v1947, %v2019
      %v2032 = vmul.f32 %v1948, %v2019
      %v2033 = vmul.f32 %v1949, %v2019
      %v2034 = vmul.f32 %v1950, %v2019
      %v2035 = vmul.f32 %v1951, %v2019
      %v2036 = vadd.f32 %v2000, %v2020
      %v2037 = vadd.f32 %v2001, %v2021
      %v2038 = vadd.f32 %v2002, %v2022
      %v2039 = vadd.f32 %v2003, %v2023
      %v2040 = vadd.f32 %v2004, %v2024
      %v2041 = vadd.f32 %v2005, %v2025
      %v2042 = vadd.f32 %v2006, %v2026
      %v2043 = vadd.f32 %v2007, %v2027
      %v2044 = vadd.f32 %v2008, %v2028
      %v2045 = vadd.f32 %v2009, %v2029
      %v2046 = vadd.f32 %v2010, %v2030
      %v2047 = vadd.f32 %v2011, %v2031
      %v2048 = vadd.f32 %v2012, %v2032
      %v2049 = vadd.f32 %v2013, %v2033
      %v2050 = vadd.f32 %v2014, %v2034
      %v2051 = vadd.f32 %v2015, %v2035
      %v2052 = vlaneseq
      %v2053 = vshrl.u32 %v2052, 7
      %v2054 = vsub.s32 7, %v2053
      %v2055 = vrot.slane %v1399, %v2054
      %v2056 = vmul.f32 %v1938, %v2055
      %v2057 = vmul.f32 %v1939, %v2055
      %v2058 = vmul.f32 %v1940, %v2055
      %v2059 = vmul.f32 %v1941, %v2055
      %v2060 = vmul.f32 %v1942, %v2055
      %v2061 = vmul.f32 %v1943, %v2055
      %v2062 = vmul.f32 %v1944, %v2055
      %v2063 = vmul.f32 %v1945, %v2055
      %v2064 = vmul.f32 %v1946, %v2055
      %v2065 = vmul.f32 %v1947, %v2055
      %v2066 = vmul.f32 %v1948, %v2055
      %v2067 = vmul.f32 %v1949, %v2055
      %v2068 = vmul.f32 %v1950, %v2055
      %v2069 = vmul.f32 %v1951, %v2055
      %v2070 = vmul.f32 %v1952, %v2055
      %v2071 = vmul.f32 %v1953, %v2055
      %v2072 = vadd.f32 %v2036, %v2056
      %v2073 = vadd.f32 %v2037, %v2057
      %v2074 = vadd.f32 %v2038, %v2058
      %v2075 = vadd.f32 %v2039, %v2059
      %v2076 = vadd.f32 %v2040, %v2060
      %v2077 = vadd.f32 %v2041, %v2061
      %v2078 = vadd.f32 %v2042, %v2062
      %v2079 = vadd.f32 %v2043, %v2063
      %v2080 = vadd.f32 %v2044, %v2064
      %v2081 = vadd.f32 %v2045, %v2065
      %v2082 = vadd.f32 %v2046, %v2066
      %v2083 = vadd.f32 %v2047, %v2067
      %v2084 = vadd.f32 %v2048, %v2068
      %v2085 = vadd.f32 %v2049, %v2069
      %v2086 = vadd.f32 %v2050, %v2070
      %v2087 = vadd.f32 %v2051, %v2071
      %v2088 = vlaneseq
      %v2089 = vshrl.u32 %v2088, 7
      %v2090 = vsub.s32 6, %v2089
      %v2091 = vrot.slane %v1400, %v2090
      %v2092 = vmul.f32 %v1940, %v2091
      %v2093 = vmul.f32 %v1941, %v2091
      %v2094 = vmul.f32 %v1942, %v2091
      %v2095 = vmul.f32 %v1943, %v2091
      %v2096 = vmul.f32 %v1944, %v2091
      %v2097 = vmul.f32 %v1945, %v2091
      %v2098 = vmul.f32 %v1946, %v2091
      %v2099 = vmul.f32 %v1947, %v2091
      %v2100 = vmul.f32 %v1948, %v2091
      %v2101 = vmul.f32 %v1949, %v2091
      %v2102 = vmul.f32 %v1950, %v2091
      %v2103 = vmul.f32 %v1951, %v2091
      %v2104 = vmul.f32 %v1952, %v2091
      %v2105 = vmul.f32 %v1953, %v2091
      %v2106 = vmul.f32 %v1954, %v2091
      %v2107 = vmul.f32 %v1955, %v2091
      %v2108 = vadd.f32 %v2072, %v2092
      %v2109 = vadd.f32 %v2073, %v2093
      %v2110 = vadd.f32 %v2074, %v2094
      %v2111 = vadd.f32 %v2075, %v2095
      %v2112 = vadd.f32 %v2076, %v2096
      %v2113 = vadd.f32 %v2077, %v2097
      %v2114 = vadd.f32 %v2078, %v2098
      %v2115 = vadd.f32 %v2079, %v2099
      %v2116 = vadd.f32 %v2080, %v2100
      %v2117 = vadd.f32 %v2081, %v2101
      %v2118 = vadd.f32 %v2082, %v2102
      %v2119 = vadd.f32 %v2083, %v2103
      %v2120 = vadd.f32 %v2084, %v2104
      %v2121 = vadd.f32 %v2085, %v2105
      %v2122 = vadd.f32 %v2086, %v2106
      %v2123 = vadd.f32 %v2087, %v2107
      %v2124 = vlaneseq
      %v2125 = vshrl.u32 %v2124, 7
      %v2126 = vsub.s32 5, %v2125
      %v2127 = vrot.slane %v1401, %v2126
      %v2128 = vmul.f32 %v1942, %v2127
      %v2129 = vmul.f32 %v1943, %v2127
      %v2130 = vmul.f32 %v1944, %v2127
      %v2131 = vmul.f32 %v1945, %v2127
      %v2132 = vmul.f32 %v1946, %v2127
      %v2133 = vmul.f32 %v1947, %v2127
      %v2134 = vmul.f32 %v1948, %v2127
      %v2135 = vmul.f32 %v1949, %v2127
      %v2136 = vmul.f32 %v1950, %v2127
      %v2137 = vmul.f32 %v1951, %v2127
      %v2138 = vmul.f32 %v1952, %v2127
      %v2139 = vmul.f32 %v1953, %v2127
      %v2140 = vmul.f32 %v1954, %v2127
      %v2141 = vmul.f32 %v1955, %v2127
      %v2142 = vmul.f32 %v1956, %v2127
      %v2143 = vmul.f32 %v1957, %v2127
      %v2144 = vadd.f32 %v2108, %v2128
      %v2145 = vadd.f32 %v2109, %v2129
      %v2146 = vadd.f32 %v2110, %v2130
      %v2147 = vadd.f32 %v2111, %v2131
      %v2148 = vadd.f32 %v2112, %v2132
      %v2149 = vadd.f32 %v2113, %v2133
      %v2150 = vadd.f32 %v2114, %v2134
      %v2151 = vadd.f32 %v2115, %v2135
      %v2152 = vadd.f32 %v2116, %v2136
      %v2153 = vadd.f32 %v2117, %v2137
      %v2154 = vadd.f32 %v2118, %v2138
      %v2155 = vadd.f32 %v2119, %v2139
      %v2156 = vadd.f32 %v2120, %v2140
      %v2157 = vadd.f32 %v2121, %v2141
      %v2158 = vadd.f32 %v2122, %v2142
      %v2159 = vadd.f32 %v2123, %v2143
      %v2160 = vlaneseq
      %v2161 = vshrl.u32 %v2160, 7
      %v2162 = vsub.s32 4, %v2161
      %v2163 = vrot.slane %v1402, %v2162
      %v2164 = vmul.f32 %v1944, %v2163
      %v2165 = vmul.f32 %v1945, %v2163
      %v2166 = vmul.f32 %v1946, %v2163
      %v2167 = vmul.f32 %v1947, %v2163
      %v2168 = vmul.f32 %v1948, %v2163
      %v2169 = vmul.f32 %v1949, %v2163
      %v2170 = vmul.f32 %v1950, %v2163
      %v2171 = vmul.f32 %v1951, %v2163
      %v2172 = vmul.f32 %v1952, %v2163
      %v2173 = vmul.f32 %v1953, %v2163
      %v2174 = vmul.f32 %v1954, %v2163
      %v2175 = vmul.f32 %v1955, %v2163
      %v2176 = vmul.f32 %v1956, %v2163
      %v2177 = vmul.f32 %v1957, %v2163
      %v2178 = vmul.f32 %v1958, %v2163
      %v2179 = vmul.f32 %v1959, %v2163
      %v2180 = vadd.f32 %v2144, %v2164
      %v2181 = vadd.f32 %v2145, %v2165
      %v2182 = vadd.f32 %v2146, %v2166
      %v2183 = vadd.f32 %v2147, %v2167
      %v2184 = vadd.f32 %v2148, %v2168
      %v2185 = vadd.f32 %v2149, %v2169
      %v2186 = vadd.f32 %v2150, %v2170
      %v2187 = vadd.f32 %v2151, %v2171
      %v2188 = vadd.f32 %v2152, %v2172
      %v2189 = vadd.f32 %v2153, %v2173
      %v2190 = vadd.f32 %v2154, %v2174
      %v2191 = vadd.f32 %v2155, %v2175
      %v2192 = vadd.f32 %v2156, %v2176
      %v2193 = vadd.f32 %v2157, %v2177
      %v2194 = vadd.f32 %v2158, %v2178
      %v2195 = vadd.f32 %v2159, %v2179
      %v2196 = vld [vmem:[#allocation2 + $0x8] sm:$0xff]
      %v2197 = vld [vmem:[#allocation2 + $0x10] sm:$0xff]
      %v2198 = vld [vmem:[#allocation2 + $0x28] sm:$0xff]
      %v2199 = vld [vmem:[#allocation2 + $0x30] sm:$0xff]
      %v2200 = vld [vmem:[#allocation2 + $0x48] sm:$0xff]
      %v2201 = vld [vmem:[#allocation2 + $0x50] sm:$0xff]
      %v2202 = vld [vmem:[#allocation2 + $0x68] sm:$0xff]
      %v2203 = vld [vmem:[#allocation2 + $0x70] sm:$0xff]
      %v2204 = vld [vmem:[#allocation2 + $0x88] sm:$0xff]
      %v2205 = vld [vmem:[#allocation2 + $0x90] sm:$0xff]
      %v2206 = vld [vmem:[#allocation2 + $0xa8] sm:$0xff]
      %v2207 = vld [vmem:[#allocation2 + $0xb0] sm:$0xff]
      %v2208 = vld [vmem:[#allocation2 + $0xc8] sm:$0xff]
      %v2209 = vld [vmem:[#allocation2 + $0xd0] sm:$0xff]
      %v2210 = vld [vmem:[#allocation2 + $0xe8] sm:$0xff]
      %v2211 = vld [vmem:[#allocation2 + $0xf0] sm:$0xff]
      %v2212 = vld [vmem:[#allocation2 + $0x108] sm:$0xff]
      %v2213 = vld [vmem:[#allocation2 + $0x110] sm:$0xff]
      %v2214 = vld [vmem:[#allocation2 + $0x128] sm:$0xff]
      %v2215 = vld [vmem:[#allocation2 + $0x130] sm:$0xff]
      %v2216 = vld [vmem:[#allocation2 + $0x148] sm:$0xff]
      %v2217 = vld [vmem:[#allocation2 + $0x150] sm:$0xff]
      %v2218 = vld [vmem:[#allocation2 + $0x168] sm:$0xff]
      %v2219 = vld [vmem:[#allocation2 + $0x170] sm:$0xff]
      %v2220 = vld [vmem:[#allocation2 + $0x188] sm:$0xff]
      %v2221 = vld [vmem:[#allocation2 + $0x190] sm:$0xff]
      %v2222 = vld [vmem:[#allocation2 + $0x1a8] sm:$0xff]
      %v2223 = vld [vmem:[#allocation2 + $0x1b0] sm:$0xff]
      %v2224 = vlaneseq
      %v2225 = vshrl.u32 %v2224, 7
      %v2226 = vsub.s32 3, %v2225
      %v2227 = vrot.slane %v1397, %v2226
      %v2228 = vmul.f32 %v2196, %v2227
      %v2229 = vmul.f32 %v2197, %v2227
      %v2230 = vmul.f32 %v2198, %v2227
      %v2231 = vmul.f32 %v2199, %v2227
      %v2232 = vmul.f32 %v2200, %v2227
      %v2233 = vmul.f32 %v2201, %v2227
      %v2234 = vmul.f32 %v2202, %v2227
      %v2235 = vmul.f32 %v2203, %v2227
      %v2236 = vmul.f32 %v2204, %v2227
      %v2237 = vmul.f32 %v2205, %v2227
      %v2238 = vmul.f32 %v2206, %v2227
      %v2239 = vmul.f32 %v2207, %v2227
      %v2240 = vmul.f32 %v2208, %v2227
      %v2241 = vmul.f32 %v2209, %v2227
      %v2242 = vmul.f32 %v2210, %v2227
      %v2243 = vmul.f32 %v2211, %v2227
      %v2244 = vlaneseq
      %v2245 = vshrl.u32 %v2244, 7
      %v2246 = vsub.s32 2, %v2245
      %v2247 = vrot.slane %v1398, %v2246
      %v2248 = vmul.f32 %v2198, %v2247
      %v2249 = vmul.f32 %v2199, %v2247
      %v2250 = vmul.f32 %v2200, %v2247
      %v2251 = vmul.f32 %v2201, %v2247
      %v2252 = vmul.f32 %v2202, %v2247
      %v2253 = vmul.f32 %v2203, %v2247
      %v2254 = vmul.f32 %v2204, %v2247
      %v2255 = vmul.f32 %v2205, %v2247
      %v2256 = vmul.f32 %v2206, %v2247
      %v2257 = vmul.f32 %v2207, %v2247
      %v2258 = vmul.f32 %v2208, %v2247
      %v2259 = vmul.f32 %v2209, %v2247
      %v2260 = vmul.f32 %v2210, %v2247
      %v2261 = vmul.f32 %v2211, %v2247
      %v2262 = vmul.f32 %v2212, %v2247
      %v2263 = vmul.f32 %v2213, %v2247
      %v2264 = vadd.f32 %v2228, %v2248
      %v2265 = vadd.f32 %v2229, %v2249
      %v2266 = vadd.f32 %v2230, %v2250
      %v2267 = vadd.f32 %v2231, %v2251
      %v2268 = vadd.f32 %v2232, %v2252
      %v2269 = vadd.f32 %v2233, %v2253
      %v2270 = vadd.f32 %v2234, %v2254
      %v2271 = vadd.f32 %v2235, %v2255
      %v2272 = vadd.f32 %v2236, %v2256
      %v2273 = vadd.f32 %v2237, %v2257
      %v2274 = vadd.f32 %v2238, %v2258
      %v2275 = vadd.f32 %v2239, %v2259
      %v2276 = vadd.f32 %v2240, %v2260
      %v2277 = vadd.f32 %v2241, %v2261
      %v2278 = vadd.f32 %v2242, %v2262
      %v2279 = vadd.f32 %v2243, %v2263
      %v2280 = vlaneseq
      %v2281 = vshrl.u32 %v2280, 7
      %v2282 = vsub.s32 1, %v2281
      %v2283 = vrot.slane %v1399, %v2282
      %v2284 = vmul.f32 %v2200, %v2283
      %v2285 = vmul.f32 %v2201, %v2283
      %v2286 = vmul.f32 %v2202, %v2283
      %v2287 = vmul.f32 %v2203, %v2283
      %v2288 = vmul.f32 %v2204, %v2283
      %v2289 = vmul.f32 %v2205, %v2283
      %v2290 = vmul.f32 %v2206, %v2283
      %v2291 = vmul.f32 %v2207, %v2283
      %v2292 = vmul.f32 %v2208, %v2283
      %v2293 = vmul.f32 %v2209, %v2283
      %v2294 = vmul.f32 %v2210, %v2283
      %v2295 = vmul.f32 %v2211, %v2283
      %v2296 = vmul.f32 %v2212, %v2283
      %v2297 = vmul.f32 %v2213, %v2283
      %v2298 = vmul.f32 %v2214, %v2283
      %v2299 = vmul.f32 %v2215, %v2283
      %v2300 = vadd.f32 %v2264, %v2284
      %v2301 = vadd.f32 %v2265, %v2285
      %v2302 = vadd.f32 %v2266, %v2286
      %v2303 = vadd.f32 %v2267, %v2287
      %v2304 = vadd.f32 %v2268, %v2288
      %v2305 = vadd.f32 %v2269, %v2289
      %v2306 = vadd.f32 %v2270, %v2290
      %v2307 = vadd.f32 %v2271, %v2291
      %v2308 = vadd.f32 %v2272, %v2292
      %v2309 = vadd.f32 %v2273, %v2293
      %v2310 = vadd.f32 %v2274, %v2294
      %v2311 = vadd.f32 %v2275, %v2295
      %v2312 = vadd.f32 %v2276, %v2296
      %v2313 = vadd.f32 %v2277, %v2297
      %v2314 = vadd.f32 %v2278, %v2298
      %v2315 = vadd.f32 %v2279, %v2299
      %v2316 = vlaneseq
      %v2317 = vshrl.u32 %v2316, 7
      %v2318 = vsub.s32 0, %v2317
      %v2319 = vrot.slane %v1400, %v2318
      %v2320 = vmul.f32 %v2202, %v2319
      %v2321 = vmul.f32 %v2203, %v2319
      %v2322 = vmul.f32 %v2204, %v2319
      %v2323 = vmul.f32 %v2205, %v2319
      %v2324 = vmul.f32 %v2206, %v2319
      %v2325 = vmul.f32 %v2207, %v2319
      %v2326 = vmul.f32 %v2208, %v2319
      %v2327 = vmul.f32 %v2209, %v2319
      %v2328 = vmul.f32 %v2210, %v2319
      %v2329 = vmul.f32 %v2211, %v2319
      %v2330 = vmul.f32 %v2212, %v2319
      %v2331 = vmul.f32 %v2213, %v2319
      %v2332 = vmul.f32 %v2214, %v2319
      %v2333 = vmul.f32 %v2215, %v2319
      %v2334 = vmul.f32 %v2216, %v2319
      %v2335 = vmul.f32 %v2217, %v2319
      %v2336 = vadd.f32 %v2300, %v2320
      %v2337 = vadd.f32 %v2301, %v2321
      %v2338 = vadd.f32 %v2302, %v2322
      %v2339 = vadd.f32 %v2303, %v2323
      %v2340 = vadd.f32 %v2304, %v2324
      %v2341 = vadd.f32 %v2305, %v2325
      %v2342 = vadd.f32 %v2306, %v2326
      %v2343 = vadd.f32 %v2307, %v2327
      %v2344 = vadd.f32 %v2308, %v2328
      %v2345 = vadd.f32 %v2309, %v2329
      %v2346 = vadd.f32 %v2310, %v2330
      %v2347 = vadd.f32 %v2311, %v2331
      %v2348 = vadd.f32 %v2312, %v2332
      %v2349 = vadd.f32 %v2313, %v2333
      %v2350 = vadd.f32 %v2314, %v2334
      %v2351 = vadd.f32 %v2315, %v2335
      %v2352 = vlaneseq
      %v2353 = vshrl.u32 %v2352, 7
      %v2354 = vsub.s32 7, %v2353
      %v2355 = vrot.slane %v1400, %v2354
      %v2356 = vmul.f32 %v2204, %v2355
      %v2357 = vmul.f32 %v2205, %v2355
      %v2358 = vmul.f32 %v2206, %v2355
      %v2359 = vmul.f32 %v2207, %v2355
      %v2360 = vmul.f32 %v2208, %v2355
      %v2361 = vmul.f32 %v2209, %v2355
      %v2362 = vmul.f32 %v2210, %v2355
      %v2363 = vmul.f32 %v2211, %v2355
      %v2364 = vmul.f32 %v2212, %v2355
      %v2365 = vmul.f32 %v2213, %v2355
      %v2366 = vmul.f32 %v2214, %v2355
      %v2367 = vmul.f32 %v2215, %v2355
      %v2368 = vmul.f32 %v2216, %v2355
      %v2369 = vmul.f32 %v2217, %v2355
      %v2370 = vmul.f32 %v2218, %v2355
      %v2371 = vmul.f32 %v2219, %v2355
      %v2372 = vadd.f32 %v2336, %v2356
      %v2373 = vadd.f32 %v2337, %v2357
      %v2374 = vadd.f32 %v2338, %v2358
      %v2375 = vadd.f32 %v2339, %v2359
      %v2376 = vadd.f32 %v2340, %v2360
      %v2377 = vadd.f32 %v2341, %v2361
      %v2378 = vadd.f32 %v2342, %v2362
      %v2379 = vadd.f32 %v2343, %v2363
      %v2380 = vadd.f32 %v2344, %v2364
      %v2381 = vadd.f32 %v2345, %v2365
      %v2382 = vadd.f32 %v2346, %v2366
      %v2383 = vadd.f32 %v2347, %v2367
      %v2384 = vadd.f32 %v2348, %v2368
      %v2385 = vadd.f32 %v2349, %v2369
      %v2386 = vadd.f32 %v2350, %v2370
      %v2387 = vadd.f32 %v2351, %v2371
      %v2388 = vlaneseq
      %v2389 = vshrl.u32 %v2388, 7
      %v2390 = vsub.s32 6, %v2389
      %v2391 = vrot.slane %v1401, %v2390
      %v2392 = vmul.f32 %v2206, %v2391
      %v2393 = vmul.f32 %v2207, %v2391
      %v2394 = vmul.f32 %v2208, %v2391
      %v2395 = vmul.f32 %v2209, %v2391
      %v2396 = vmul.f32 %v2210, %v2391
      %v2397 = vmul.f32 %v2211, %v2391
      %v2398 = vmul.f32 %v2212, %v2391
      %v2399 = vmul.f32 %v2213, %v2391
      %v2400 = vmul.f32 %v2214, %v2391
      %v2401 = vmul.f32 %v2215, %v2391
      %v2402 = vmul.f32 %v2216, %v2391
      %v2403 = vmul.f32 %v2217, %v2391
      %v2404 = vmul.f32 %v2218, %v2391
      %v2405 = vmul.f32 %v2219, %v2391
      %v2406 = vmul.f32 %v2220, %v2391
      %v2407 = vmul.f32 %v2221, %v2391
      %v2408 = vadd.f32 %v2372, %v2392
      %v2409 = vadd.f32 %v2373, %v2393
      %v2410 = vadd.f32 %v2374, %v2394
      %v2411 = vadd.f32 %v2375, %v2395
      %v2412 = vadd.f32 %v2376, %v2396
      %v2413 = vadd.f32 %v2377, %v2397
      %v2414 = vadd.f32 %v2378, %v2398
      %v2415 = vadd.f32 %v2379, %v2399
      %v2416 = vadd.f32 %v2380, %v2400
      %v2417 = vadd.f32 %v2381, %v2401
      %v2418 = vadd.f32 %v2382, %v2402
      %v2419 = vadd.f32 %v2383, %v2403
      %v2420 = vadd.f32 %v2384, %v2404
      %v2421 = vadd.f32 %v2385, %v2405
      %v2422 = vadd.f32 %v2386, %v2406
      %v2423 = vadd.f32 %v2387, %v2407
      %v2424 = vlaneseq
      %v2425 = vshrl.u32 %v2424, 7
      %v2426 = vsub.s32 5, %v2425
      %v2427 = vrot.slane %v1402, %v2426
      %v2428 = vmul.f32 %v2208, %v2427
      %v2429 = vmul.f32 %v2209, %v2427
      %v2430 = vmul.f32 %v2210, %v2427
      %v2431 = vmul.f32 %v2211, %v2427
      %v2432 = vmul.f32 %v2212, %v2427
      %v2433 = vmul.f32 %v2213, %v2427
      %v2434 = vmul.f32 %v2214, %v2427
      %v2435 = vmul.f32 %v2215, %v2427
      %v2436 = vmul.f32 %v2216, %v2427
      %v2437 = vmul.f32 %v2217, %v2427
      %v2438 = vmul.f32 %v2218, %v2427
      %v2439 = vmul.f32 %v2219, %v2427
      %v2440 = vmul.f32 %v2220, %v2427
      %v2441 = vmul.f32 %v2221, %v2427
      %v2442 = vmul.f32 %v2222, %v2427
      %v2443 = vmul.f32 %v2223, %v2427
      %v2444 = vadd.f32 %v2408, %v2428
      %v2445 = vadd.f32 %v2409, %v2429
      %v2446 = vadd.f32 %v2410, %v2430
      %v2447 = vadd.f32 %v2411, %v2431
      %v2448 = vadd.f32 %v2412, %v2432
      %v2449 = vadd.f32 %v2413, %v2433
      %v2450 = vadd.f32 %v2414, %v2434
      %v2451 = vadd.f32 %v2415, %v2435
      %v2452 = vadd.f32 %v2416, %v2436
      %v2453 = vadd.f32 %v2417, %v2437
      %v2454 = vadd.f32 %v2418, %v2438
      %v2455 = vadd.f32 %v2419, %v2439
      %v2456 = vadd.f32 %v2420, %v2440
      %v2457 = vadd.f32 %v2421, %v2441
      %v2458 = vadd.f32 %v2422, %v2442
      %v2459 = vadd.f32 %v2423, %v2443
      %v2460 = vld [vmem:[#allocation2 + $0x9] sm:$0xff]
      %v2461 = vld [vmem:[#allocation2 + $0x11] sm:$0xff]
      %v2462 = vld [vmem:[#allocation2 + $0x29] sm:$0xff]
      %v2463 = vld [vmem:[#allocation2 + $0x31] sm:$0xff]
      %v2464 = vld [vmem:[#allocation2 + $0x49] sm:$0xff]
      %v2465 = vld [vmem:[#allocation2 + $0x51] sm:$0xff]
      %v2466 = vld [vmem:[#allocation2 + $0x69] sm:$0xff]
      %v2467 = vld [vmem:[#allocation2 + $0x71] sm:$0xff]
      %v2468 = vld [vmem:[#allocation2 + $0x89] sm:$0xff]
      %v2469 = vld [vmem:[#allocation2 + $0x91] sm:$0xff]
      %v2470 = vld [vmem:[#allocation2 + $0xa9] sm:$0xff]
      %v2471 = vld [vmem:[#allocation2 + $0xb1] sm:$0xff]
      %v2472 = vld [vmem:[#allocation2 + $0xc9] sm:$0xff]
      %v2473 = vld [vmem:[#allocation2 + $0xd1] sm:$0xff]
      %v2474 = vld [vmem:[#allocation2 + $0xe9] sm:$0xff]
      %v2475 = vld [vmem:[#allocation2 + $0xf1] sm:$0xff]
      %v2476 = vld [vmem:[#allocation2 + $0x109] sm:$0xff]
      %v2477 = vld [vmem:[#allocation2 + $0x111] sm:$0xff]
      %v2478 = vld [vmem:[#allocation2 + $0x129] sm:$0xff]
      %v2479 = vld [vmem:[#allocation2 + $0x131] sm:$0xff]
      %v2480 = vld [vmem:[#allocation2 + $0x149] sm:$0xff]
      %v2481 = vld [vmem:[#allocation2 + $0x151] sm:$0xff]
      %v2482 = vld [vmem:[#allocation2 + $0x169] sm:$0xff]
      %v2483 = vld [vmem:[#allocation2 + $0x171] sm:$0xff]
      %v2484 = vld [vmem:[#allocation2 + $0x189] sm:$0xff]
      %v2485 = vld [vmem:[#allocation2 + $0x191] sm:$0xff]
      %v2486 = vld [vmem:[#allocation2 + $0x1a9] sm:$0xff]
      %v2487 = vld [vmem:[#allocation2 + $0x1b1] sm:$0xff]
      %v2488 = vlaneseq
      %v2489 = vshrl.u32 %v2488, 7
      %v2490 = vsub.s32 4, %v2489
      %v2491 = vrot.slane %v1397, %v2490
      %v2492 = vmul.f32 %v2460, %v2491
      %v2493 = vmul.f32 %v2461, %v2491
      %v2494 = vmul.f32 %v2462, %v2491
      %v2495 = vmul.f32 %v2463, %v2491
      %v2496 = vmul.f32 %v2464, %v2491
      %v2497 = vmul.f32 %v2465, %v2491
      %v2498 = vmul.f32 %v2466, %v2491
      %v2499 = vmul.f32 %v2467, %v2491
      %v2500 = vmul.f32 %v2468, %v2491
      %v2501 = vmul.f32 %v2469, %v2491
      %v2502 = vmul.f32 %v2470, %v2491
      %v2503 = vmul.f32 %v2471, %v2491
      %v2504 = vmul.f32 %v2472, %v2491
      %v2505 = vmul.f32 %v2473, %v2491
      %v2506 = vmul.f32 %v2474, %v2491
      %v2507 = vmul.f32 %v2475, %v2491
      %v2508 = vlaneseq
      %v2509 = vshrl.u32 %v2508, 7
      %v2510 = vsub.s32 3, %v2509
      %v2511 = vrot.slane %v1398, %v2510
      %v2512 = vmul.f32 %v2462, %v2511
      %v2513 = vmul.f32 %v2463, %v2511
      %v2514 = vmul.f32 %v2464, %v2511
      %v2515 = vmul.f32 %v2465, %v2511
      %v2516 = vmul.f32 %v2466, %v2511
      %v2517 = vmul.f32 %v2467, %v2511
      %v2518 = vmul.f32 %v2468, %v2511
      %v2519 = vmul.f32 %v2469, %v2511
      %v2520 = vmul.f32 %v2470, %v2511
      %v2521 = vmul.f32 %v2471, %v2511
      %v2522 = vmul.f32 %v2472, %v2511
      %v2523 = vmul.f32 %v2473, %v2511
      %v2524 = vmul.f32 %v2474, %v2511
      %v2525 = vmul.f32 %v2475, %v2511
      %v2526 = vmul.f32 %v2476, %v2511
      %v2527 = vmul.f32 %v2477, %v2511
      %v2528 = vadd.f32 %v2492, %v2512
      %v2529 = vadd.f32 %v2493, %v2513
      %v2530 = vadd.f32 %v2494, %v2514
      %v2531 = vadd.f32 %v2495, %v2515
      %v2532 = vadd.f32 %v2496, %v2516
      %v2533 = vadd.f32 %v2497, %v2517
      %v2534 = vadd.f32 %v2498, %v2518
      %v2535 = vadd.f32 %v2499, %v2519
      %v2536 = vadd.f32 %v2500, %v2520
      %v2537 = vadd.f32 %v2501, %v2521
      %v2538 = vadd.f32 %v2502, %v2522
      %v2539 = vadd.f32 %v2503, %v2523
      %v2540 = vadd.f32 %v2504, %v2524
      %v2541 = vadd.f32 %v2505, %v2525
      %v2542 = vadd.f32 %v2506, %v2526
      %v2543 = vadd.f32 %v2507, %v2527
      %v2544 = vlaneseq
      %v2545 = vshrl.u32 %v2544, 7
      %v2546 = vsub.s32 2, %v2545
      %v2547 = vrot.slane %v1399, %v2546
      %v2548 = vmul.f32 %v2464, %v2547
      %v2549 = vmul.f32 %v2465, %v2547
      %v2550 = vmul.f32 %v2466, %v2547
      %v2551 = vmul.f32 %v2467, %v2547
      %v2552 = vmul.f32 %v2468, %v2547
      %v2553 = vmul.f32 %v2469, %v2547
      %v2554 = vmul.f32 %v2470, %v2547
      %v2555 = vmul.f32 %v2471, %v2547
      %v2556 = vmul.f32 %v2472, %v2547
      %v2557 = vmul.f32 %v2473, %v2547
      %v2558 = vmul.f32 %v2474, %v2547
      %v2559 = vmul.f32 %v2475, %v2547
      %v2560 = vmul.f32 %v2476, %v2547
      %v2561 = vmul.f32 %v2477, %v2547
      %v2562 = vmul.f32 %v2478, %v2547
      %v2563 = vmul.f32 %v2479, %v2547
      %v2564 = vadd.f32 %v2528, %v2548
      %v2565 = vadd.f32 %v2529, %v2549
      %v2566 = vadd.f32 %v2530, %v2550
      %v2567 = vadd.f32 %v2531, %v2551
      %v2568 = vadd.f32 %v2532, %v2552
      %v2569 = vadd.f32 %v2533, %v2553
      %v2570 = vadd.f32 %v2534, %v2554
      %v2571 = vadd.f32 %v2535, %v2555
      %v2572 = vadd.f32 %v2536, %v2556
      %v2573 = vadd.f32 %v2537, %v2557
      %v2574 = vadd.f32 %v2538, %v2558
      %v2575 = vadd.f32 %v2539, %v2559
      %v2576 = vadd.f32 %v2540, %v2560
      %v2577 = vadd.f32 %v2541, %v2561
      %v2578 = vadd.f32 %v2542, %v2562
      %v2579 = vadd.f32 %v2543, %v2563
      %v2580 = vlaneseq
      %v2581 = vshrl.u32 %v2580, 7
      %v2582 = vsub.s32 1, %v2581
      %v2583 = vrot.slane %v1400, %v2582
      %v2584 = vmul.f32 %v2466, %v2583
      %v2585 = vmul.f32 %v2467, %v2583
      %v2586 = vmul.f32 %v2468, %v2583
      %v2587 = vmul.f32 %v2469, %v2583
      %v2588 = vmul.f32 %v2470, %v2583
      %v2589 = vmul.f32 %v2471, %v2583
      %v2590 = vmul.f32 %v2472, %v2583
      %v2591 = vmul.f32 %v2473, %v2583
      %v2592 = vmul.f32 %v2474, %v2583
      %v2593 = vmul.f32 %v2475, %v2583
      %v2594 = vmul.f32 %v2476, %v2583
      %v2595 = vmul.f32 %v2477, %v2583
      %v2596 = vmul.f32 %v2478, %v2583
      %v2597 = vmul.f32 %v2479, %v2583
      %v2598 = vmul.f32 %v2480, %v2583
      %v2599 = vmul.f32 %v2481, %v2583
      %v2600 = vadd.f32 %v2564, %v2584
      %v2601 = vadd.f32 %v2565, %v2585
      %v2602 = vadd.f32 %v2566, %v2586
      %v2603 = vadd.f32 %v2567, %v2587
      %v2604 = vadd.f32 %v2568, %v2588
      %v2605 = vadd.f32 %v2569, %v2589
      %v2606 = vadd.f32 %v2570, %v2590
      %v2607 = vadd.f32 %v2571, %v2591
      %v2608 = vadd.f32 %v2572, %v2592
      %v2609 = vadd.f32 %v2573, %v2593
      %v2610 = vadd.f32 %v2574, %v2594
      %v2611 = vadd.f32 %v2575, %v2595
      %v2612 = vadd.f32 %v2576, %v2596
      %v2613 = vadd.f32 %v2577, %v2597
      %v2614 = vadd.f32 %v2578, %v2598
      %v2615 = vadd.f32 %v2579, %v2599
      %v2616 = vlaneseq
      %v2617 = vshrl.u32 %v2616, 7
      %v2618 = vsub.s32 0, %v2617
      %v2619 = vrot.slane %v1401, %v2618
      %v2620 = vmul.f32 %v2468, %v2619
      %v2621 = vmul.f32 %v2469, %v2619
      %v2622 = vmul.f32 %v2470, %v2619
      %v2623 = vmul.f32 %v2471, %v2619
      %v2624 = vmul.f32 %v2472, %v2619
      %v2625 = vmul.f32 %v2473, %v2619
      %v2626 = vmul.f32 %v2474, %v2619
      %v2627 = vmul.f32 %v2475, %v2619
      %v2628 = vmul.f32 %v2476, %v2619
      %v2629 = vmul.f32 %v2477, %v2619
      %v2630 = vmul.f32 %v2478, %v2619
      %v2631 = vmul.f32 %v2479, %v2619
      %v2632 = vmul.f32 %v2480, %v2619
      %v2633 = vmul.f32 %v2481, %v2619
      %v2634 = vmul.f32 %v2482, %v2619
      %v2635 = vmul.f32 %v2483, %v2619
      %v2636 = vadd.f32 %v2600, %v2620
      %v2637 = vadd.f32 %v2601, %v2621
      %v2638 = vadd.f32 %v2602, %v2622
      %v2639 = vadd.f32 %v2603, %v2623
      %v2640 = vadd.f32 %v2604, %v2624
      %v2641 = vadd.f32 %v2605, %v2625
      %v2642 = vadd.f32 %v2606, %v2626
      %v2643 = vadd.f32 %v2607, %v2627
      %v2644 = vadd.f32 %v2608, %v2628
      %v2645 = vadd.f32 %v2609, %v2629
      %v2646 = vadd.f32 %v2610, %v2630
      %v2647 = vadd.f32 %v2611, %v2631
      %v2648 = vadd.f32 %v2612, %v2632
      %v2649 = vadd.f32 %v2613, %v2633
      %v2650 = vadd.f32 %v2614, %v2634
      %v2651 = vadd.f32 %v2615, %v2635
      %v2652 = vlaneseq
      %v2653 = vshrl.u32 %v2652, 7
      %v2654 = vsub.s32 7, %v2653
      %v2655 = vrot.slane %v1401, %v2654
      %v2656 = vmul.f32 %v2470, %v2655
      %v2657 = vmul.f32 %v2471, %v2655
      %v2658 = vmul.f32 %v2472, %v2655
      %v2659 = vmul.f32 %v2473, %v2655
      %v2660 = vmul.f32 %v2474, %v2655
      %v2661 = vmul.f32 %v2475, %v2655
      %v2662 = vmul.f32 %v2476, %v2655
      %v2663 = vmul.f32 %v2477, %v2655
      %v2664 = vmul.f32 %v2478, %v2655
      %v2665 = vmul.f32 %v2479, %v2655
      %v2666 = vmul.f32 %v2480, %v2655
      %v2667 = vmul.f32 %v2481, %v2655
      %v2668 = vmul.f32 %v2482, %v2655
      %v2669 = vmul.f32 %v2483, %v2655
      %v2670 = vmul.f32 %v2484, %v2655
      %v2671 = vmul.f32 %v2485, %v2655
      %v2672 = vadd.f32 %v2636, %v2656
      %v2673 = vadd.f32 %v2637, %v2657
      %v2674 = vadd.f32 %v2638, %v2658
      %v2675 = vadd.f32 %v2639, %v2659
      %v2676 = vadd.f32 %v2640, %v2660
      %v2677 = vadd.f32 %v2641, %v2661
      %v2678 = vadd.f32 %v2642, %v2662
      %v2679 = vadd.f32 %v2643, %v2663
      %v2680 = vadd.f32 %v2644, %v2664
      %v2681 = vadd.f32 %v2645, %v2665
      %v2682 = vadd.f32 %v2646, %v2666
      %v2683 = vadd.f32 %v2647, %v2667
      %v2684 = vadd.f32 %v2648, %v2668
      %v2685 = vadd.f32 %v2649, %v2669
      %v2686 = vadd.f32 %v2650, %v2670
      %v2687 = vadd.f32 %v2651, %v2671
      %v2688 = vlaneseq
      %v2689 = vshrl.u32 %v2688, 7
      %v2690 = vsub.s32 6, %v2689
      %v2691 = vrot.slane %v1402, %v2690
      %v2692 = vmul.f32 %v2472, %v2691
      %v2693 = vmul.f32 %v2473, %v2691
      %v2694 = vmul.f32 %v2474, %v2691
      %v2695 = vmul.f32 %v2475, %v2691
      %v2696 = vmul.f32 %v2476, %v2691
      %v2697 = vmul.f32 %v2477, %v2691
      %v2698 = vmul.f32 %v2478, %v2691
      %v2699 = vmul.f32 %v2479, %v2691
      %v2700 = vmul.f32 %v2480, %v2691
      %v2701 = vmul.f32 %v2481, %v2691
      %v2702 = vmul.f32 %v2482, %v2691
      %v2703 = vmul.f32 %v2483, %v2691
      %v2704 = vmul.f32 %v2484, %v2691
      %v2705 = vmul.f32 %v2485, %v2691
      %v2706 = vmul.f32 %v2486, %v2691
      %v2707 = vmul.f32 %v2487, %v2691
      %v2708 = vadd.f32 %v2672, %v2692
      %v2709 = vadd.f32 %v2673, %v2693
      %v2710 = vadd.f32 %v2674, %v2694
      %v2711 = vadd.f32 %v2675, %v2695
      %v2712 = vadd.f32 %v2676, %v2696
      %v2713 = vadd.f32 %v2677, %v2697
      %v2714 = vadd.f32 %v2678, %v2698
      %v2715 = vadd.f32 %v2679, %v2699
      %v2716 = vadd.f32 %v2680, %v2700
      %v2717 = vadd.f32 %v2681, %v2701
      %v2718 = vadd.f32 %v2682, %v2702
      %v2719 = vadd.f32 %v2683, %v2703
      %v2720 = vadd.f32 %v2684, %v2704
      %v2721 = vadd.f32 %v2685, %v2705
      %v2722 = vadd.f32 %v2686, %v2706
      %v2723 = vadd.f32 %v2687, %v2707
      %v2724 = vld [vmem:[#allocation2 + $0xa] sm:$0xff]
      %v2725 = vld [vmem:[#allocation2 + $0x12] sm:$0xff]
      %v2726 = vld [vmem:[#allocation2 + $0x2a] sm:$0xff]
      %v2727 = vld [vmem:[#allocation2 + $0x32] sm:$0xff]
      %v2728 = vld [vmem:[#allocation2 + $0x4a] sm:$0xff]
      %v2729 = vld [vmem:[#allocation2 + $0x52] sm:$0xff]
      %v2730 = vld [vmem:[#allocation2 + $0x6a] sm:$0xff]
      %v2731 = vld [vmem:[#allocation2 + $0x72] sm:$0xff]
      %v2732 = vld [vmem:[#allocation2 + $0x8a] sm:$0xff]
      %v2733 = vld [vmem:[#allocation2 + $0x92] sm:$0xff]
      %v2734 = vld [vmem:[#allocation2 + $0xaa] sm:$0xff]
      %v2735 = vld [vmem:[#allocation2 + $0xb2] sm:$0xff]
      %v2736 = vld [vmem:[#allocation2 + $0xca] sm:$0xff]
      %v2737 = vld [vmem:[#allocation2 + $0xd2] sm:$0xff]
      %v2738 = vld [vmem:[#allocation2 + $0xea] sm:$0xff]
      %v2739 = vld [vmem:[#allocation2 + $0xf2] sm:$0xff]
      %v2740 = vld [vmem:[#allocation2 + $0x10a] sm:$0xff]
      %v2741 = vld [vmem:[#allocation2 + $0x112] sm:$0xff]
      %v2742 = vld [vmem:[#allocation2 + $0x12a] sm:$0xff]
      %v2743 = vld [vmem:[#allocation2 + $0x132] sm:$0xff]
      %v2744 = vld [vmem:[#allocation2 + $0x14a] sm:$0xff]
      %v2745 = vld [vmem:[#allocation2 + $0x152] sm:$0xff]
      %v2746 = vld [vmem:[#allocation2 + $0x16a] sm:$0xff]
      %v2747 = vld [vmem:[#allocation2 + $0x172] sm:$0xff]
      %v2748 = vld [vmem:[#allocation2 + $0x18a] sm:$0xff]
      %v2749 = vld [vmem:[#allocation2 + $0x192] sm:$0xff]
      %v2750 = vld [vmem:[#allocation2 + $0x1aa] sm:$0xff]
      %v2751 = vld [vmem:[#allocation2 + $0x1b2] sm:$0xff]
      %v2752 = vlaneseq
      %v2753 = vshrl.u32 %v2752, 7
      %v2754 = vsub.s32 5, %v2753
      %v2755 = vrot.slane %v1397, %v2754
      %v2756 = vmul.f32 %v2724, %v2755
      %v2757 = vmul.f32 %v2725, %v2755
      %v2758 = vmul.f32 %v2726, %v2755
      %v2759 = vmul.f32 %v2727, %v2755
      %v2760 = vmul.f32 %v2728, %v2755
      %v2761 = vmul.f32 %v2729, %v2755
      %v2762 = vmul.f32 %v2730, %v2755
      %v2763 = vmul.f32 %v2731, %v2755
      %v2764 = vmul.f32 %v2732, %v2755
      %v2765 = vmul.f32 %v2733, %v2755
      %v2766 = vmul.f32 %v2734, %v2755
      %v2767 = vmul.f32 %v2735, %v2755
      %v2768 = vmul.f32 %v2736, %v2755
      %v2769 = vmul.f32 %v2737, %v2755
      %v2770 = vmul.f32 %v2738, %v2755
      %v2771 = vmul.f32 %v2739, %v2755
      %v2772 = vlaneseq
      %v2773 = vshrl.u32 %v2772, 7
      %v2774 = vsub.s32 4, %v2773
      %v2775 = vrot.slane %v1398, %v2774
      %v2776 = vmul.f32 %v2726, %v2775
      %v2777 = vmul.f32 %v2727, %v2775
      %v2778 = vmul.f32 %v2728, %v2775
      %v2779 = vmul.f32 %v2729, %v2775
      %v2780 = vmul.f32 %v2730, %v2775
      %v2781 = vmul.f32 %v2731, %v2775
      %v2782 = vmul.f32 %v2732, %v2775
      %v2783 = vmul.f32 %v2733, %v2775
      %v2784 = vmul.f32 %v2734, %v2775
      %v2785 = vmul.f32 %v2735, %v2775
      %v2786 = vmul.f32 %v2736, %v2775
      %v2787 = vmul.f32 %v2737, %v2775
      %v2788 = vmul.f32 %v2738, %v2775
      %v2789 = vmul.f32 %v2739, %v2775
      %v2790 = vmul.f32 %v2740, %v2775
      %v2791 = vmul.f32 %v2741, %v2775
      %v2792 = vadd.f32 %v2756, %v2776
      %v2793 = vadd.f32 %v2757, %v2777
      %v2794 = vadd.f32 %v2758, %v2778
      %v2795 = vadd.f32 %v2759, %v2779
      %v2796 = vadd.f32 %v2760, %v2780
      %v2797 = vadd.f32 %v2761, %v2781
      %v2798 = vadd.f32 %v2762, %v2782
      %v2799 = vadd.f32 %v2763, %v2783
      %v2800 = vadd.f32 %v2764, %v2784
      %v2801 = vadd.f32 %v2765, %v2785
      %v2802 = vadd.f32 %v2766, %v2786
      %v2803 = vadd.f32 %v2767, %v2787
      %v2804 = vadd.f32 %v2768, %v2788
      %v2805 = vadd.f32 %v2769, %v2789
      %v2806 = vadd.f32 %v2770, %v2790
      %v2807 = vadd.f32 %v2771, %v2791
      %v2808 = vlaneseq
      %v2809 = vshrl.u32 %v2808, 7
      %v2810 = vsub.s32 3, %v2809
      %v2811 = vrot.slane %v1399, %v2810
      %v2812 = vmul.f32 %v2728, %v2811
      %v2813 = vmul.f32 %v2729, %v2811
      %v2814 = vmul.f32 %v2730, %v2811
      %v2815 = vmul.f32 %v2731, %v2811
      %v2816 = vmul.f32 %v2732, %v2811
      %v2817 = vmul.f32 %v2733, %v2811
      %v2818 = vmul.f32 %v2734, %v2811
      %v2819 = vmul.f32 %v2735, %v2811
      %v2820 = vmul.f32 %v2736, %v2811
      %v2821 = vmul.f32 %v2737, %v2811
      %v2822 = vmul.f32 %v2738, %v2811
      %v2823 = vmul.f32 %v2739, %v2811
      %v2824 = vmul.f32 %v2740, %v2811
      %v2825 = vmul.f32 %v2741, %v2811
      %v2826 = vmul.f32 %v2742, %v2811
      %v2827 = vmul.f32 %v2743, %v2811
      %v2828 = vadd.f32 %v2792, %v2812
      %v2829 = vadd.f32 %v2793, %v2813
      %v2830 = vadd.f32 %v2794, %v2814
      %v2831 = vadd.f32 %v2795, %v2815
      %v2832 = vadd.f32 %v2796, %v2816
      %v2833 = vadd.f32 %v2797, %v2817
      %v2834 = vadd.f32 %v2798, %v2818
      %v2835 = vadd.f32 %v2799, %v2819
      %v2836 = vadd.f32 %v2800, %v2820
      %v2837 = vadd.f32 %v2801, %v2821
      %v2838 = vadd.f32 %v2802, %v2822
      %v2839 = vadd.f32 %v2803, %v2823
      %v2840 = vadd.f32 %v2804, %v2824
      %v2841 = vadd.f32 %v2805, %v2825
      %v2842 = vadd.f32 %v2806, %v2826
      %v2843 = vadd.f32 %v2807, %v2827
      %v2844 = vlaneseq
      %v2845 = vshrl.u32 %v2844, 7
      %v2846 = vsub.s32 2, %v2845
      %v2847 = vrot.slane %v1400, %v2846
      %v2848 = vmul.f32 %v2730, %v2847
      %v2849 = vmul.f32 %v2731, %v2847
      %v2850 = vmul.f32 %v2732, %v2847
      %v2851 = vmul.f32 %v2733, %v2847
      %v2852 = vmul.f32 %v2734, %v2847
      %v2853 = vmul.f32 %v2735, %v2847
      %v2854 = vmul.f32 %v2736, %v2847
      %v2855 = vmul.f32 %v2737, %v2847
      %v2856 = vmul.f32 %v2738, %v2847
      %v2857 = vmul.f32 %v2739, %v2847
      %v2858 = vmul.f32 %v2740, %v2847
      %v2859 = vmul.f32 %v2741, %v2847
      %v2860 = vmul.f32 %v2742, %v2847
      %v2861 = vmul.f32 %v2743, %v2847
      %v2862 = vmul.f32 %v2744, %v2847
      %v2863 = vmul.f32 %v2745, %v2847
      %v2864 = vadd.f32 %v2828, %v2848
      %v2865 = vadd.f32 %v2829, %v2849
      %v2866 = vadd.f32 %v2830, %v2850
      %v2867 = vadd.f32 %v2831, %v2851
      %v2868 = vadd.f32 %v2832, %v2852
      %v2869 = vadd.f32 %v2833, %v2853
      %v2870 = vadd.f32 %v2834, %v2854
      %v2871 = vadd.f32 %v2835, %v2855
      %v2872 = vadd.f32 %v2836, %v2856
      %v2873 = vadd.f32 %v2837, %v2857
      %v2874 = vadd.f32 %v2838, %v2858
      %v2875 = vadd.f32 %v2839, %v2859
      %v2876 = vadd.f32 %v2840, %v2860
      %v2877 = vadd.f32 %v2841, %v2861
      %v2878 = vadd.f32 %v2842, %v2862
      %v2879 = vadd.f32 %v2843, %v2863
      %v2880 = vlaneseq
      %v2881 = vshrl.u32 %v2880, 7
      %v2882 = vsub.s32 1, %v2881
      %v2883 = vrot.slane %v1401, %v2882
      %v2884 = vmul.f32 %v2732, %v2883
      %v2885 = vmul.f32 %v2733, %v2883
      %v2886 = vmul.f32 %v2734, %v2883
      %v2887 = vmul.f32 %v2735, %v2883
      %v2888 = vmul.f32 %v2736, %v2883
      %v2889 = vmul.f32 %v2737, %v2883
      %v2890 = vmul.f32 %v2738, %v2883
      %v2891 = vmul.f32 %v2739, %v2883
      %v2892 = vmul.f32 %v2740, %v2883
      %v2893 = vmul.f32 %v2741, %v2883
      %v2894 = vmul.f32 %v2742, %v2883
      %v2895 = vmul.f32 %v2743, %v2883
      %v2896 = vmul.f32 %v2744, %v2883
      %v2897 = vmul.f32 %v2745, %v2883
      %v2898 = vmul.f32 %v2746, %v2883
      %v2899 = vmul.f32 %v2747, %v2883
      %v2900 = vadd.f32 %v2864, %v2884
      %v2901 = vadd.f32 %v2865, %v2885
      %v2902 = vadd.f32 %v2866, %v2886
      %v2903 = vadd.f32 %v2867, %v2887
      %v2904 = vadd.f32 %v2868, %v2888
      %v2905 = vadd.f32 %v2869, %v2889
      %v2906 = vadd.f32 %v2870, %v2890
      %v2907 = vadd.f32 %v2871, %v2891
      %v2908 = vadd.f32 %v2872, %v2892
      %v2909 = vadd.f32 %v2873, %v2893
      %v2910 = vadd.f32 %v2874, %v2894
      %v2911 = vadd.f32 %v2875, %v2895
      %v2912 = vadd.f32 %v2876, %v2896
      %v2913 = vadd.f32 %v2877, %v2897
      %v2914 = vadd.f32 %v2878, %v2898
      %v2915 = vadd.f32 %v2879, %v2899
      %v2916 = vlaneseq
      %v2917 = vshrl.u32 %v2916, 7
      %v2918 = vsub.s32 0, %v2917
      %v2919 = vrot.slane %v1402, %v2918
      %v2920 = vmul.f32 %v2734, %v2919
      %v2921 = vmul.f32 %v2735, %v2919
      %v2922 = vmul.f32 %v2736, %v2919
      %v2923 = vmul.f32 %v2737, %v2919
      %v2924 = vmul.f32 %v2738, %v2919
      %v2925 = vmul.f32 %v2739, %v2919
      %v2926 = vmul.f32 %v2740, %v2919
      %v2927 = vmul.f32 %v2741, %v2919
      %v2928 = vmul.f32 %v2742, %v2919
      %v2929 = vmul.f32 %v2743, %v2919
      %v2930 = vmul.f32 %v2744, %v2919
      %v2931 = vmul.f32 %v2745, %v2919
      %v2932 = vmul.f32 %v2746, %v2919
      %v2933 = vmul.f32 %v2747, %v2919
      %v2934 = vmul.f32 %v2748, %v2919
      %v2935 = vmul.f32 %v2749, %v2919
      %v2936 = vadd.f32 %v2900, %v2920
      %v2937 = vadd.f32 %v2901, %v2921
      %v2938 = vadd.f32 %v2902, %v2922
      %v2939 = vadd.f32 %v2903, %v2923
      %v2940 = vadd.f32 %v2904, %v2924
      %v2941 = vadd.f32 %v2905, %v2925
      %v2942 = vadd.f32 %v2906, %v2926
      %v2943 = vadd.f32 %v2907, %v2927
      %v2944 = vadd.f32 %v2908, %v2928
      %v2945 = vadd.f32 %v2909, %v2929
      %v2946 = vadd.f32 %v2910, %v2930
      %v2947 = vadd.f32 %v2911, %v2931
      %v2948 = vadd.f32 %v2912, %v2932
      %v2949 = vadd.f32 %v2913, %v2933
      %v2950 = vadd.f32 %v2914, %v2934
      %v2951 = vadd.f32 %v2915, %v2935
      %v2952 = vlaneseq
      %v2953 = vshrl.u32 %v2952, 7
      %v2954 = vsub.s32 7, %v2953
      %v2955 = vrot.slane %v1402, %v2954
      %v2956 = vmul.f32 %v2736, %v2955
      %v2957 = vmul.f32 %v2737, %v2955
      %v2958 = vmul.f32 %v2738, %v2955
      %v2959 = vmul.f32 %v2739, %v2955
      %v2960 = vmul.f32 %v2740, %v2955
      %v2961 = vmul.f32 %v2741, %v2955
      %v2962 = vmul.f32 %v2742, %v2955
      %v2963 = vmul.f32 %v2743, %v2955
      %v2964 = vmul.f32 %v2744, %v2955
      %v2965 = vmul.f32 %v2745, %v2955
      %v2966 = vmul.f32 %v2746, %v2955
      %v2967 = vmul.f32 %v2747, %v2955
      %v2968 = vmul.f32 %v2748, %v2955
      %v2969 = vmul.f32 %v2749, %v2955
      %v2970 = vmul.f32 %v2750, %v2955
      %v2971 = vmul.f32 %v2751, %v2955
      %v2972 = vadd.f32 %v2936, %v2956
      %v2973 = vadd.f32 %v2937, %v2957
      %v2974 = vadd.f32 %v2938, %v2958
      %v2975 = vadd.f32 %v2939, %v2959
      %v2976 = vadd.f32 %v2940, %v2960
      %v2977 = vadd.f32 %v2941, %v2961
      %v2978 = vadd.f32 %v2942, %v2962
      %v2979 = vadd.f32 %v2943, %v2963
      %v2980 = vadd.f32 %v2944, %v2964
      %v2981 = vadd.f32 %v2945, %v2965
      %v2982 = vadd.f32 %v2946, %v2966
      %v2983 = vadd.f32 %v2947, %v2967
      %v2984 = vadd.f32 %v2948, %v2968
      %v2985 = vadd.f32 %v2949, %v2969
      %v2986 = vadd.f32 %v2950, %v2970
      %v2987 = vadd.f32 %v2951, %v2971
      %v2988 = vld [vmem:[#allocation2 + $0xb] sm:$0xff]
      %v2989 = vld [vmem:[#allocation2 + $0x13] sm:$0xff]
      %v2990 = vld [vmem:[#allocation2 + $0x2b] sm:$0xff]
      %v2991 = vld [vmem:[#allocation2 + $0x33] sm:$0xff]
      %v2992 = vld [vmem:[#allocation2 + $0x4b] sm:$0xff]
      %v2993 = vld [vmem:[#allocation2 + $0x53] sm:$0xff]
      %v2994 = vld [vmem:[#allocation2 + $0x6b] sm:$0xff]
      %v2995 = vld [vmem:[#allocation2 + $0x73] sm:$0xff]
      %v2996 = vld [vmem:[#allocation2 + $0x8b] sm:$0xff]
      %v2997 = vld [vmem:[#allocation2 + $0x93] sm:$0xff]
      %v2998 = vld [vmem:[#allocation2 + $0xab] sm:$0xff]
      %v2999 = vld [vmem:[#allocation2 + $0xb3] sm:$0xff]
      %v3000 = vld [vmem:[#allocation2 + $0xcb] sm:$0xff]
      %v3001 = vld [vmem:[#allocation2 + $0xd3] sm:$0xff]
      %v3002 = vld [vmem:[#allocation2 + $0xeb] sm:$0xff]
      %v3003 = vld [vmem:[#allocation2 + $0xf3] sm:$0xff]
      %v3004 = vld [vmem:[#allocation2 + $0x10b] sm:$0xff]
      %v3005 = vld [vmem:[#allocation2 + $0x113] sm:$0xff]
      %v3006 = vld [vmem:[#allocation2 + $0x12b] sm:$0xff]
      %v3007 = vld [vmem:[#allocation2 + $0x133] sm:$0xff]
      %v3008 = vld [vmem:[#allocation2 + $0x14b] sm:$0xff]
      %v3009 = vld [vmem:[#allocation2 + $0x153] sm:$0xff]
      %v3010 = vld [vmem:[#allocation2 + $0x16b] sm:$0xff]
      %v3011 = vld [vmem:[#allocation2 + $0x173] sm:$0xff]
      %v3012 = vld [vmem:[#allocation2 + $0x18b] sm:$0xff]
      %v3013 = vld [vmem:[#allocation2 + $0x193] sm:$0xff]
      %v3014 = vld [vmem:[#allocation2 + $0x1ab] sm:$0xff]
      %v3015 = vld [vmem:[#allocation2 + $0x1b3] sm:$0xff]
      %v3016 = vlaneseq
      %v3017 = vshrl.u32 %v3016, 7
      %v3018 = vsub.s32 6, %v3017
      %v3019 = vrot.slane %v1397, %v3018
      %v3020 = vmul.f32 %v2988, %v3019
      %v3021 = vmul.f32 %v2989, %v3019
      %v3022 = vmul.f32 %v2990, %v3019
      %v3023 = vmul.f32 %v2991, %v3019
      %v3024 = vmul.f32 %v2992, %v3019
      %v3025 = vmul.f32 %v2993, %v3019
      %v3026 = vmul.f32 %v2994, %v3019
      %v3027 = vmul.f32 %v2995, %v3019
      %v3028 = vmul.f32 %v2996, %v3019
      %v3029 = vmul.f32 %v2997, %v3019
      %v3030 = vmul.f32 %v2998, %v3019
      %v3031 = vmul.f32 %v2999, %v3019
      %v3032 = vmul.f32 %v3000, %v3019
      %v3033 = vmul.f32 %v3001, %v3019
      %v3034 = vmul.f32 %v3002, %v3019
      %v3035 = vmul.f32 %v3003, %v3019
      %v3036 = vlaneseq
      %v3037 = vshrl.u32 %v3036, 7
      %v3038 = vsub.s32 5, %v3037
      %v3039 = vrot.slane %v1398, %v3038
      %v3040 = vmul.f32 %v2990, %v3039
      %v3041 = vmul.f32 %v2991, %v3039
      %v3042 = vmul.f32 %v2992, %v3039
      %v3043 = vmul.f32 %v2993, %v3039
      %v3044 = vmul.f32 %v2994, %v3039
      %v3045 = vmul.f32 %v2995, %v3039
      %v3046 = vmul.f32 %v2996, %v3039
      %v3047 = vmul.f32 %v2997, %v3039
      %v3048 = vmul.f32 %v2998, %v3039
      %v3049 = vmul.f32 %v2999, %v3039
      %v3050 = vmul.f32 %v3000, %v3039
      %v3051 = vmul.f32 %v3001, %v3039
      %v3052 = vmul.f32 %v3002, %v3039
      %v3053 = vmul.f32 %v3003, %v3039
      %v3054 = vmul.f32 %v3004, %v3039
      %v3055 = vmul.f32 %v3005, %v3039
      %v3056 = vadd.f32 %v3020, %v3040
      %v3057 = vadd.f32 %v3021, %v3041
      %v3058 = vadd.f32 %v3022, %v3042
      %v3059 = vadd.f32 %v3023, %v3043
      %v3060 = vadd.f32 %v3024, %v3044
      %v3061 = vadd.f32 %v3025, %v3045
      %v3062 = vadd.f32 %v3026, %v3046
      %v3063 = vadd.f32 %v3027, %v3047
      %v3064 = vadd.f32 %v3028, %v3048
      %v3065 = vadd.f32 %v3029, %v3049
      %v3066 = vadd.f32 %v3030, %v3050
      %v3067 = vadd.f32 %v3031, %v3051
      %v3068 = vadd.f32 %v3032, %v3052
      %v3069 = vadd.f32 %v3033, %v3053
      %v3070 = vadd.f32 %v3034, %v3054
      %v3071 = vadd.f32 %v3035, %v3055
      %v3072 = vlaneseq
      %v3073 = vshrl.u32 %v3072, 7
      %v3074 = vsub.s32 4, %v3073
      %v3075 = vrot.slane %v1399, %v3074
      %v3076 = vmul.f32 %v2992, %v3075
      %v3077 = vmul.f32 %v2993, %v3075
      %v3078 = vmul.f32 %v2994, %v3075
      %v3079 = vmul.f32 %v2995, %v3075
      %v3080 = vmul.f32 %v2996, %v3075
      %v3081 = vmul.f32 %v2997, %v3075
      %v3082 = vmul.f32 %v2998, %v3075
      %v3083 = vmul.f32 %v2999, %v3075
      %v3084 = vmul.f32 %v3000, %v3075
      %v3085 = vmul.f32 %v3001, %v3075
      %v3086 = vmul.f32 %v3002, %v3075
      %v3087 = vmul.f32 %v3003, %v3075
      %v3088 = vmul.f32 %v3004, %v3075
      %v3089 = vmul.f32 %v3005, %v3075
      %v3090 = vmul.f32 %v3006, %v3075
      %v3091 = vmul.f32 %v3007, %v3075
      %v3092 = vadd.f32 %v3056, %v3076
      %v3093 = vadd.f32 %v3057, %v3077
      %v3094 = vadd.f32 %v3058, %v3078
      %v3095 = vadd.f32 %v3059, %v3079
      %v3096 = vadd.f32 %v3060, %v3080
      %v3097 = vadd.f32 %v3061, %v3081
      %v3098 = vadd.f32 %v3062, %v3082
      %v3099 = vadd.f32 %v3063, %v3083
      %v3100 = vadd.f32 %v3064, %v3084
      %v3101 = vadd.f32 %v3065, %v3085
      %v3102 = vadd.f32 %v3066, %v3086
      %v3103 = vadd.f32 %v3067, %v3087
      %v3104 = vadd.f32 %v3068, %v3088
      %v3105 = vadd.f32 %v3069, %v3089
      %v3106 = vadd.f32 %v3070, %v3090
      %v3107 = vadd.f32 %v3071, %v3091
      %v3108 = vlaneseq
      %v3109 = vshrl.u32 %v3108, 7
      %v3110 = vsub.s32 3, %v3109
      %v3111 = vrot.slane %v1400, %v3110
      %v3112 = vmul.f32 %v2994, %v3111
      %v3113 = vmul.f32 %v2995, %v3111
      %v3114 = vmul.f32 %v2996, %v3111
      %v3115 = vmul.f32 %v2997, %v3111
      %v3116 = vmul.f32 %v2998, %v3111
      %v3117 = vmul.f32 %v2999, %v3111
      %v3118 = vmul.f32 %v3000, %v3111
      %v3119 = vmul.f32 %v3001, %v3111
      %v3120 = vmul.f32 %v3002, %v3111
      %v3121 = vmul.f32 %v3003, %v3111
      %v3122 = vmul.f32 %v3004, %v3111
      %v3123 = vmul.f32 %v3005, %v3111
      %v3124 = vmul.f32 %v3006, %v3111
      %v3125 = vmul.f32 %v3007, %v3111
      %v3126 = vmul.f32 %v3008, %v3111
      %v3127 = vmul.f32 %v3009, %v3111
      %v3128 = vadd.f32 %v3092, %v3112
      %v3129 = vadd.f32 %v3093, %v3113
      %v3130 = vadd.f32 %v3094, %v3114
      %v3131 = vadd.f32 %v3095, %v3115
      %v3132 = vadd.f32 %v3096, %v3116
      %v3133 = vadd.f32 %v3097, %v3117
      %v3134 = vadd.f32 %v3098, %v3118
      %v3135 = vadd.f32 %v3099, %v3119
      %v3136 = vadd.f32 %v3100, %v3120
      %v3137 = vadd.f32 %v3101, %v3121
      %v3138 = vadd.f32 %v3102, %v3122
      %v3139 = vadd.f32 %v3103, %v3123
      %v3140 = vadd.f32 %v3104, %v3124
      %v3141 = vadd.f32 %v3105, %v3125
      %v3142 = vadd.f32 %v3106, %v3126
      %v3143 = vadd.f32 %v3107, %v3127
      %v3144 = vlaneseq
      %v3145 = vshrl.u32 %v3144, 7
      %v3146 = vsub.s32 2, %v3145
      %v3147 = vrot.slane %v1401, %v3146
      %v3148 = vmul.f32 %v2996, %v3147
      %v3149 = vmul.f32 %v2997, %v3147
      %v3150 = vmul.f32 %v2998, %v3147
      %v3151 = vmul.f32 %v2999, %v3147
      %v3152 = vmul.f32 %v3000, %v3147
      %v3153 = vmul.f32 %v3001, %v3147
      %v3154 = vmul.f32 %v3002, %v3147
      %v3155 = vmul.f32 %v3003, %v3147
      %v3156 = vmul.f32 %v3004, %v3147
      %v3157 = vmul.f32 %v3005, %v3147
      %v3158 = vmul.f32 %v3006, %v3147
      %v3159 = vmul.f32 %v3007, %v3147
      %v3160 = vmul.f32 %v3008, %v3147
      %v3161 = vmul.f32 %v3009, %v3147
      %v3162 = vmul.f32 %v3010, %v3147
      %v3163 = vmul.f32 %v3011, %v3147
      %v3164 = vadd.f32 %v3128, %v3148
      %v3165 = vadd.f32 %v3129, %v3149
      %v3166 = vadd.f32 %v3130, %v3150
      %v3167 = vadd.f32 %v3131, %v3151
      %v3168 = vadd.f32 %v3132, %v3152
      %v3169 = vadd.f32 %v3133, %v3153
      %v3170 = vadd.f32 %v3134, %v3154
      %v3171 = vadd.f32 %v3135, %v3155
      %v3172 = vadd.f32 %v3136, %v3156
      %v3173 = vadd.f32 %v3137, %v3157
      %v3174 = vadd.f32 %v3138, %v3158
      %v3175 = vadd.f32 %v3139, %v3159
      %v3176 = vadd.f32 %v3140, %v3160
      %v3177 = vadd.f32 %v3141, %v3161
      %v3178 = vadd.f32 %v3142, %v3162
      %v3179 = vadd.f32 %v3143, %v3163
      %v3180 = vlaneseq
      %v3181 = vshrl.u32 %v3180, 7
      %v3182 = vsub.s32 1, %v3181
      %v3183 = vrot.slane %v1402, %v3182
      %v3184 = vmul.f32 %v2998, %v3183
      %v3185 = vmul.f32 %v2999, %v3183
      %v3186 = vmul.f32 %v3000, %v3183
      %v3187 = vmul.f32 %v3001, %v3183
      %v3188 = vmul.f32 %v3002, %v3183
      %v3189 = vmul.f32 %v3003, %v3183
      %v3190 = vmul.f32 %v3004, %v3183
      %v3191 = vmul.f32 %v3005, %v3183
      %v3192 = vmul.f32 %v3006, %v3183
      %v3193 = vmul.f32 %v3007, %v3183
      %v3194 = vmul.f32 %v3008, %v3183
      %v3195 = vmul.f32 %v3009, %v3183
      %v3196 = vmul.f32 %v3010, %v3183
      %v3197 = vmul.f32 %v3011, %v3183
      %v3198 = vmul.f32 %v3012, %v3183
      %v3199 = vmul.f32 %v3013, %v3183
      %v3200 = vadd.f32 %v3164, %v3184
      %v3201 = vadd.f32 %v3165, %v3185
      %v3202 = vadd.f32 %v3166, %v3186
      %v3203 = vadd.f32 %v3167, %v3187
      %v3204 = vadd.f32 %v3168, %v3188
      %v3205 = vadd.f32 %v3169, %v3189
      %v3206 = vadd.f32 %v3170, %v3190
      %v3207 = vadd.f32 %v3171, %v3191
      %v3208 = vadd.f32 %v3172, %v3192
      %v3209 = vadd.f32 %v3173, %v3193
      %v3210 = vadd.f32 %v3174, %v3194
      %v3211 = vadd.f32 %v3175, %v3195
      %v3212 = vadd.f32 %v3176, %v3196
      %v3213 = vadd.f32 %v3177, %v3197
      %v3214 = vadd.f32 %v3178, %v3198
      %v3215 = vadd.f32 %v3179, %v3199
      %v3216 = vlaneseq
      %v3217 = vshrl.u32 %v3216, 7
      %v3218 = vsub.s32 0, %v3217
      %v3219 = vrot.slane %v1403, %v3218
      %v3220 = vmul.f32 %v3000, %v3219
      %v3221 = vmul.f32 %v3001, %v3219
      %v3222 = vmul.f32 %v3002, %v3219
      %v3223 = vmul.f32 %v3003, %v3219
      %v3224 = vmul.f32 %v3004, %v3219
      %v3225 = vmul.f32 %v3005, %v3219
      %v3226 = vmul.f32 %v3006, %v3219
      %v3227 = vmul.f32 %v3007, %v3219
      %v3228 = vmul.f32 %v3008, %v3219
      %v3229 = vmul.f32 %v3009, %v3219
      %v3230 = vmul.f32 %v3010, %v3219
      %v3231 = vmul.f32 %v3011, %v3219
      %v3232 = vmul.f32 %v3012, %v3219
      %v3233 = vmul.f32 %v3013, %v3219
      %v3234 = vmul.f32 %v3014, %v3219
      %v3235 = vmul.f32 %v3015, %v3219
      %v3236 = vadd.f32 %v3200, %v3220
      %v3237 = vadd.f32 %v3201, %v3221
      %v3238 = vadd.f32 %v3202, %v3222
      %v3239 = vadd.f32 %v3203, %v3223
      %v3240 = vadd.f32 %v3204, %v3224
      %v3241 = vadd.f32 %v3205, %v3225
      %v3242 = vadd.f32 %v3206, %v3226
      %v3243 = vadd.f32 %v3207, %v3227
      %v3244 = vadd.f32 %v3208, %v3228
      %v3245 = vadd.f32 %v3209, %v3229
      %v3246 = vadd.f32 %v3210, %v3230
      %v3247 = vadd.f32 %v3211, %v3231
      %v3248 = vadd.f32 %v3212, %v3232
      %v3249 = vadd.f32 %v3213, %v3233
      %v3250 = vadd.f32 %v3214, %v3234
      %v3251 = vadd.f32 %v3215, %v3235
      %v3252 = vadd.f32 %v1652, %v1916
      %v3253 = vadd.f32 %v1653, %v1917
      %v3254 = vadd.f32 %v1654, %v1918
      %v3255 = vadd.f32 %v1655, %v1919
      %v3256 = vadd.f32 %v1656, %v1920
      %v3257 = vadd.f32 %v1657, %v1921
      %v3258 = vadd.f32 %v1658, %v1922
      %v3259 = vadd.f32 %v1659, %v1923
      %v3260 = vadd.f32 %v1660, %v1924
      %v3261 = vadd.f32 %v1661, %v1925
      %v3262 = vadd.f32 %v1662, %v1926
      %v3263 = vadd.f32 %v1663, %v1927
      %v3264 = vadd.f32 %v1664, %v1928
      %v3265 = vadd.f32 %v1665, %v1929
      %v3266 = vadd.f32 %v1666, %v1930
      %v3267 = vadd.f32 %v1667, %v1931
      %v3268 = vadd.f32 %v2180, %v2444
      %v3269 = vadd.f32 %v2181, %v2445
      %v3270 = vadd.f32 %v2182, %v2446
      %v3271 = vadd.f32 %v2183, %v2447
      %v3272 = vadd.f32 %v2184, %v2448
      %v3273 = vadd.f32 %v2185, %v2449
      %v3274 = vadd.f32 %v2186, %v2450
      %v3275 = vadd.f32 %v2187, %v2451
      %v3276 = vadd.f32 %v2188, %v2452
      %v3277 = vadd.f32 %v2189, %v2453
      %v3278 = vadd.f32 %v2190, %v2454
      %v3279 = vadd.f32 %v2191, %v2455
      %v3280 = vadd.f32 %v2192, %v2456
      %v3281 = vadd.f32 %v2193, %v2457
      %v3282 = vadd.f32 %v2194, %v2458
      %v3283 = vadd.f32 %v2195, %v2459
      %v3284 = vadd.f32 %v3252, %v3268
      %v3285 = vadd.f32 %v3253, %v3269
      %v3286 = vadd.f32 %v3254, %v3270
      %v3287 = vadd.f32 %v3255, %v3271
      %v3288 = vadd.f32 %v3256, %v3272
      %v3289 = vadd.f32 %v3257, %v3273
      %v3290 = vadd.f32 %v3258, %v3274
      %v3291 = vadd.f32 %v3259, %v3275
      %v3292 = vadd.f32 %v3260, %v3276
      %v3293 = vadd.f32 %v3261, %v3277
      %v3294 = vadd.f32 %v3262, %v3278
      %v3295 = vadd.f32 %v3263, %v3279
      %v3296 = vadd.f32 %v3264, %v3280
      %v3297 = vadd.f32 %v3265, %v3281
      %v3298 = vadd.f32 %v3266, %v3282
      %v3299 = vadd.f32 %v3267, %v3283
      %v3300 = vadd.f32 %v2708, %v2972
      %v3301 = vadd.f32 %v2709, %v2973
      %v3302 = vadd.f32 %v2710, %v2974
      %v3303 = vadd.f32 %v2711, %v2975
      %v3304 = vadd.f32 %v2712, %v2976
      %v3305 = vadd.f32 %v2713, %v2977
      %v3306 = vadd.f32 %v2714, %v2978
      %v3307 = vadd.f32 %v2715, %v2979
      %v3308 = vadd.f32 %v2716, %v2980
      %v3309 = vadd.f32 %v2717, %v2981
      %v3310 = vadd.f32 %v2718, %v2982
      %v3311 = vadd.f32 %v2719, %v2983
      %v3312 = vadd.f32 %v2720, %v2984
      %v3313 = vadd.f32 %v2721, %v2985
      %v3314 = vadd.f32 %v2722, %v2986
      %v3315 = vadd.f32 %v2723, %v2987
      %v3316 = vld [vmem:[%s9] sm:$0x1]
      %v3318 = vlaneseq
      %v3319 = vshrl.u32 %v3318, 7
      %v3320 = vsub.s32 0, %v3319
      %v3321 = vrot.slane %v3316, %v3320
      %v3323 = vadd.f32 %v3236, %v3321
      %v3324 = vadd.f32 %v3237, %v3321
      %v3325 = vadd.f32 %v3238, %v3321
      %v3326 = vadd.f32 %v3239, %v3321
      %v3327 = vadd.f32 %v3240, %v3321
      %v3328 = vadd.f32 %v3241, %v3321
      %v3329 = vadd.f32 %v3242, %v3321
      %v3330 = vadd.f32 %v3243, %v3321
      %v3331 = vadd.f32 %v3244, %v3321
      %v3332 = vadd.f32 %v3245, %v3321
      %v3333 = vadd.f32 %v3246, %v3321
      %v3334 = vadd.f32 %v3247, %v3321
      %v3335 = vadd.f32 %v3248, %v3321
      %v3336 = vadd.f32 %v3249, %v3321
      %v3337 = vadd.f32 %v3250, %v3321
      %v3338 = vadd.f32 %v3251, %v3321
      %v3339 = vadd.f32 %v3300, %v3323
      %v3340 = vadd.f32 %v3301, %v3324
      %v3341 = vadd.f32 %v3302, %v3325
      %v3342 = vadd.f32 %v3303, %v3326
      %v3343 = vadd.f32 %v3304, %v3327
      %v3344 = vadd.f32 %v3305, %v3328
      %v3345 = vadd.f32 %v3306, %v3329
      %v3346 = vadd.f32 %v3307, %v3330
      %v3347 = vadd.f32 %v3308, %v3331
      %v3348 = vadd.f32 %v3309, %v3332
      %v3349 = vadd.f32 %v3310, %v3333
      %v3350 = vadd.f32 %v3311, %v3334
      %v3351 = vadd.f32 %v3312, %v3335
      %v3352 = vadd.f32 %v3313, %v3336
      %v3353 = vadd.f32 %v3314, %v3337
      %v3354 = vadd.f32 %v3315, %v3338
      %v3355 = vadd.f32 %v3284, %v3339
      %v3356 = vadd.f32 %v3285, %v3340
      %v3357 = vadd.f32 %v3286, %v3341
      %v3358 = vadd.f32 %v3287, %v3342
      %v3359 = vadd.f32 %v3288, %v3343
      %v3360 = vadd.f32 %v3289, %v3344
      %v3361 = vadd.f32 %v3290, %v3345
      %v3362 = vadd.f32 %v3291, %v3346
      %v3363 = vadd.f32 %v3292, %v3347
      %v3364 = vadd.f32 %v3293, %v3348
      %v3365 = vadd.f32 %v3294, %v3349
      %v3366 = vadd.f32 %v3295, %v3350
      %v3367 = vadd.f32 %v3296, %v3351
      %v3368 = vadd.f32 %v3297, %v3352
      %v3369 = vadd.f32 %v3298, %v3353
      %v3370 = vadd.f32 %v3299, %v3354
      %v3371 = vmul.f32 %v1258, %v3355
      %v3372 = vmul.f32 %v1261, %v3356
      %v3373 = vmul.f32 %v1266, %v3357
      %v3374 = vmul.f32 %v1269, %v3358
      %v3375 = vmul.f32 %v1274, %v3359
      %v3376 = vmul.f32 %v1277, %v3360
      %v3377 = vmul.f32 %v1282, %v3361
      %v3378 = vmul.f32 %v1285, %v3362
      %v3379 = vmul.f32 %v1290, %v3363
      %v3380 = vmul.f32 %v1293, %v3364
      %v3381 = vmul.f32 %v1298, %v3365
      %v3382 = vmul.f32 %v1301, %v3366
      %v3383 = vmul.f32 %v1306, %v3367
      %v3384 = vmul.f32 %v1309, %v3368
      %v3385 = vmul.f32 %v1314, %v3369
      %v3386 = vmul.f32 %v1317, %v3370
      %v3387 = vpack.c.bf16 %v3372, %v3371
      %v3388 = vpack.c.bf16 %v3374, %v3373
      %v3389 = vpack.c.bf16 %v3376, %v3375
      %v3390 = vpack.c.bf16 %v3378, %v3377
      %v3391 = vpack.c.bf16 %v3380, %v3379
      %v3392 = vpack.c.bf16 %v3382, %v3381
      %v3393 = vpack.c.bf16 %v3384, %v3383
      %v3394 = vpack.c.bf16 %v3386, %v3385
      %v3395 = vld [vmem:[%s10] sm:$0xf]
      %v3396 = vld [vmem:[%s10 + $0x4] sm:$0xf]
      %v3397 = vld [vmem:[%s10 + $0x8] sm:$0xf]
      %v3398 = vld [vmem:[%s10 + $0xc] sm:$0xf]
      %v3399 = vld [vmem:[%s10 + $0x10] sm:$0xf]
      %v3400 = vld [vmem:[%s10 + $0x14] sm:$0xf]
      %v3401 = vld [vmem:[%s10 + $0x18] sm:$0xf]
      %v3402 = vld [vmem:[%s10 + $0x1c] sm:$0xf]
      %v3403 = vld [vmem:[%s10 + $0x20] sm:$0xf]
      %v3404 = vld [vmem:[%s10 + $0x24] sm:$0xf]
      %v3405 = vld [vmem:[%s10 + $0x28] sm:$0xf]
      %v3406 = vld [vmem:[%s10 + $0x2c] sm:$0xf]
      %v3407 = vld [vmem:[%s10 + $0x30] sm:$0xf]
      %v3408 = vld [vmem:[%s10 + $0x34] sm:$0xf]
      %v3409 = vld [vmem:[%s10 + $0x38] sm:$0xf]
      %v3410 = vld [vmem:[%s10 + $0x3c] sm:$0xf]
      %v3411 = vld [vmem:[%s11] sm:$0x1]
      %v3413 = vlaneseq
      %v3414 = vshrl.u32 %v3413, 7
      %v3415 = vsub.s32 0, %v3414
      %v3416 = vrot.slane %v3411, %v3415
      %v3434 = vunpack.c.l.b16 %v3395
      %v3435 = vunpack.c.l.b16 %v3396
      %v3436 = vunpack.c.l.b16 %v3397
      %v3437 = vunpack.c.l.b16 %v3398
      %v3438 = vunpack.c.l.b16 %v3399
      %v3439 = vunpack.c.l.b16 %v3400
      %v3440 = vunpack.c.l.b16 %v3401
      %v3441 = vunpack.c.l.b16 %v3402
      %v3442 = vunpack.c.l.b16 %v3403
      %v3443 = vunpack.c.l.b16 %v3404
      %v3444 = vunpack.c.l.b16 %v3405
      %v3445 = vunpack.c.l.b16 %v3406
      %v3446 = vunpack.c.l.b16 %v3407
      %v3447 = vunpack.c.l.b16 %v3408
      %v3448 = vunpack.c.l.b16 %v3409
      %v3449 = vunpack.c.l.b16 %v3410
      %v3450 = vpack.c.b16 %v3435, %v3434
      %v3451 = vpack.c.b16 %v3437, %v3436
      %v3452 = vpack.c.b16 %v3439, %v3438
      %v3453 = vpack.c.b16 %v3441, %v3440
      %v3454 = vpack.c.b16 %v3443, %v3442
      %v3455 = vpack.c.b16 %v3445, %v3444
      %v3456 = vpack.c.b16 %v3447, %v3446
      %v3457 = vpack.c.b16 %v3449, %v3448
      %3466 = vmatprep.subr.bf16.mxu0 0
      %3467 = vmatpush1.bf16.msra.mxu0 %v3450
      %3468 = vmatprep.subr.bf16.mxu0 0
      %3469 = vmatpush1.bf16.msra.mxu0 %v3451
      %3470 = vmatprep.subr.bf16.mxu0 0
      %3471 = vmatpush1.bf16.msra.mxu0 %v3452
      %3472 = vmatprep.subr.bf16.mxu0 0
      %3473 = vmatpush1.bf16.msra.mxu0 %v3453
      %3474 = vmatprep.subr.bf16.mxu0 0
      %3475 = vmatpush1.bf16.msra.mxu0 %v3454
      %3476 = vmatprep.subr.bf16.mxu0 0
      %3477 = vmatpush1.bf16.msra.mxu0 %v3455
      %3478 = vmatprep.subr.bf16.mxu0 0
      %3479 = vmatpush1.bf16.msra.mxu0 %v3456
      %3480 = vmatprep.subr.bf16.mxu0 0
      %3481 = vmatpush1.bf16.msra.mxu0 %v3457
      %3482 = vmatprep.subr.bf16.mxu0 0
      %3483 = vmatpush1.bf16.msra.mxu0 0
      %3484 = vmatprep.subr.bf16.mxu0 0
      %3485 = vmatpush1.bf16.msra.mxu0 0
      %3486 = vmatprep.subr.bf16.mxu0 0
      %3487 = vmatpush1.bf16.msra.mxu0 0
      %3488 = vmatprep.subr.bf16.mxu0 0
      %3489 = vmatpush1.bf16.msra.mxu0 0
      %3490 = vmatprep.subr.bf16.mxu0 0
      %3491 = vmatpush1.bf16.msra.mxu0 0
      %3492 = vmatprep.subr.bf16.mxu0 0
      %3493 = vmatpush1.bf16.msra.mxu0 0
      %3494 = vmatprep.subr.bf16.mxu0 0
      %3495 = vmatpush1.bf16.msra.mxu0 0
      %3496 = vmatprep.subr.bf16.mxu0 0
      %3497 = vmatpush1.bf16.msra.mxu0 0
      %3498 = vmatprep.mubr.bf16.mxu0 0
      %3499 = vmatmul.mubr.bf16.gmra.mrb[0].mxu0 %v3387
      %v3500 = vpop.f32.mrb[0].mxu0
      %v3501 = vadd.f32 %v3416, %v3500
      %v3502 = vpop.f32.mrb[0].mxu0
      %v3503 = vpop.f32.mrb[0].mxu0
      %v3504 = vadd.f32 %v3416, %v3503
      %v3505 = vpop.f32.mrb[0].mxu0
      %3506 = vmatprep.mubr.bf16.mxu0 0
      %3507 = vmatmul.mubr.bf16.gmra.mrb[0].mxu0 %v3388
      %v3508 = vpop.f32.mrb[0].mxu0
      %v3509 = vadd.f32 %v3416, %v3508
      %v3510 = vpop.f32.mrb[0].mxu0
      %v3511 = vpop.f32.mrb[0].mxu0
      %v3512 = vadd.f32 %v3416, %v3511
      %v3513 = vpop.f32.mrb[0].mxu0
      %3514 = vmatprep.mubr.bf16.mxu0 0
      %3515 = vmatmul.mubr.bf16.gmra.mrb[0].mxu0 %v3389
      %v3516 = vpop.f32.mrb[0].mxu0
      %v3517 = vadd.f32 %v3416, %v3516
      %v3518 = vpop.f32.mrb[0].mxu0
      %v3519 = vpop.f32.mrb[0].mxu0
      %v3520 = vadd.f32 %v3416, %v3519
      %v3521 = vpop.f32.mrb[0].mxu0
      %3522 = vmatprep.mubr.bf16.mxu0 0
      %3523 = vmatmul.mubr.bf16.gmra.mrb[0].mxu0 %v3390
      %v3524 = vpop.f32.mrb[0].mxu0
      %v3525 = vadd.f32 %v3416, %v3524
      %v3526 = vpop.f32.mrb[0].mxu0
      %v3527 = vpop.f32.mrb[0].mxu0
      %v3528 = vadd.f32 %v3416, %v3527
      %v3529 = vpop.f32.mrb[0].mxu0
      %3530 = vmatprep.mubr.bf16.mxu0 0
      %3531 = vmatmul.mubr.bf16.gmra.mrb[0].mxu0 %v3391
      %v3532 = vpop.f32.mrb[0].mxu0
      %v3533 = vadd.f32 %v3416, %v3532
      %v3534 = vpop.f32.mrb[0].mxu0
      %v3535 = vpop.f32.mrb[0].mxu0
      %v3536 = vadd.f32 %v3416, %v3535
      %v3537 = vpop.f32.mrb[0].mxu0
      %3538 = vmatprep.mubr.bf16.mxu0 0
      %3539 = vmatmul.mubr.bf16.gmra.mrb[0].mxu0 %v3392
      %v3540 = vpop.f32.mrb[0].mxu0
      %v3541 = vadd.f32 %v3416, %v3540
      %v3542 = vpop.f32.mrb[0].mxu0
      %v3543 = vpop.f32.mrb[0].mxu0
      %v3544 = vadd.f32 %v3416, %v3543
      %v3545 = vpop.f32.mrb[0].mxu0
      %3546 = vmatprep.mubr.bf16.mxu0 0
      %3547 = vmatmul.mubr.bf16.gmra.mrb[0].mxu0 %v3393
      %v3548 = vpop.f32.mrb[0].mxu0
      %v3549 = vadd.f32 %v3416, %v3548
      %v3550 = vpop.f32.mrb[0].mxu0
      %v3551 = vpop.f32.mrb[0].mxu0
      %v3552 = vadd.f32 %v3416, %v3551
      %v3553 = vpop.f32.mrb[0].mxu0
      %3554 = vmatprep.mubr.bf16.mxu0 0
      %3555 = vmatmul.mubr.bf16.gmra.mrb[0].mxu0 %v3394
      %v3556 = vpop.f32.mrb[0].mxu0
      %v3557 = vadd.f32 %v3416, %v3556
      %v3558 = vpop.f32.mrb[0].mxu0
      %v3559 = vpop.f32.mrb[0].mxu0
      %v3560 = vadd.f32 %v3416, %v3559
      %v3561 = vpop.f32.mrb[0].mxu0
      %3562 = vdwg.mxu0
      %v3563 = vld [vmem:[%s12] sm:$0x1]
      %v3565 = vlaneseq
      %v3566 = vshrl.u32 %v3565, 7
      %v3567 = vsub.s32 0, %v3566
      %v3568 = vrot.slane %v3563, %v3567
      %v3570 = vmul.f32 %v3501, %v3568
      %v3571 = vmul.f32 %v3504, %v3568
      %v3572 = vmul.f32 %v3509, %v3568
      %v3573 = vmul.f32 %v3512, %v3568
      %v3574 = vmul.f32 %v3517, %v3568
      %v3575 = vmul.f32 %v3520, %v3568
      %v3576 = vmul.f32 %v3525, %v3568
      %v3577 = vmul.f32 %v3528, %v3568
      %v3578 = vmul.f32 %v3533, %v3568
      %v3579 = vmul.f32 %v3536, %v3568
      %v3580 = vmul.f32 %v3541, %v3568
      %v3581 = vmul.f32 %v3544, %v3568
      %v3582 = vmul.f32 %v3549, %v3568
      %v3583 = vmul.f32 %v3552, %v3568
      %v3584 = vmul.f32 %v3557, %v3568
      %v3585 = vmul.f32 %v3560, %v3568
      %v3586 = vadd.f32 %v3570, %v487
      %v3587 = vadd.f32 %v3571, %v488
      %v3588 = vadd.f32 %v3572, %v489
      %v3589 = vadd.f32 %v3573, %v490
      %v3590 = vadd.f32 %v3574, %v491
      %v3591 = vadd.f32 %v3575, %v492
      %v3592 = vadd.f32 %v3576, %v493
      %v3593 = vadd.f32 %v3577, %v494
      %v3594 = vadd.f32 %v3578, %v495
      %v3595 = vadd.f32 %v3579, %v496
      %v3596 = vadd.f32 %v3580, %v497
      %v3597 = vadd.f32 %v3581, %v498
      %v3598 = vadd.f32 %v3582, %v499
      %v3599 = vadd.f32 %v3583, %v500
      %v3600 = vadd.f32 %v3584, %v501
      %v3601 = vadd.f32 %v3585, %v502
      %3602 = vst [vmem:[%s478] sm:$0xff] %v3586
      %3603 = vst [vmem:[%s478 + $0x8] sm:$0xff] %v3587
      %3604 = vst [vmem:[%s478 + $0x10] sm:$0xff] %v3588
      %3605 = vst [vmem:[%s478 + $0x18] sm:$0xff] %v3589
      %3606 = vst [vmem:[%s478 + $0x20] sm:$0xff] %v3590
      %3607 = vst [vmem:[%s478 + $0x28] sm:$0xff] %v3591
      %3608 = vst [vmem:[%s478 + $0x30] sm:$0xff] %v3592
      %3609 = vst [vmem:[%s478 + $0x38] sm:$0xff] %v3593
      %3610 = vst [vmem:[%s478 + $0x40] sm:$0xff] %v3594
      %3611 = vst [vmem:[%s478 + $0x48] sm:$0xff] %v3595
      %3612 = vst [vmem:[%s478 + $0x50] sm:$0xff] %v3596
      %3613 = vst [vmem:[%s478 + $0x58] sm:$0xff] %v3597
      %3614 = vst [vmem:[%s478 + $0x60] sm:$0xff] %v3598
      %3615 = vst [vmem:[%s478 + $0x68] sm:$0xff] %v3599
      %3616 = vst [vmem:[%s478 + $0x70] sm:$0xff] %v3600
      %3617 = vst [vmem:[%s478 + $0x78] sm:$0xff] %v3601
      %s3618 = smul.u32 8, %s29
      %p3619 = scmp.lt.s32.totalorder %s28, 1
      %s3620 = scalar_select %p3619, %s28, 1
      %p3621 = scmp.lt.s32.totalorder %s3618, 15
      %s3622 = scalar_select %p3621, %s3618, 15
      %s3623 = smul.addr %s3622, 2
      %s3624 = smul.addr %s3620, 32
      %s3625 = sadd.s32 %s3623, %s3624
      %s3626 = smul.addr %s3625, 8
      %s3627 = scalar_lea.vmem %s13, %s3626
      // Predicated region
      $region81: #{gsau_forward.1} parent=71 // pred_check
        %p3628 = pneg %p338
      $region82: #{gsau_forward.1} parent=71 // pred_check_branch
        %3630 = sbr.rel (%p3628) target = $region84
      $region83: #{gsau_forward.1} parent=71 // pred_region
        %s3631 = smul.u32 8, %s29
      $region84: #{gsau_forward.1} parent=71 // pred_fallthru
        _
    $region72: #{gsau_forward.1} parent=5 // pred_fallthru
      _
    %p3632 = scmp.le.s32.totalorder 2, %s19
    // Predicated region
    $region85: #{gsau_forward.1} parent=5 // pred_check
      %p3633 = pneg %p3632
    $region86: #{gsau_forward.1} parent=5 // pred_check_branch
      %3635 = sbr.rel (%p3633) target = $region88
    $region87: #{gsau_forward.1} parent=5 // pred_region
      %s3636 = ssub.s32 %s19, 2
      // Predicated region
      $region89: #{gsau_forward.1} parent=87 // pred_check
        %p3637 = pneg %p344
      $region90: #{gsau_forward.1} parent=87 // pred_check_branch
        %3639 = sbr.rel (%p3637) target = $region92
      $region91: #{gsau_forward.1} parent=87 // pred_region
        %s3640 = smul.u32 8, %s31
        %p3641 = scmp.lt.s32.totalorder %s30, 1
        %s3642 = scalar_select %p3641, %s30, 1
        %p3643 = scmp.lt.s32.totalorder %s3640, 15
        %s3644 = scalar_select %p3643, %s3640, 15
        %s3645 = smul.addr %s3644, 2
        %s3646 = smul.addr %s3642, 32
        %s3647 = sadd.s32 %s3645, %s3646
        %s3648 = smul.addr %s3647, 8
        %s3649 = scalar_lea.vmem %s13, %s3648
      $region92: #{gsau_forward.1} parent=87 // pred_fallthru
        _
    $region88: #{gsau_forward.1} parent=5 // pred_fallthru
      _
  $region6: #{gsau_forward.1} parent=0 // loop_footer
    %s23 = sadd.s32 1, %s19
  $region7: #{gsau_forward.1} parent=0 // loop_footer_branch
    %18 = sbr.rel target = $region3
  $region8: #{gsau_forward.1} parent=0 // loop_exit
    _

</llo_original>
